<compile_context>
chip_gen: v7x
topology: tpu7x:2x2x1
jax: 0.10.0
libtpu: 0.0.40
codegen_flags: <defaults>
</compile_context>

<pallas_src>
import functools

import jax
import jax.numpy as jnp
from jax.experimental import pallas as pl
from jax.experimental.pallas import tpu as pltpu


def _round_up(x, m):
    return (x + m - 1) // m * m


def _bottleneck_kernel(H, W, halo_pad,
                       x_ref, w1_ref, w2_ref, w3_ref,
                       b1_ref, b2_ref, b3_ref,
                       o_ref, halo_ref):
    HW = H * W
    Pp = halo_ref.shape[1]

    # ---- conv1 (1x1, BN scale pre-folded into w1) + bias + relu -------------
    x_bf = x_ref[0].astype(jnp.bfloat16)                            # (HW, Cp)
    h1 = jnp.dot(x_bf, w1_ref[...], preferred_element_type=jnp.float32)
    h1 = jnp.maximum(h1 + b1_ref[...], 0.0)                         # (HW, Pp) f32

    # ---- write h1 (bf16, cast once) into the halo scratch -------------------
    # Row-halos cover every out-of-image row the dh = +-1 taps can touch, so
    # no dh masks are needed.  Zero the halos every step (cheap, and safe
    # under megacore grid sharding where "first step per core" != program_id 0).
    zeros = jnp.zeros((halo_pad, Pp), jnp.bfloat16)
    halo_ref[pl.ds(0, halo_pad), :] = zeros
    halo_ref[pl.ds(halo_pad + HW, halo_pad), :] = zeros
    halo_ref[pl.ds(halo_pad, HW), :] = h1.astype(jnp.bfloat16)

    # ---- conv2 (3x3, stride=1, pad=1): 9 accumulating offset-slice matmuls --
    # Narrow (HW, 1) column-edge masks, hoisted out of the tap loop.
    col = jax.lax.broadcasted_iota(jnp.int32, (HW, 1), 0) % W
    col_ok = {-1: col >= 1, 0: None, 1: col <= W - 2}

    acc = None
    k = 0
    for dh in (-1, 0, 1):
        for dw in (-1, 0, 1):
            tap = halo_ref[pl.ds(halo_pad + dh * W + dw, HW), :]    # (HW, Pp) bf16
            if col_ok[dw] is not None:
                tap = jnp.where(col_ok[dw], tap, 0.0)
            part = jnp.dot(tap, w2_ref[k], preferred_element_type=jnp.float32)
            acc = part if acc is None else acc + part
            k += 1
    h2 = jnp.maximum(acc + b2_ref[...], 0.0).astype(jnp.bfloat16)   # (HW, Pp)

    # ---- conv3 (1x1) + bias + identity residual + relu ----------------------
    h3 = jnp.dot(h2, w3_ref[...], preferred_element_type=jnp.float32)
    h3 = h3 + b3_ref[...]
    o_ref[0] = jnp.maximum(h3 + x_ref[0], 0.0).astype(o_ref.dtype)


def bottleneck_forward(x_nchw, params):
    """params: OIHW conv weights + BatchNorm (gamma, beta, mean, var) tuples."""
    w1_oihw = params["w1_oihw"]
    w2_oihw = params["w2_oihw"]
    w3_oihw = params["w3_oihw"]

    N, C, H, W = x_nchw.shape
    P = w1_oihw.shape[0]
    Cout = w3_oihw.shape[0]
    assert Cout == C, "identity residual requires Cin == Cout (downsample=None)"
    HW = H * W

    LANE = 128
    Cp = _round_up(C, LANE)               # padded in/out channels (Cin == Cout)
    Pp = _round_up(P, LANE)               # padded bottleneck width
    halo_pad = _round_up(W + 1, 8)        # 8-aligned so the big h1 store is aligned

    def pad_last(a, tgt):
        return jnp.pad(a, [(0, 0)] * (a.ndim - 1) + [(0, tgt - a.shape[-1])])

    # Activations: NCHW -> (N, HW, Cp) f32 (f32 kept for the exact identity
    # residual add; the kernel casts to bf16 for the MXU).
    x_flat = pad_last(jnp.transpose(x_nchw, (0, 2, 3, 1)).reshape(N, HW, C), Cp)

    # Folded inference-mode BatchNorm: bn(conv(x, w)) == conv(x, w * s) + b.
    def bn_fold(p, eps=1e-5):
        gamma, beta, mean, var = p
        s = gamma / jnp.sqrt(var + eps)
        return s, beta - mean * s

    s1, b1 = bn_fold(params["bn1"])
    s2, b2 = bn_fold(params["bn2"])
    s3, b3 = bn_fold(params["bn3"])

    # Weights: BN scale folded in, lane-dense, bf16 (MXU operands).
    w1 = jnp.pad((w1_oihw[:, :, 0, 0] * s1[:, None]).T,
                 [(0, Cp - C), (0, Pp - P)]).astype(jnp.bfloat16)        # (Cp, Pp)
    w2 = jnp.pad(jnp.transpose(w2_oihw * s2[:, None, None, None], (2, 3, 1, 0)),
                 [(0, 0), (0, 0), (0, Pp - P), (0, Pp - P)]
                 ).reshape(9, Pp, Pp).astype(jnp.bfloat16)               # (9, Pp, Pp)
    w3 = jnp.pad((w3_oihw[:, :, 0, 0] * s3[:, None]).T,
                 [(0, Pp - P), (0, Cp - Cout)]).astype(jnp.bfloat16)     # (Pp, Cp)

    b1 = pad_last(b1.reshape(1, -1), Pp)
    b2 = pad_last(b2.reshape(1, -1), Pp)
    b3 = pad_last(b3.reshape(1, -1), Cp)

    kernel = functools.partial(_bottleneck_kernel, H, W, halo_pad)

    # NOTE: constant weight/bias blocks are small (<1 MiB total) now that the
    # patches slab is gone, so default double-buffering of them is harmless.
    out = pl.pallas_call(
        kernel,
        out_shape=jax.ShapeDtypeStruct((N, HW, Cp), x_nchw.dtype),
        grid_spec=pltpu.PrefetchScalarGridSpec(
            num_scalar_prefetch=0,
            grid=(N,),
            in_specs=[
                pl.BlockSpec((1, HW, Cp), lambda n: (n, 0, 0)),    # x
                pl.BlockSpec((Cp, Pp), lambda n: (0, 0)),          # w1 (scale folded)
                pl.BlockSpec((9, Pp, Pp), lambda n: (0, 0, 0)),    # w2 per-tap slabs
                pl.BlockSpec((Pp, Cp), lambda n: (0, 0)),          # w3 (scale folded)
                pl.BlockSpec((1, Pp), lambda n: (0, 0)),           # bn1 bias
                pl.BlockSpec((1, Pp), lambda n: (0, 0)),           # bn2 bias
                pl.BlockSpec((1, Cp), lambda n: (0, 0)),           # bn3 bias
            ],
            out_specs=pl.BlockSpec((1, HW, Cp), lambda n: (n, 0, 0)),
            scratch_shapes=[
                pltpu.VMEM((2 * halo_pad + HW, Pp), jnp.bfloat16),  # h1 halo scratch
            ],
        ),
        compiler_params=pltpu.CompilerParams(
            dimension_semantics=("parallel",),
            # Worst real stage (56x56, C=256, P=64) now peaks around ~20 MiB
            # live; 48 MiB lifts the v5e/v6e scoped defaults without spilling
            # and stays safely inside v7x's 64 MiB physical VMEM.
            vmem_limit_bytes=48 * 1024 * 1024,
        ),
    )(x_flat, w1, w2, w3, b1, b2, b3)

    out = out[:, :, :Cout]
    return jnp.transpose(out.reshape(N, H, W, Cout), (0, 3, 1, 2))


def init_params(key, inplanes, planes):
    expansion = 4
    keys = jax.random.split(key, 6)
    # PyTorch Conv2d weight layout is OIHW.
    w1_oihw = 0.1 * jax.random.normal(keys[0], (planes, inplanes, 1, 1), jnp.float32)
    w2_oihw = 0.1 * jax.random.normal(keys[1], (planes, planes, 3, 3), jnp.float32)
    w3_oihw = 0.1 * jax.random.normal(
        keys[2], (planes * expansion, planes, 1, 1), jnp.float32)

    def bn_params(k, c):
        k1, k2, k3, k4 = jax.random.split(k, 4)
        gamma = 1.0 + 0.1 * jax.random.normal(k1, (c,), jnp.float32)
        beta = 0.1 * jax.random.normal(k2, (c,), jnp.float32)
        mean = 0.1 * jax.random.normal(k3, (c,), jnp.float32)
        var = jax.random.uniform(k4, (c,), jnp.float32, minval=0.5, maxval=1.5)
        return gamma, beta, mean, var

    return {
        "w1_oihw": w1_oihw, "w2_oihw": w2_oihw, "w3_oihw": w3_oihw,
        "bn1": bn_params(keys[3], planes),
        "bn2": bn_params(keys[4], planes),
        "bn3": bn_params(keys[5], planes * expansion),
    }


def reference_forward(x, params, quantize=False, eps=1e-5):
    """Pure-JAX reference.  quantize=True mirrors the kernel's quantization
    points exactly: BN scale folded into the weights BEFORE the bf16 cast,
    bf16 conv operands, f32 accumulation, f32 bias / identity residual.
    quantize=False is the exact eval-mode PyTorch Bottleneck math."""
    q = ((lambda a: a.astype(jnp.bfloat16).astype(jnp.float32))
         if quantize else (lambda a: a))

    def bn_fold(p):
        gamma, beta, mean, var = p
        s = gamma / jnp.sqrt(var + eps)
        return s, beta - mean * s

    def conv(v, w, pad):
        return jax.lax.conv_general_dilated(
            q(v), q(w), (1, 1), [(pad, pad), (pad, pad)],
            dimension_numbers=("NCHW", "OIHW", "NCHW"))

    s1, b1 = bn_fold(params["bn1"])
    s2, b2 = bn_fold(params["bn2"])
    s3, b3 = bn_fold(params["bn3"])
    w1 = params["w1_oihw"] * s1[:, None, None, None]
    w2 = params["w2_oihw"] * s2[:, None, None, None]
    w3 = params["w3_oihw"] * s3[:, None, None, None]

    out = jax.nn.relu(conv(x, w1, 0) + b1[None, :, None, None])
    out = jax.nn.relu(conv(out, w2, 1) + b2[None, :, None, None])
    out = conv(out, w3, 0) + b3[None, :, None, None]
    return jax.nn.relu(out + x)


if __name__ == "__main__":
    key = jax.random.PRNGKey(0)
    kx, kp = jax.random.split(key)

    inplanes, planes = 16, 4   # planes * expansion == inplanes -> identity residual
    N, H, W = 2, 16, 16
    x = jax.random.normal(kx, (N, inplanes, H, W), jnp.float32)  # NCHW like PyTorch
    params = init_params(kp, inplanes, planes)

    out = jax.block_until_ready(bottleneck_forward(x, params))

    ref = reference_forward(x, params, quantize=True)
    max_err = float(jnp.max(jnp.abs(out - ref)))
    assert max_err < 5e-3, f"mismatch vs quantized reference: {max_err}"
    print("KERNEL_OK")
</pallas_src>

<mosaic_0001>
module attributes {stable_mosaic.version = 11 : i64} {
  func.func @_bottleneck_kernel(%arg0: i32, %arg1: memref<1x256x128xf32, #tpu.memory_space<vmem>>, %arg2: memref<128x128xbf16, #tpu.memory_space<vmem>>, %arg3: memref<9x128x128xbf16, #tpu.memory_space<vmem>>, %arg4: memref<128x128xbf16, #tpu.memory_space<vmem>>, %arg5: memref<1x128xf32, #tpu.memory_space<vmem>>, %arg6: memref<1x128xf32, #tpu.memory_space<vmem>>, %arg7: memref<1x128xf32, #tpu.memory_space<vmem>>, %arg8: memref<1x256x128xf32, #tpu.memory_space<vmem>>, %arg9: memref<304x128xbf16, #tpu.memory_space<vmem>>) attributes {dimension_semantics = [#tpu.dimension_semantics<parallel>], iteration_bounds = array<i64: 2>, scalar_prefetch = 0 : i64, scratch_operands = 1 : i64, tpu.core_type = #tpu.core_type<tc>, window_params = [{transform_indices = @transform_0, window_bounds = array<i64: 1, 256, 128>}, {pipeline_mode = #tpu.pipeline_mode<synchronous>, transform_indices = @transform_1, window_bounds = array<i64: 128, 128>}, {pipeline_mode = #tpu.pipeline_mode<synchronous>, transform_indices = @transform_2, window_bounds = array<i64: 9, 128, 128>}, {pipeline_mode = #tpu.pipeline_mode<synchronous>, transform_indices = @transform_3, window_bounds = array<i64: 128, 128>}, {pipeline_mode = #tpu.pipeline_mode<synchronous>, transform_indices = @transform_4, window_bounds = array<i64: 1, 128>}, {pipeline_mode = #tpu.pipeline_mode<synchronous>, transform_indices = @transform_5, window_bounds = array<i64: 1, 128>}, {pipeline_mode = #tpu.pipeline_mode<synchronous>, transform_indices = @transform_6, window_bounds = array<i64: 1, 128>}, {transform_indices = @transform_7, window_bounds = array<i64: 1, 256, 128>}]} {
    %c0 = arith.constant 0 : index
    %c0_0 = arith.constant 0 : index
    %c0_1 = arith.constant 0 : index
    %0 = vector.load %arg1[%c0, %c0_0, %c0_1] : memref<1x256x128xf32, #tpu.memory_space<vmem>>, vector<1x256x128xf32>
    %1 = vector.shape_cast %0 : vector<1x256x128xf32> to vector<256x128xf32>
    %2 = arith.truncf %1 : vector<256x128xf32> to vector<256x128xbf16>
    %c0_2 = arith.constant 0 : index
    %c0_3 = arith.constant 0 : index
    %3 = vector.load %arg2[%c0_2, %c0_3] : memref<128x128xbf16, #tpu.memory_space<vmem>>, vector<128x128xbf16>
    %cst = arith.constant dense<0.000000e+00> : vector<256x128xf32>
    %4 = tpu.matmul %2, %3, %cst {dimension_numbers = #tpu.dot_dimension_numbers<[1], [0], [0], [1], [0, 0, 1, 1], [], []>} : vector<256x128xbf16>, vector<128x128xbf16>, vector<256x128xf32> -> vector<256x128xf32>
    %c0_4 = arith.constant 0 : index
    %c0_5 = arith.constant 0 : index
    %5 = vector.load %arg5[%c0_4, %c0_5] : memref<1x128xf32, #tpu.memory_space<vmem>>, vector<1x128xf32>
    %6 = vector.broadcast %5 : vector<1x128xf32> to vector<256x128xf32>
    %7 = arith.addf %4, %6 : vector<256x128xf32>
    %cst_6 = arith.constant 0.000000e+00 : f32
    %8 = vector.broadcast %cst_6 : f32 to vector<256x128xf32>
    %9 = arith.maximumf %7, %8 : vector<256x128xf32>
    %cst_7 = arith.constant 0.000000e+00 : bf16
    %10 = vector.broadcast %cst_7 : bf16 to vector<24x128xbf16>
    %c0_8 = arith.constant 0 : index
    %c0_9 = arith.constant 0 : index
    %11 = vector.load %arg9[%c0_8, %c0_9] : memref<304x128xbf16, #tpu.memory_space<vmem>>, vector<24x128xbf16>
    tpu.vector_store %arg9[%c0_8, %c0_9], %10 {strides = array<i32>} : memref<304x128xbf16, #tpu.memory_space<vmem>>, vector<24x128xbf16>,
    %c280 = arith.constant 280 : index
    %c0_10 = arith.constant 0 : index
    %12 = vector.load %arg9[%c280, %c0_10] : memref<304x128xbf16, #tpu.memory_space<vmem>>, vector<24x128xbf16>
    tpu.vector_store %arg9[%c280, %c0_10], %10 {strides = array<i32>} : memref<304x128xbf16, #tpu.memory_space<vmem>>, vector<24x128xbf16>,
    %13 = arith.truncf %9 : vector<256x128xf32> to vector<256x128xbf16>
    %c24 = arith.constant 24 : index
    %c0_11 = arith.constant 0 : index
    %14 = vector.load %arg9[%c24, %c0_11] : memref<304x128xbf16, #tpu.memory_space<vmem>>, vector<256x128xbf16>
    tpu.vector_store %arg9[%c24, %c0_11], %13 {strides = array<i32>} : memref<304x128xbf16, #tpu.memory_space<vmem>>, vector<256x128xbf16>,
    %15 = tpu.iota {dimensions = array<i32: 0>} : vector<256x1xi32>
    %c16_i32 = arith.constant 16 : i32
    %c0_i32 = arith.constant 0 : i32
    %16 = arith.cmpi eq, %c16_i32, %c0_i32 : i32
    %c1_i32 = arith.constant 1 : i32
    %17 = arith.select %16, %c1_i32, %c16_i32 : i32
    %18 = vector.broadcast %17 : i32 to vector<256x1xi32>
    %19 = arith.remsi %15, %18 : vector<256x1xi32>
    %c0_i32_12 = arith.constant 0 : i32
    %20 = vector.broadcast %c0_i32_12 : i32 to vector<256x1xi32>
    %21 = arith.cmpi ne, %19, %20 : vector<256x1xi32>
    %c0_i32_13 = arith.constant 0 : i32
    %22 = vector.broadcast %c0_i32_13 : i32 to vector<256x1xi32>
    %23 = arith.cmpi slt, %19, %22 : vector<256x1xi32>
    %c0_i32_14 = arith.constant 0 : i32
    %24 = arith.cmpi slt, %17, %c0_i32_14 : i32
    %25 = vector.broadcast %24 : i1 to vector<256x1xi1>
    %26 = vector.broadcast %25 : vector<256x1xi1> to vector<256x1xi1>
    %27 = arith.xori %23, %26 : vector<256x1xi1>
    %28 = arith.andi %27, %21 : vector<256x1xi1>
    %29 = vector.broadcast %17 : i32 to vector<256x1xi32>
    %30 = arith.addi %19, %29 : vector<256x1xi32>
    %31 = arith.select %28, %30, %19 : vector<256x1xi1>, vector<256x1xi32>
    %c1_i32_15 = arith.constant 1 : i32
    %32 = vector.broadcast %c1_i32_15 : i32 to vector<256x1xi32>
    %33 = arith.cmpi sge, %31, %32 : vector<256x1xi32>
    %c14_i32 = arith.constant 14 : i32
    %34 = vector.broadcast %c14_i32 : i32 to vector<256x1xi32>
    %35 = arith.cmpi sle, %31, %34 : vector<256x1xi32>
    %c7 = arith.constant 7 : index
    %c0_16 = arith.constant 0 : index
    %36 = vector.load %arg9[%c7, %c0_16] : memref<304x128xbf16, #tpu.memory_space<vmem>>, vector<256x128xbf16>
    %cst_17 = arith.constant 0.000000e+00 : f32
    %37 = arith.truncf %cst_17 : f32 to bf16
    %38 = vector.shape_cast %33 : vector<256x1xi1> to vector<256x1xi1>
    %39 = vector.broadcast %38 : vector<256x1xi1> to vector<256x128xi1>
    %40 = vector.broadcast %37 : bf16 to vector<256x128xbf16>
    %41 = arith.select %39, %36, %40 : vector<256x128xi1>, vector<256x128xbf16>
    %c0_18 = arith.constant 0 : index
    %c0_19 = arith.constant 0 : index
    %c0_20 = arith.constant 0 : index
    %42 = vector.load %arg3[%c0_18, %c0_19, %c0_20] : memref<9x128x128xbf16, #tpu.memory_space<vmem>>, vector<1x128x128xbf16>
    %43 = vector.shape_cast %42 : vector<1x128x128xbf16> to vector<128x128xbf16>
    %cst_21 = arith.constant dense<0.000000e+00> : vector<256x128xf32>
    %44 = tpu.matmul %41, %43, %cst_21 {dimension_numbers = #tpu.dot_dimension_numbers<[1], [0], [0], [1], [0, 0, 1, 1], [], []>} : vector<256x128xbf16>, vector<128x128xbf16>, vector<256x128xf32> -> vector<256x128xf32>
    %c8 = arith.constant 8 : index
    %c0_22 = arith.constant 0 : index
    %45 = vector.load %arg9[%c8, %c0_22] : memref<304x128xbf16, #tpu.memory_space<vmem>>, vector<256x128xbf16>
    %c1 = arith.constant 1 : index
    %c0_23 = arith.constant 0 : index
    %c0_24 = arith.constant 0 : index
    %46 = vector.load %arg3[%c1, %c0_23, %c0_24] : memref<9x128x128xbf16, #tpu.memory_space<vmem>>, vector<1x128x128xbf16>
    %47 = vector.shape_cast %46 : vector<1x128x128xbf16> to vector<128x128xbf16>
    %cst_25 = arith.constant dense<0.000000e+00> : vector<256x128xf32>
    %48 = tpu.matmul %45, %47, %cst_25 {dimension_numbers = #tpu.dot_dimension_numbers<[1], [0], [0], [1], [0, 0, 1, 1], [], []>} : vector<256x128xbf16>, vector<128x128xbf16>, vector<256x128xf32> -> vector<256x128xf32>
    %49 = arith.addf %44, %48 : vector<256x128xf32>
    %c9 = arith.constant 9 : index
    %c0_26 = arith.constant 0 : index
    %50 = vector.load %arg9[%c9, %c0_26] : memref<304x128xbf16, #tpu.memory_space<vmem>>, vector<256x128xbf16>
    %cst_27 = arith.constant 0.000000e+00 : f32
    %51 = arith.truncf %cst_27 : f32 to bf16
    %52 = vector.shape_cast %35 : vector<256x1xi1> to vector<256x1xi1>
    %53 = vector.broadcast %52 : vector<256x1xi1> to vector<256x128xi1>
    %54 = vector.broadcast %51 : bf16 to vector<256x128xbf16>
    %55 = arith.select %53, %50, %54 : vector<256x128xi1>, vector<256x128xbf16>
    %c2 = arith.constant 2 : index
    %c0_28 = arith.constant 0 : index
    %c0_29 = arith.constant 0 : index
    %56 = vector.load %arg3[%c2, %c0_28, %c0_29] : memref<9x128x128xbf16, #tpu.memory_space<vmem>>, vector<1x128x128xbf16>
    %57 = vector.shape_cast %56 : vector<1x128x128xbf16> to vector<128x128xbf16>
    %cst_30 = arith.constant dense<0.000000e+00> : vector<256x128xf32>
    %58 = tpu.matmul %55, %57, %cst_30 {dimension_numbers = #tpu.dot_dimension_numbers<[1], [0], [0], [1], [0, 0, 1, 1], [], []>} : vector<256x128xbf16>, vector<128x128xbf16>, vector<256x128xf32> -> vector<256x128xf32>
    %59 = arith.addf %49, %58 : vector<256x128xf32>
    %c23 = arith.constant 23 : index
    %c0_31 = arith.constant 0 : index
    %60 = vector.load %arg9[%c23, %c0_31] : memref<304x128xbf16, #tpu.memory_space<vmem>>, vector<256x128xbf16>
    %cst_32 = arith.constant 0.000000e+00 : f32
    %61 = arith.truncf %cst_32 : f32 to bf16
    %62 = vector.shape_cast %33 : vector<256x1xi1> to vector<256x1xi1>
    %63 = vector.broadcast %62 : vector<256x1xi1> to vector<256x128xi1>
    %64 = vector.broadcast %61 : bf16 to vector<256x128xbf16>
    %65 = arith.select %63, %60, %64 : vector<256x128xi1>, vector<256x128xbf16>
    %c3 = arith.constant 3 : index
    %c0_33 = arith.constant 0 : index
    %c0_34 = arith.constant 0 : index
    %66 = vector.load %arg3[%c3, %c0_33, %c0_34] : memref<9x128x128xbf16, #tpu.memory_space<vmem>>, vector<1x128x128xbf16>
    %67 = vector.shape_cast %66 : vector<1x128x128xbf16> to vector<128x128xbf16>
    %cst_35 = arith.constant dense<0.000000e+00> : vector<256x128xf32>
    %68 = tpu.matmul %65, %67, %cst_35 {dimension_numbers = #tpu.dot_dimension_numbers<[1], [0], [0], [1], [0, 0, 1, 1], [], []>} : vector<256x128xbf16>, vector<128x128xbf16>, vector<256x128xf32> -> vector<256x128xf32>
    %69 = arith.addf %59, %68 : vector<256x128xf32>
    %c24_36 = arith.constant 24 : index
    %c0_37 = arith.constant 0 : index
    %70 = vector.load %arg9[%c24_36, %c0_37] : memref<304x128xbf16, #tpu.memory_space<vmem>>, vector<256x128xbf16>
    %c4 = arith.constant 4 : index
    %c0_38 = arith.constant 0 : index
    %c0_39 = arith.constant 0 : index
    %71 = vector.load %arg3[%c4, %c0_38, %c0_39] : memref<9x128x128xbf16, #tpu.memory_space<vmem>>, vector<1x128x128xbf16>
    %72 = vector.shape_cast %71 : vector<1x128x128xbf16> to vector<128x128xbf16>
    %cst_40 = arith.constant dense<0.000000e+00> : vector<256x128xf32>
    %73 = tpu.matmul %70, %72, %cst_40 {dimension_numbers = #tpu.dot_dimension_numbers<[1], [0], [0], [1], [0, 0, 1, 1], [], []>} : vector<256x128xbf16>, vector<128x128xbf16>, vector<256x128xf32> -> vector<256x128xf32>
    %74 = arith.addf %69, %73 : vector<256x128xf32>
    %c25 = arith.constant 25 : index
    %c0_41 = arith.constant 0 : index
    %75 = vector.load %arg9[%c25, %c0_41] : memref<304x128xbf16, #tpu.memory_space<vmem>>, vector<256x128xbf16>
    %cst_42 = arith.constant 0.000000e+00 : f32
    %76 = arith.truncf %cst_42 : f32 to bf16
    %77 = vector.shape_cast %35 : vector<256x1xi1> to vector<256x1xi1>
    %78 = vector.broadcast %77 : vector<256x1xi1> to vector<256x128xi1>
    %79 = vector.broadcast %76 : bf16 to vector<256x128xbf16>
    %80 = arith.select %78, %75, %79 : vector<256x128xi1>, vector<256x128xbf16>
    %c5 = arith.constant 5 : index
    %c0_43 = arith.constant 0 : index
    %c0_44 = arith.constant 0 : index
    %81 = vector.load %arg3[%c5, %c0_43, %c0_44] : memref<9x128x128xbf16, #tpu.memory_space<vmem>>, vector<1x128x128xbf16>
    %82 = vector.shape_cast %81 : vector<1x128x128xbf16> to vector<128x128xbf16>
    %cst_45 = arith.constant dense<0.000000e+00> : vector<256x128xf32>
    %83 = tpu.matmul %80, %82, %cst_45 {dimension_numbers = #tpu.dot_dimension_numbers<[1], [0], [0], [1], [0, 0, 1, 1], [], []>} : vector<256x128xbf16>, vector<128x128xbf16>, vector<256x128xf32> -> vector<256x128xf32>
    %84 = arith.addf %74, %83 : vector<256x128xf32>
    %c39 = arith.constant 39 : index
    %c0_46 = arith.constant 0 : index
    %85 = vector.load %arg9[%c39, %c0_46] : memref<304x128xbf16, #tpu.memory_space<vmem>>, vector<256x128xbf16>
    %cst_47 = arith.constant 0.000000e+00 : f32
    %86 = arith.truncf %cst_47 : f32 to bf16
    %87 = vector.shape_cast %33 : vector<256x1xi1> to vector<256x1xi1>
    %88 = vector.broadcast %87 : vector<256x1xi1> to vector<256x128xi1>
    %89 = vector.broadcast %86 : bf16 to vector<256x128xbf16>
    %90 = arith.select %88, %85, %89 : vector<256x128xi1>, vector<256x128xbf16>
    %c6 = arith.constant 6 : index
    %c0_48 = arith.constant 0 : index
    %c0_49 = arith.constant 0 : index
    %91 = vector.load %arg3[%c6, %c0_48, %c0_49] : memref<9x128x128xbf16, #tpu.memory_space<vmem>>, vector<1x128x128xbf16>
    %92 = vector.shape_cast %91 : vector<1x128x128xbf16> to vector<128x128xbf16>
    %cst_50 = arith.constant dense<0.000000e+00> : vector<256x128xf32>
    %93 = tpu.matmul %90, %92, %cst_50 {dimension_numbers = #tpu.dot_dimension_numbers<[1], [0], [0], [1], [0, 0, 1, 1], [], []>} : vector<256x128xbf16>, vector<128x128xbf16>, vector<256x128xf32> -> vector<256x128xf32>
    %94 = arith.addf %84, %93 : vector<256x128xf32>
    %c40 = arith.constant 40 : index
    %c0_51 = arith.constant 0 : index
    %95 = vector.load %arg9[%c40, %c0_51] : memref<304x128xbf16, #tpu.memory_space<vmem>>, vector<256x128xbf16>
    %c7_52 = arith.constant 7 : index
    %c0_53 = arith.constant 0 : index
    %c0_54 = arith.constant 0 : index
    %96 = vector.load %arg3[%c7_52, %c0_53, %c0_54] : memref<9x128x128xbf16, #tpu.memory_space<vmem>>, vector<1x128x128xbf16>
    %97 = vector.shape_cast %96 : vector<1x128x128xbf16> to vector<128x128xbf16>
    %cst_55 = arith.constant dense<0.000000e+00> : vector<256x128xf32>
    %98 = tpu.matmul %95, %97, %cst_55 {dimension_numbers = #tpu.dot_dimension_numbers<[1], [0], [0], [1], [0, 0, 1, 1], [], []>} : vector<256x128xbf16>, vector<128x128xbf16>, vector<256x128xf32> -> vector<256x128xf32>
    %99 = arith.addf %94, %98 : vector<256x128xf32>
    %c41 = arith.constant 41 : index
    %c0_56 = arith.constant 0 : index
    %100 = vector.load %arg9[%c41, %c0_56] : memref<304x128xbf16, #tpu.memory_space<vmem>>, vector<256x128xbf16>
    %cst_57 = arith.constant 0.000000e+00 : f32
    %101 = arith.truncf %cst_57 : f32 to bf16
    %102 = vector.shape_cast %35 : vector<256x1xi1> to vector<256x1xi1>
    %103 = vector.broadcast %102 : vector<256x1xi1> to vector<256x128xi1>
    %104 = vector.broadcast %101 : bf16 to vector<256x128xbf16>
    %105 = arith.select %103, %100, %104 : vector<256x128xi1>, vector<256x128xbf16>
    %c8_58 = arith.constant 8 : index
    %c0_59 = arith.constant 0 : index
    %c0_60 = arith.constant 0 : index
    %106 = vector.load %arg3[%c8_58, %c0_59, %c0_60] : memref<9x128x128xbf16, #tpu.memory_space<vmem>>, vector<1x128x128xbf16>
    %107 = vector.shape_cast %106 : vector<1x128x128xbf16> to vector<128x128xbf16>
    %cst_61 = arith.constant dense<0.000000e+00> : vector<256x128xf32>
    %108 = tpu.matmul %105, %107, %cst_61 {dimension_numbers = #tpu.dot_dimension_numbers<[1], [0], [0], [1], [0, 0, 1, 1], [], []>} : vector<256x128xbf16>, vector<128x128xbf16>, vector<256x128xf32> -> vector<256x128xf32>
    %109 = arith.addf %99, %108 : vector<256x128xf32>
    %c0_62 = arith.constant 0 : index
    %c0_63 = arith.constant 0 : index
    %110 = vector.load %arg6[%c0_62, %c0_63] : memref<1x128xf32, #tpu.memory_space<vmem>>, vector<1x128xf32>
    %111 = vector.broadcast %110 : vector<1x128xf32> to vector<256x128xf32>
    %112 = arith.addf %109, %111 : vector<256x128xf32>
    %cst_64 = arith.constant 0.000000e+00 : f32
    %113 = vector.broadcast %cst_64 : f32 to vector<256x128xf32>
    %114 = arith.maximumf %112, %113 : vector<256x128xf32>
    %115 = arith.truncf %114 : vector<256x128xf32> to vector<256x128xbf16>
    %c0_65 = arith.constant 0 : index
    %c0_66 = arith.constant 0 : index
    %116 = vector.load %arg4[%c0_65, %c0_66] : memref<128x128xbf16, #tpu.memory_space<vmem>>, vector<128x128xbf16>
    %cst_67 = arith.constant dense<0.000000e+00> : vector<256x128xf32>
    %117 = tpu.matmul %115, %116, %cst_67 {dimension_numbers = #tpu.dot_dimension_numbers<[1], [0], [0], [1], [0, 0, 1, 1], [], []>} : vector<256x128xbf16>, vector<128x128xbf16>, vector<256x128xf32> -> vector<256x128xf32>
    %c0_68 = arith.constant 0 : index
    %c0_69 = arith.constant 0 : index
    %118 = vector.load %arg7[%c0_68, %c0_69] : memref<1x128xf32, #tpu.memory_space<vmem>>, vector<1x128xf32>
    %119 = vector.broadcast %118 : vector<1x128xf32> to vector<256x128xf32>
    %120 = arith.addf %117, %119 : vector<256x128xf32>
    %c0_70 = arith.constant 0 : index
    %c0_71 = arith.constant 0 : index
    %c0_72 = arith.constant 0 : index
    %121 = vector.load %arg1[%c0_70, %c0_71, %c0_72] : memref<1x256x128xf32, #tpu.memory_space<vmem>>, vector<1x256x128xf32>
    %122 = vector.shape_cast %121 : vector<1x256x128xf32> to vector<256x128xf32>
    %123 = arith.addf %120, %122 : vector<256x128xf32>
    %cst_73 = arith.constant 0.000000e+00 : f32
    %124 = vector.broadcast %cst_73 : f32 to vector<256x128xf32>
    %125 = arith.maximumf %123, %124 : vector<256x128xf32>
    %c0_74 = arith.constant 0 : index
    %c0_75 = arith.constant 0 : index
    %c0_76 = arith.constant 0 : index
    %126 = vector.load %arg8[%c0_74, %c0_75, %c0_76] : memref<1x256x128xf32, #tpu.memory_space<vmem>>, vector<1x256x128xf32>
    %127 = vector.shape_cast %126 : vector<1x256x128xf32> to vector<256x128xf32>
    %128 = vector.shape_cast %125 : vector<256x128xf32> to vector<1x256x128xf32>
    tpu.vector_store %arg8[%c0_74, %c0_75, %c0_76], %128 {strides = array<i32>} : memref<1x256x128xf32, #tpu.memory_space<vmem>>, vector<1x256x128xf32>,
    return
  }
  func.func @transform_0(%arg0: i32) -> (i32, i32, i32) {
    %c0_i32 = arith.constant 0 : i32
    %c0_i32_0 = arith.constant 0 : i32
    %c0_i32_1 = arith.constant 0 : i32
    return %arg0, %c0_i32, %c0_i32_0 : i32, i32, i32
  }
  func.func @transform_1(%arg0: i32) -> (i32, i32) {
    %c0_i32 = arith.constant 0 : i32
    %c0_i32_0 = arith.constant 0 : i32
    %c0_i32_1 = arith.constant 0 : i32
    return %c0_i32, %c0_i32_0 : i32, i32
  }
  func.func @transform_2(%arg0: i32) -> (i32, i32, i32) {
    %c0_i32 = arith.constant 0 : i32
    %c0_i32_0 = arith.constant 0 : i32
    %c0_i32_1 = arith.constant 0 : i32
    %c0_i32_2 = arith.constant 0 : i32
    return %c0_i32, %c0_i32_0, %c0_i32_1 : i32, i32, i32
  }
  func.func @transform_3(%arg0: i32) -> (i32, i32) {
    %c0_i32 = arith.constant 0 : i32
    %c0_i32_0 = arith.constant 0 : i32
    %c0_i32_1 = arith.constant 0 : i32
    return %c0_i32, %c0_i32_0 : i32, i32
  }
  func.func @transform_4(%arg0: i32) -> (i32, i32) {
    %c0_i32 = arith.constant 0 : i32
    %c0_i32_0 = arith.constant 0 : i32
    %c0_i32_1 = arith.constant 0 : i32
    return %c0_i32, %c0_i32_0 : i32, i32
  }
  func.func @transform_5(%arg0: i32) -> (i32, i32) {
    %c0_i32 = arith.constant 0 : i32
    %c0_i32_0 = arith.constant 0 : i32
    %c0_i32_1 = arith.constant 0 : i32
    return %c0_i32, %c0_i32_0 : i32, i32
  }
  func.func @transform_6(%arg0: i32) -> (i32, i32) {
    %c0_i32 = arith.constant 0 : i32
    %c0_i32_0 = arith.constant 0 : i32
    %c0_i32_1 = arith.constant 0 : i32
    return %c0_i32, %c0_i32_0 : i32, i32
  }
  func.func @transform_7(%arg0: i32) -> (i32, i32, i32) {
    %c0_i32 = arith.constant 0 : i32
    %c0_i32_0 = arith.constant 0 : i32
    %c0_i32_1 = arith.constant 0 : i32
    return %arg0, %c0_i32, %c0_i32_0 : i32, i32, i32
  }
}

</mosaic_0001>

<llo_original>
// kernel: tpu_custom_call.1
$region0: #{tpu_custom_call.1}
  #allocation0 [shape = 'u32[]', space=smem, size = 0x4, offset = 0x4, fixed_abs, tag = 'smem constant byte address 0x4 - core index']
  #allocation1 [shape = 'u32[144,128]{1,0:T(1,128)}', space=vmem, size = 0x12000, scoped, tag = 'internal scratch']
  #allocation2 [shape = 'bf16[304,128]{1,0:T(16,128)(2,1)}', space=vmem, size = 0x13000, scoped, tag = 'scratch operand']
  %s0 = inlined_call_operand.hbm [shape: f32[2,256,128], index: 0, kind: input, shape index: {}]
  %s1 = inlined_call_operand.hbm [shape: bf16[128,128], index: 1, kind: input, shape index: {}]
  %s2 = inlined_call_operand.hbm [shape: bf16[9,128,128], index: 2, kind: input, shape index: {}]
  %s3 = inlined_call_operand.hbm [shape: bf16[128,128], index: 3, kind: input, shape index: {}]
  %s4 = inlined_call_operand.vmem [shape: f32[1,128], index: 4, kind: input, shape index: {}]
  %s5 = inlined_call_operand.vmem [shape: f32[1,128], index: 5, kind: input, shape index: {}]
  %s6 = inlined_call_operand.vmem [shape: f32[1,128], index: 6, kind: input, shape index: {}]
  %s7 = inlined_call_operand.hbm [shape: f32[2,256,128], index: 7, kind: output, shape index: {}]
  %s8 = sld [smem:[#allocation0]]
  $region77: #{tpu_custom_call.1} parent=0
    _
  %s10 = ssub.s32 1, %s8
  %s11 = scalar_select 0, %s10, %s8
  $region1: #{tpu_custom_call.1} parent=0
    #allocation3 [shape = 'u8[262144]{0}', space=vmem, size = 0x40000, scoped, tag = 'input window, operand 0']
    #allocation4 [shape = 's32[2]{0}', space=sflag, size = 0x8, scoped, tag = 'scoped memory for tpu_custom_call.1']
    #allocation5 [shape = 's32[2]{0}', space=sflag, size = 0x8, scoped, tag = 'scoped memory for tpu_custom_call.1']
    #allocation6 [shape = 'u8[32768]{0}', space=vmem, size = 0x8000, scoped, tag = 'input window, operand 1, single buffered']
    #allocation7 [shape = 's32[1]{0}', space=sflag, size = 0x4, scoped, tag = 'scoped memory for tpu_custom_call.1']
    #allocation8 [shape = 'u8[294912]{0}', space=vmem, size = 0x48000, scoped, tag = 'input window, operand 2, single buffered']
    #allocation9 [shape = 'u8[32768]{0}', space=vmem, size = 0x8000, scoped, tag = 'input window, operand 3, single buffered']
    #allocation10 [shape = 's32[1]{0}', space=sflag, size = 0x4, scoped, tag = 'scoped memory for tpu_custom_call.1']
    #allocation11 [shape = 'u8[262144]{0}', space=vmem, size = 0x40000, scoped, tag = 'output window, operand 0']
    %12 = vsyncpa [#allocation4], 0
    %s13 = scalar_lea.sflag [#allocation4], 1
    %14 = vsyncpa %s13, 0
    %15 = vsyncpa [#allocation7], 0
    %16 = vsyncpa [#allocation10], 0
    %17 = vsyncpa [#allocation5], 0
    %s18 = scalar_lea.sflag [#allocation5], 1
    %19 = vsyncpa %s18, 0
    loop: start=0, step=1, limit=4
    $region2: #{tpu_custom_call.1} parent=1 // loop_pre_header
      _
    $region3: #{tpu_custom_call.1} parent=1 // loop_header
      %s21 = sphi 0, %s25
      %p22 = scmp.ge.s32.totalorder %s21, 4
      %s31 = sphi 0, %s33
      %s34 = sphi 0, %s31
      %s35 = sphi 0, %s34
      %s51 = sphi 0, %s35
      %s55 = sphi 0, %s55
      %s57 = sphi 0, %s55
      %s58 = sphi 0, %s57
      %s72 = sphi 0, %s58
      %s76 = sphi 0, %s76
      %s78 = sphi 0, %s76
      %s79 = sphi 0, %s78
      %s93 = sphi 0, %s79
      %s97 = sphi 0, %s97
      %s99 = sphi 0, %s97
      %s100 = sphi 0, %s99
      %s114 = sphi 0, %s100
      %s118 = sphi 0, %s118
      %s120 = sphi 0, %s118
      %s121 = sphi 0, %s120
      %s135 = sphi 0, %s121
      %s139 = sphi 0, %s139
      %s141 = sphi 0, %s139
      %s142 = sphi 0, %s141
      %s156 = sphi 0, %s142
      %s160 = sphi 0, %s160
      %s162 = sphi 0, %s160
      %s163 = sphi 0, %s162
      %s177 = sphi 0, %s163
      %s183 = sphi 0, %s185
      %s186 = sphi 0, %s183
      %s187 = sphi 0, %s186
      %s203 = sphi 0, %s187
    $region4: #{tpu_custom_call.1} parent=1 // loop_header_branch
      %24 = sbr.rel (%p22) target = $region8
    $region5: #{tpu_custom_call.1} parent=1 // loop_body
      %s26 = ssub.s32 %s21, 1
      %s27 = ssub.s32 %s21, 2
      %s28 = sadd.s32 %s21, 1
      %s29 = ssub.s32 %s21, %s28
      %p30 = scmp.eq.s32.totalorder %s29, 0
      %s32 = sadd.s32 %s31, 1
      %s33 = scalar_select %p30, %s31, %s32
      %p36 = pneg %p30
      %p37 = scmp.eq.s32.totalorder %s21, 1
      %p38 = por %p36, %p37
      %p39 = scmp.ne.s32.totalorder %s31, %s34
      %p40 = scmp.eq.s32.totalorder %s21, 0
      %p41 = por %p39, %p40
      %p42 = scmp.ne.s32.totalorder %s31, %s34
      %p43 = scmp.eq.s32.totalorder %s26, 1
      %p44 = por %p42, %p43
      %p45 = scmp.ne.s32.totalorder %s34, %s35
      %p46 = scmp.eq.s32.totalorder %s26, 0
      %p47 = por %p45, %p46
      %p48 = scmp.ne.s32.totalorder %s34, %s35
      %p49 = scmp.eq.s32.totalorder %s27, 1
      %p50 = por %p48, %p49
      %p52 = scmp.ne.s32.totalorder %s35, %s51
      %p53 = scmp.eq.s32.totalorder %s27, 0
      %p54 = por %p52, %p53
      %s56 = sadd.s32 %s55, 1
      %p59 = scmp.eq.s32.totalorder %s21, 1
      %p60 = scmp.ne.s32.totalorder %s55, %s57
      %p61 = scmp.eq.s32.totalorder %s21, 0
      %p62 = por %p60, %p61
      %p63 = scmp.ne.s32.totalorder %s55, %s57
      %p64 = scmp.eq.s32.totalorder %s26, 1
      %p65 = por %p63, %p64
      %p66 = scmp.ne.s32.totalorder %s57, %s58
      %p67 = scmp.eq.s32.totalorder %s26, 0
      %p68 = por %p66, %p67
      %p69 = scmp.ne.s32.totalorder %s57, %s58
      %p70 = scmp.eq.s32.totalorder %s27, 1
      %p71 = por %p69, %p70
      %p73 = scmp.ne.s32.totalorder %s58, %s72
      %p74 = scmp.eq.s32.totalorder %s27, 0
      %p75 = por %p73, %p74
      %s77 = sadd.s32 %s76, 1
      %p80 = scmp.eq.s32.totalorder %s21, 1
      %p81 = scmp.ne.s32.totalorder %s76, %s78
      %p82 = scmp.eq.s32.totalorder %s21, 0
      %p83 = por %p81, %p82
      %p84 = scmp.ne.s32.totalorder %s76, %s78
      %p85 = scmp.eq.s32.totalorder %s26, 1
      %p86 = por %p84, %p85
      %p87 = scmp.ne.s32.totalorder %s78, %s79
      %p88 = scmp.eq.s32.totalorder %s26, 0
      %p89 = por %p87, %p88
      %p90 = scmp.ne.s32.totalorder %s78, %s79
      %p91 = scmp.eq.s32.totalorder %s27, 1
      %p92 = por %p90, %p91
      %p94 = scmp.ne.s32.totalorder %s79, %s93
      %p95 = scmp.eq.s32.totalorder %s27, 0
      %p96 = por %p94, %p95
      %s98 = sadd.s32 %s97, 1
      %p101 = scmp.eq.s32.totalorder %s21, 1
      %p102 = scmp.ne.s32.totalorder %s97, %s99
      %p103 = scmp.eq.s32.totalorder %s21, 0
      %p104 = por %p102, %p103
      %p105 = scmp.ne.s32.totalorder %s97, %s99
      %p106 = scmp.eq.s32.totalorder %s26, 1
      %p107 = por %p105, %p106
      %p108 = scmp.ne.s32.totalorder %s99, %s100
      %p109 = scmp.eq.s32.totalorder %s26, 0
      %p110 = por %p108, %p109
      %p111 = scmp.ne.s32.totalorder %s99, %s100
      %p112 = scmp.eq.s32.totalorder %s27, 1
      %p113 = por %p111, %p112
      %p115 = scmp.ne.s32.totalorder %s100, %s114
      %p116 = scmp.eq.s32.totalorder %s27, 0
      %p117 = por %p115, %p116
      %s119 = sadd.s32 %s118, 1
      %p122 = scmp.eq.s32.totalorder %s21, 1
      %p123 = scmp.ne.s32.totalorder %s118, %s120
      %p124 = scmp.eq.s32.totalorder %s21, 0
      %p125 = por %p123, %p124
      %p126 = scmp.ne.s32.totalorder %s118, %s120
      %p127 = scmp.eq.s32.totalorder %s26, 1
      %p128 = por %p126, %p127
      %p129 = scmp.ne.s32.totalorder %s120, %s121
      %p130 = scmp.eq.s32.totalorder %s26, 0
      %p131 = por %p129, %p130
      %p132 = scmp.ne.s32.totalorder %s120, %s121
      %p133 = scmp.eq.s32.totalorder %s27, 1
      %p134 = por %p132, %p133
      %p136 = scmp.ne.s32.totalorder %s121, %s135
      %p137 = scmp.eq.s32.totalorder %s27, 0
      %p138 = por %p136, %p137
      %s140 = sadd.s32 %s139, 1
      %p143 = scmp.eq.s32.totalorder %s21, 1
      %p144 = scmp.ne.s32.totalorder %s139, %s141
      %p145 = scmp.eq.s32.totalorder %s21, 0
      %p146 = por %p144, %p145
      %p147 = scmp.ne.s32.totalorder %s139, %s141
      %p148 = scmp.eq.s32.totalorder %s26, 1
      %p149 = por %p147, %p148
      %p150 = scmp.ne.s32.totalorder %s141, %s142
      %p151 = scmp.eq.s32.totalorder %s26, 0
      %p152 = por %p150, %p151
      %p153 = scmp.ne.s32.totalorder %s141, %s142
      %p154 = scmp.eq.s32.totalorder %s27, 1
      %p155 = por %p153, %p154
      %p157 = scmp.ne.s32.totalorder %s142, %s156
      %p158 = scmp.eq.s32.totalorder %s27, 0
      %p159 = por %p157, %p158
      %s161 = sadd.s32 %s160, 1
      %p164 = scmp.eq.s32.totalorder %s21, 1
      %p165 = scmp.ne.s32.totalorder %s160, %s162
      %p166 = scmp.eq.s32.totalorder %s21, 0
      %p167 = por %p165, %p166
      %p168 = scmp.ne.s32.totalorder %s160, %s162
      %p169 = scmp.eq.s32.totalorder %s26, 1
      %p170 = por %p168, %p169
      %p171 = scmp.ne.s32.totalorder %s162, %s163
      %p172 = scmp.eq.s32.totalorder %s26, 0
      %p173 = por %p171, %p172
      %p174 = scmp.ne.s32.totalorder %s162, %s163
      %p175 = scmp.eq.s32.totalorder %s27, 1
      %p176 = por %p174, %p175
      %p178 = scmp.ne.s32.totalorder %s163, %s177
      %p179 = scmp.eq.s32.totalorder %s27, 0
      %p180 = por %p178, %p179
      %s181 = ssub.s32 %s21, %s28
      %p182 = scmp.eq.s32.totalorder %s181, 0
      %s184 = sadd.s32 %s183, 1
      %s185 = scalar_select %p182, %s183, %s184
      %p188 = pneg %p182
      %p189 = scmp.eq.s32.totalorder %s21, 1
      %p190 = por %p188, %p189
      %p191 = scmp.ne.s32.totalorder %s183, %s186
      %p192 = scmp.eq.s32.totalorder %s21, 0
      %p193 = por %p191, %p192
      %p194 = scmp.ne.s32.totalorder %s183, %s186
      %p195 = scmp.eq.s32.totalorder %s26, 1
      %p196 = por %p194, %p195
      %p197 = scmp.ne.s32.totalorder %s186, %s187
      %p198 = scmp.eq.s32.totalorder %s26, 0
      %p199 = por %p197, %p198
      %p200 = scmp.ne.s32.totalorder %s186, %s187
      %p201 = scmp.eq.s32.totalorder %s27, 1
      %p202 = por %p200, %p201
      %p204 = scmp.ne.s32.totalorder %s187, %s203
      %p205 = scmp.eq.s32.totalorder %s27, 0
      %p206 = por %p204, %p205
      %p207 = scmp.le.s32.totalorder 1, %s21
      %p208 = scmp.lt.s32.totalorder %s21, 3
      %p209 = pnand %p207, %p208
      %p210 = pneg %p209
      // Predicated region
      $region9: #{tpu_custom_call.1} parent=5 // pred_check
        _
      $region10: #{tpu_custom_call.1} parent=5 // pred_check_branch
        %212 = sbr.rel (%p209) target = $region12
      $region11: #{tpu_custom_call.1} parent=5 // pred_region
        %s213 = ssub.s32 %s21, 1
        // Predicated region
        $region13: #{tpu_custom_call.1} parent=11 // pred_check
          %p214 = pneg %p68
        $region14: #{tpu_custom_call.1} parent=11 // pred_check_branch
          %216 = sbr.rel (%p214) target = $region16
        $region15: #{tpu_custom_call.1} parent=11 // pred_region
          %s218 = ssub.s32 1024, 1024
          %219 = vsyncadd [#allocation7], %s218
          %s220 = sshll.u32 [#allocation6], 4
          %s221 = int_to_ptr.vmem [resolvable:$true] %s220
          %226 = dma.hbm_to_vmem [thread:$0]  %s1, 1024, %s221, [#allocation7], 64, 64, 4
        $region16: #{tpu_custom_call.1} parent=11 // pred_fallthru
          _
        // Predicated region
        $region17: #{tpu_custom_call.1} parent=11 // pred_check
          %p227 = pneg %p89
        $region18: #{tpu_custom_call.1} parent=11 // pred_check_branch
          %229 = sbr.rel (%p227) target = $region20
        $region19: #{tpu_custom_call.1} parent=11 // pred_region
          %s231 = ssub.s32 9216, 9216
          %232 = vsyncadd [#allocation7], %s231
          %s233 = sshll.u32 [#allocation8], 4
          %s234 = int_to_ptr.vmem [resolvable:$true] %s233
          %239 = dma.hbm_to_vmem [thread:$0]  %s2, 9216, %s234, [#allocation7], 64, 64, 4
        $region20: #{tpu_custom_call.1} parent=11 // pred_fallthru
          _
        // Predicated region
        $region21: #{tpu_custom_call.1} parent=11 // pred_check
          %p240 = pneg %p110
        $region22: #{tpu_custom_call.1} parent=11 // pred_check_branch
          %242 = sbr.rel (%p240) target = $region24
        $region23: #{tpu_custom_call.1} parent=11 // pred_region
          %s244 = ssub.s32 1024, 1024
          %245 = vsyncadd [#allocation10], %s244
          %s246 = sshll.u32 [#allocation9], 4
          %s247 = int_to_ptr.vmem [resolvable:$true] %s246
          %252 = dma.hbm_to_vmem [thread:$0]  %s3, 1024, %s247, [#allocation10], 64, 64, 4
        $region24: #{tpu_custom_call.1} parent=11 // pred_fallthru
          _
        // Predicated region
        $region25: #{tpu_custom_call.1} parent=11 // pred_check
          %p253 = pneg %p131
        $region26: #{tpu_custom_call.1} parent=11 // pred_check_branch
          %255 = sbr.rel (%p253) target = $region28
        $region27: #{tpu_custom_call.1} parent=11 // pred_region
          _
        $region28: #{tpu_custom_call.1} parent=11 // pred_fallthru
          _
        // Predicated region
        $region29: #{tpu_custom_call.1} parent=11 // pred_check
          %p256 = pneg %p152
        $region30: #{tpu_custom_call.1} parent=11 // pred_check_branch
          %258 = sbr.rel (%p256) target = $region32
        $region31: #{tpu_custom_call.1} parent=11 // pred_region
          _
        $region32: #{tpu_custom_call.1} parent=11 // pred_fallthru
          _
        // Predicated region
        $region33: #{tpu_custom_call.1} parent=11 // pred_check
          %p259 = pneg %p173
        $region34: #{tpu_custom_call.1} parent=11 // pred_check_branch
          %261 = sbr.rel (%p259) target = $region36
        $region35: #{tpu_custom_call.1} parent=11 // pred_region
          _
        $region36: #{tpu_custom_call.1} parent=11 // pred_fallthru
          _
      $region12: #{tpu_custom_call.1} parent=5 // pred_fallthru
        _
      %p262 = scmp.lt.s32.totalorder %s21, 2
      // Predicated region
      $region37: #{tpu_custom_call.1} parent=5 // pred_check
        %p263 = pneg %p262
      $region38: #{tpu_custom_call.1} parent=5 // pred_check_branch
        %265 = sbr.rel (%p263) target = $region40
      $region39: #{tpu_custom_call.1} parent=5 // pred_region
        // Predicated region
        $region41: #{tpu_custom_call.1} parent=39 // pred_check
          %p266 = pneg %p41
        $region42: #{tpu_custom_call.1} parent=39 // pred_check_branch
          %268 = sbr.rel (%p266) target = $region44
        $region43: #{tpu_custom_call.1} parent=39 // pred_region
          %s269 = sand.u32 %s31, 1
          %s270 = scalar_lea.sflag [#allocation4], %s269
          %s271 = sand.u32 %s31, 1
          %s272 = smul.addr %s271, 256
          %s273 = scalar_lea.vmem [#allocation3], %s272
          %s275 = ssub.s32 4096, 4096
          %276 = vsyncadd %s270, %s275
          %s277 = smul.addr %s21, 32
          %s278 = smul.addr %s277, 128
          %s279 = scalar_lea.hbm %s0, %s278
          %s280 = sshll.u32 %s273, 4
          %s281 = int_to_ptr.vmem [resolvable:$true] %s280
          %286 = dma.hbm_to_vmem [thread:$0]  %s279, 4096, %s281, %s270, 128, 128, 8
        $region44: #{tpu_custom_call.1} parent=39 // pred_fallthru
          _
      $region40: #{tpu_custom_call.1} parent=5 // pred_fallthru
        _
      %p287 = scmp.le.s32.totalorder 1, %s21
      %p288 = scmp.lt.s32.totalorder %s21, 3
      %p289 = pnand %p287, %p288
      %p290 = pneg %p289
      // Predicated region
      $region45: #{tpu_custom_call.1} parent=5 // pred_check
        _
      $region46: #{tpu_custom_call.1} parent=5 // pred_check_branch
        %292 = sbr.rel (%p289) target = $region48
      $region47: #{tpu_custom_call.1} parent=5 // pred_region
        %s293 = ssub.s32 %s21, 1
        %s294 = sand.u32 %s34, 1
        %s295 = scalar_lea.sflag [#allocation4], %s294
        %s296 = sand.u32 %s34, 1
        %s297 = smul.addr %s296, 256
        %s298 = scalar_lea.vmem [#allocation3], %s297
        // Predicated region
        $region49: #{tpu_custom_call.1} parent=47 // pred_check
          %p299 = pneg %p47
        $region50: #{tpu_custom_call.1} parent=47 // pred_check_branch
          %301 = sbr.rel (%p299) target = $region52
        $region51: #{tpu_custom_call.1} parent=47 // pred_region
          %302 = dma.done %s295, 4096
        $region52: #{tpu_custom_call.1} parent=47 // pred_fallthru
          _
        // Predicated region
        $region53: #{tpu_custom_call.1} parent=47 // pred_check
          %p303 = pneg %p68
        $region54: #{tpu_custom_call.1} parent=47 // pred_check_branch
          %305 = sbr.rel (%p303) target = $region56
        $region55: #{tpu_custom_call.1} parent=47 // pred_region
          %306 = dma.done [#allocation7], 1024
        $region56: #{tpu_custom_call.1} parent=47 // pred_fallthru
          _
        // Predicated region
        $region57: #{tpu_custom_call.1} parent=47 // pred_check
          %p307 = pneg %p89
        $region58: #{tpu_custom_call.1} parent=47 // pred_check_branch
          %309 = sbr.rel (%p307) target = $region60
        $region59: #{tpu_custom_call.1} parent=47 // pred_region
          %310 = dma.done [#allocation7], 9216
        $region60: #{tpu_custom_call.1} parent=47 // pred_fallthru
          _
        // Predicated region
        $region61: #{tpu_custom_call.1} parent=47 // pred_check
          %p311 = pneg %p110
        $region62: #{tpu_custom_call.1} parent=47 // pred_check_branch
          %313 = sbr.rel (%p311) target = $region64
        $region63: #{tpu_custom_call.1} parent=47 // pred_region
          %314 = dma.done [#allocation10], 1024
        $region64: #{tpu_custom_call.1} parent=47 // pred_fallthru
          _
        %s315 = sand.u32 %s34, 1
        %s316 = scalar_lea.sflag [#allocation4], %s315
        %s317 = sand.u32 %s34, 1
        %s318 = smul.addr %s317, 256
        %s319 = scalar_lea.vmem [#allocation3], %s318
        %p320 = pneg %p47
        %p321 = pneg %p44
        %p322 = pneg %p68
        %p323 = pneg %p65
        %p324 = pneg %p89
        %p325 = pneg %p86
        %p326 = pneg %p110
        %p327 = pneg %p107
        %p328 = pneg %p131
        %p329 = pneg %p128
        %p330 = pneg %p152
        %p331 = pneg %p149
        %p332 = pneg %p173
        %p333 = pneg %p170
        %p334 = pneg %p199
        %p335 = pneg %p196
        %s336 = sand.u32 %s186, 1
        %s337 = scalar_lea.sflag [#allocation5], %s336
        %s338 = sand.u32 %s186, 1
        %s339 = smul.addr %s338, 256
        %s340 = scalar_lea.vmem [#allocation11], %s339
        %v344 = vld [vmem:[%s298] sm:$0xff]
        %v345 = vld [vmem:[%s298 + $0x8] sm:$0xff]
        %v346 = vld [vmem:[%s298 + $0x10] sm:$0xff]
        %v347 = vld [vmem:[%s298 + $0x18] sm:$0xff]
        %v348 = vld [vmem:[%s298 + $0x20] sm:$0xff]
        %v349 = vld [vmem:[%s298 + $0x28] sm:$0xff]
        %v350 = vld [vmem:[%s298 + $0x30] sm:$0xff]
        %v351 = vld [vmem:[%s298 + $0x38] sm:$0xff]
        %v352 = vld [vmem:[%s298 + $0x40] sm:$0xff]
        %v353 = vld [vmem:[%s298 + $0x48] sm:$0xff]
        %v354 = vld [vmem:[%s298 + $0x50] sm:$0xff]
        %v355 = vld [vmem:[%s298 + $0x58] sm:$0xff]
        %v356 = vld [vmem:[%s298 + $0x60] sm:$0xff]
        %v357 = vld [vmem:[%s298 + $0x68] sm:$0xff]
        %v358 = vld [vmem:[%s298 + $0x70] sm:$0xff]
        %v359 = vld [vmem:[%s298 + $0x78] sm:$0xff]
        %v360 = vld [vmem:[%s298 + $0x80] sm:$0xff]
        %v361 = vld [vmem:[%s298 + $0x88] sm:$0xff]
        %v362 = vld [vmem:[%s298 + $0x90] sm:$0xff]
        %v363 = vld [vmem:[%s298 + $0x98] sm:$0xff]
        %v364 = vld [vmem:[%s298 + $0xa0] sm:$0xff]
        %v365 = vld [vmem:[%s298 + $0xa8] sm:$0xff]
        %v366 = vld [vmem:[%s298 + $0xb0] sm:$0xff]
        %v367 = vld [vmem:[%s298 + $0xb8] sm:$0xff]
        %v368 = vld [vmem:[%s298 + $0xc0] sm:$0xff]
        %v369 = vld [vmem:[%s298 + $0xc8] sm:$0xff]
        %v370 = vld [vmem:[%s298 + $0xd0] sm:$0xff]
        %v371 = vld [vmem:[%s298 + $0xd8] sm:$0xff]
        %v372 = vld [vmem:[%s298 + $0xe0] sm:$0xff]
        %v373 = vld [vmem:[%s298 + $0xe8] sm:$0xff]
        %v374 = vld [vmem:[%s298 + $0xf0] sm:$0xff]
        %v375 = vld [vmem:[%s298 + $0xf8] sm:$0xff]
        %v376 = vpack.c.bf16 %v345, %v344
        %v377 = vpack.c.bf16 %v347, %v346
        %v378 = vpack.c.bf16 %v349, %v348
        %v379 = vpack.c.bf16 %v351, %v350
        %v380 = vpack.c.bf16 %v353, %v352
        %v381 = vpack.c.bf16 %v355, %v354
        %v382 = vpack.c.bf16 %v357, %v356
        %v383 = vpack.c.bf16 %v359, %v358
        %v384 = vpack.c.bf16 %v361, %v360
        %v385 = vpack.c.bf16 %v363, %v362
        %v386 = vpack.c.bf16 %v365, %v364
        %v387 = vpack.c.bf16 %v367, %v366
        %v388 = vpack.c.bf16 %v369, %v368
        %v389 = vpack.c.bf16 %v371, %v370
        %v390 = vpack.c.bf16 %v373, %v372
        %v391 = vpack.c.bf16 %v375, %v374
        %v392 = vld [vmem:[#allocation6] sm:$0xf]
        %v393 = vld [vmem:[#allocation6 + $0x4] sm:$0xf]
        %v394 = vld [vmem:[#allocation6 + $0x8] sm:$0xf]
        %v395 = vld [vmem:[#allocation6 + $0xc] sm:$0xf]
        %v396 = vld [vmem:[#allocation6 + $0x10] sm:$0xf]
        %v397 = vld [vmem:[#allocation6 + $0x14] sm:$0xf]
        %v398 = vld [vmem:[#allocation6 + $0x18] sm:$0xf]
        %v399 = vld [vmem:[#allocation6 + $0x1c] sm:$0xf]
        %v400 = vld [vmem:[#allocation6 + $0x20] sm:$0xf]
        %v401 = vld [vmem:[#allocation6 + $0x24] sm:$0xf]
        %v402 = vld [vmem:[#allocation6 + $0x28] sm:$0xf]
        %v403 = vld [vmem:[#allocation6 + $0x2c] sm:$0xf]
        %v404 = vld [vmem:[#allocation6 + $0x30] sm:$0xf]
        %v405 = vld [vmem:[#allocation6 + $0x34] sm:$0xf]
        %v406 = vld [vmem:[#allocation6 + $0x38] sm:$0xf]
        %v407 = vld [vmem:[#allocation6 + $0x3c] sm:$0xf]
        %v408 = vld [vmem:[%s4] sm:$0x1]
        %v410 = vlaneseq
        %v411 = vshrl.u32 %v410, 7
        %v412 = vsub.s32 0, %v411
        %v413 = vrot.slane %v408, %v412
        %v431 = vunpack.c.l.b16 %v392
        %v432 = vunpack.c.l.b16 %v393
        %v433 = vunpack.c.l.b16 %v394
        %v434 = vunpack.c.l.b16 %v395
        %v435 = vunpack.c.l.b16 %v396
        %v436 = vunpack.c.l.b16 %v397
        %v437 = vunpack.c.l.b16 %v398
        %v438 = vunpack.c.l.b16 %v399
        %v439 = vunpack.c.l.b16 %v400
        %v440 = vunpack.c.l.b16 %v401
        %v441 = vunpack.c.l.b16 %v402
        %v442 = vunpack.c.l.b16 %v403
        %v443 = vunpack.c.l.b16 %v404
        %v444 = vunpack.c.l.b16 %v405
        %v445 = vunpack.c.l.b16 %v406
        %v446 = vunpack.c.l.b16 %v407
        %v447 = vpack.c.b16 %v432, %v431
        %v448 = vpack.c.b16 %v434, %v433
        %v449 = vpack.c.b16 %v436, %v435
        %v450 = vpack.c.b16 %v438, %v437
        %v451 = vpack.c.b16 %v440, %v439
        %v452 = vpack.c.b16 %v442, %v441
        %v453 = vpack.c.b16 %v444, %v443
        %v454 = vpack.c.b16 %v446, %v445
        %463 = vmatprep.subr.bf16.mxu0 0
        %464 = vmatpush1.bf16.msra.mxu0 %v447
        %465 = vmatprep.subr.bf16.mxu0 0
        %466 = vmatpush1.bf16.msra.mxu0 %v448
        %467 = vmatprep.subr.bf16.mxu0 0
        %468 = vmatpush1.bf16.msra.mxu0 %v449
        %469 = vmatprep.subr.bf16.mxu0 0
        %470 = vmatpush1.bf16.msra.mxu0 %v450
        %471 = vmatprep.subr.bf16.mxu0 0
        %472 = vmatpush1.bf16.msra.mxu0 %v451
        %473 = vmatprep.subr.bf16.mxu0 0
        %474 = vmatpush1.bf16.msra.mxu0 %v452
        %475 = vmatprep.subr.bf16.mxu0 0
        %476 = vmatpush1.bf16.msra.mxu0 %v453
        %477 = vmatprep.subr.bf16.mxu0 0
        %478 = vmatpush1.bf16.msra.mxu0 %v454
        %479 = vmatprep.subr.bf16.mxu0 0
        %480 = vmatpush1.bf16.msra.mxu0 0
        %481 = vmatprep.subr.bf16.mxu0 0
        %482 = vmatpush1.bf16.msra.mxu0 0
        %483 = vmatprep.subr.bf16.mxu0 0
        %484 = vmatpush1.bf16.msra.mxu0 0
        %485 = vmatprep.subr.bf16.mxu0 0
        %486 = vmatpush1.bf16.msra.mxu0 0
        %487 = vmatprep.subr.bf16.mxu0 0
        %488 = vmatpush1.bf16.msra.mxu0 0
        %489 = vmatprep.subr.bf16.mxu0 0
        %490 = vmatpush1.bf16.msra.mxu0 0
        %491 = vmatprep.subr.bf16.mxu0 0
        %492 = vmatpush1.bf16.msra.mxu0 0
        %493 = vmatprep.subr.bf16.mxu0 0
        %494 = vmatpush1.bf16.msra.mxu0 0
        %495 = vmatprep.mubr.bf16.mxu0 0
        %496 = vmatmul.mubr.bf16.gmra.mrb[0].mxu0 %v376
        %v497 = vpop.f32.mrb[0].mxu0
        %v498 = vadd.f32 %v413, %v497
        %v499 = vpop.f32.mrb[0].mxu0
        %v500 = vpop.f32.mrb[0].mxu0
        %v501 = vadd.f32 %v413, %v500
        %v502 = vpop.f32.mrb[0].mxu0
        %503 = vmatprep.mubr.bf16.mxu0 0
        %504 = vmatmul.mubr.bf16.gmra.mrb[0].mxu0 %v377
        %v505 = vpop.f32.mrb[0].mxu0
        %v506 = vadd.f32 %v413, %v505
        %v507 = vpop.f32.mrb[0].mxu0
        %v508 = vpop.f32.mrb[0].mxu0
        %v509 = vadd.f32 %v413, %v508
        %v510 = vpop.f32.mrb[0].mxu0
        %511 = vmatprep.mubr.bf16.mxu0 0
        %512 = vmatmul.mubr.bf16.gmra.mrb[0].mxu0 %v378
        %v513 = vpop.f32.mrb[0].mxu0
        %v514 = vadd.f32 %v413, %v513
        %v515 = vpop.f32.mrb[0].mxu0
        %v516 = vpop.f32.mrb[0].mxu0
        %v517 = vadd.f32 %v413, %v516
        %v518 = vpop.f32.mrb[0].mxu0
        %519 = vmatprep.mubr.bf16.mxu0 0
        %520 = vmatmul.mubr.bf16.gmra.mrb[0].mxu0 %v379
        %v521 = vpop.f32.mrb[0].mxu0
        %v522 = vadd.f32 %v413, %v521
        %v523 = vpop.f32.mrb[0].mxu0
        %v524 = vpop.f32.mrb[0].mxu0
        %v525 = vadd.f32 %v413, %v524
        %v526 = vpop.f32.mrb[0].mxu0
        %527 = vmatprep.mubr.bf16.mxu0 0
        %528 = vmatmul.mubr.bf16.gmra.mrb[0].mxu0 %v380
        %v529 = vpop.f32.mrb[0].mxu0
        %v530 = vadd.f32 %v413, %v529
        %v531 = vpop.f32.mrb[0].mxu0
        %v532 = vpop.f32.mrb[0].mxu0
        %v533 = vadd.f32 %v413, %v532
        %v534 = vpop.f32.mrb[0].mxu0
        %535 = vmatprep.mubr.bf16.mxu0 0
        %536 = vmatmul.mubr.bf16.gmra.mrb[0].mxu0 %v381
        %v537 = vpop.f32.mrb[0].mxu0
        %v538 = vadd.f32 %v413, %v537
        %v539 = vpop.f32.mrb[0].mxu0
        %v540 = vpop.f32.mrb[0].mxu0
        %v541 = vadd.f32 %v413, %v540
        %v542 = vpop.f32.mrb[0].mxu0
        %543 = vmatprep.mubr.bf16.mxu0 0
        %544 = vmatmul.mubr.bf16.gmra.mrb[0].mxu0 %v382
        %v545 = vpop.f32.mrb[0].mxu0
        %v546 = vadd.f32 %v413, %v545
        %v547 = vpop.f32.mrb[0].mxu0
        %v548 = vpop.f32.mrb[0].mxu0
        %v549 = vadd.f32 %v413, %v548
        %v550 = vpop.f32.mrb[0].mxu0
        %551 = vmatprep.mubr.bf16.mxu0 0
        %552 = vmatmul.mubr.bf16.gmra.mrb[0].mxu0 %v383
        %v553 = vpop.f32.mrb[0].mxu0
        %v554 = vadd.f32 %v413, %v553
        %v555 = vpop.f32.mrb[0].mxu0
        %v556 = vpop.f32.mrb[0].mxu0
        %v557 = vadd.f32 %v413, %v556
        %v558 = vpop.f32.mrb[0].mxu0
        %559 = vmatprep.mubr.bf16.mxu0 0
        %560 = vmatmul.mubr.bf16.gmra.mrb[0].mxu0 %v384
        %v561 = vpop.f32.mrb[0].mxu0
        %v562 = vadd.f32 %v413, %v561
        %v563 = vpop.f32.mrb[0].mxu0
        %v564 = vpop.f32.mrb[0].mxu0
        %v565 = vadd.f32 %v413, %v564
        %v566 = vpop.f32.mrb[0].mxu0
        %567 = vmatprep.mubr.bf16.mxu0 0
        %568 = vmatmul.mubr.bf16.gmra.mrb[0].mxu0 %v385
        %v569 = vpop.f32.mrb[0].mxu0
        %v570 = vadd.f32 %v413, %v569
        %v571 = vpop.f32.mrb[0].mxu0
        %v572 = vpop.f32.mrb[0].mxu0
        %v573 = vadd.f32 %v413, %v572
        %v574 = vpop.f32.mrb[0].mxu0
        %575 = vmatprep.mubr.bf16.mxu0 0
        %576 = vmatmul.mubr.bf16.gmra.mrb[0].mxu0 %v386
        %v577 = vpop.f32.mrb[0].mxu0
        %v578 = vadd.f32 %v413, %v577
        %v579 = vpop.f32.mrb[0].mxu0
        %v580 = vpop.f32.mrb[0].mxu0
        %v581 = vadd.f32 %v413, %v580
        %v582 = vpop.f32.mrb[0].mxu0
        %583 = vmatprep.mubr.bf16.mxu0 0
        %584 = vmatmul.mubr.bf16.gmra.mrb[0].mxu0 %v387
        %v585 = vpop.f32.mrb[0].mxu0
        %v586 = vadd.f32 %v413, %v585
        %v587 = vpop.f32.mrb[0].mxu0
        %v588 = vpop.f32.mrb[0].mxu0
        %v589 = vadd.f32 %v413, %v588
        %v590 = vpop.f32.mrb[0].mxu0
        %591 = vmatprep.mubr.bf16.mxu0 0
        %592 = vmatmul.mubr.bf16.gmra.mrb[0].mxu0 %v388
        %v593 = vpop.f32.mrb[0].mxu0
        %v594 = vadd.f32 %v413, %v593
        %v595 = vpop.f32.mrb[0].mxu0
        %v596 = vpop.f32.mrb[0].mxu0
        %v597 = vadd.f32 %v413, %v596
        %v598 = vpop.f32.mrb[0].mxu0
        %599 = vmatprep.mubr.bf16.mxu0 0
        %600 = vmatmul.mubr.bf16.gmra.mrb[0].mxu0 %v389
        %v601 = vpop.f32.mrb[0].mxu0
        %v602 = vadd.f32 %v413, %v601
        %v603 = vpop.f32.mrb[0].mxu0
        %v604 = vpop.f32.mrb[0].mxu0
        %v605 = vadd.f32 %v413, %v604
        %v606 = vpop.f32.mrb[0].mxu0
        %607 = vmatprep.mubr.bf16.mxu0 0
        %608 = vmatmul.mubr.bf16.gmra.mrb[0].mxu0 %v390
        %v609 = vpop.f32.mrb[0].mxu0
        %v610 = vadd.f32 %v413, %v609
        %v611 = vpop.f32.mrb[0].mxu0
        %v612 = vpop.f32.mrb[0].mxu0
        %v613 = vadd.f32 %v413, %v612
        %v614 = vpop.f32.mrb[0].mxu0
        %615 = vmatprep.mubr.bf16.mxu0 0
        %616 = vmatmul.mubr.bf16.gmra.mrb[0].mxu0 %v391
        %v617 = vpop.f32.mrb[0].mxu0
        %v618 = vadd.f32 %v413, %v617
        %v619 = vpop.f32.mrb[0].mxu0
        %v620 = vpop.f32.mrb[0].mxu0
        %v621 = vadd.f32 %v413, %v620
        %v622 = vpop.f32.mrb[0].mxu0
        %623 = vdwg.mxu0
        %v624 = vmax.f32 %v498, 0.0
        %v625 = vmax.f32 %v501, 0.0
        %v626 = vmax.f32 %v506, 0.0
        %v627 = vmax.f32 %v509, 0.0
        %v628 = vmax.f32 %v514, 0.0
        %v629 = vmax.f32 %v517, 0.0
        %v630 = vmax.f32 %v522, 0.0
        %v631 = vmax.f32 %v525, 0.0
        %v632 = vmax.f32 %v530, 0.0
        %v633 = vmax.f32 %v533, 0.0
        %v634 = vmax.f32 %v538, 0.0
        %v635 = vmax.f32 %v541, 0.0
        %v636 = vmax.f32 %v546, 0.0
        %v637 = vmax.f32 %v549, 0.0
        %v638 = vmax.f32 %v554, 0.0
        %v639 = vmax.f32 %v557, 0.0
        %v640 = vmax.f32 %v562, 0.0
        %v641 = vmax.f32 %v565, 0.0
        %v642 = vmax.f32 %v570, 0.0
        %v643 = vmax.f32 %v573, 0.0
        %v644 = vmax.f32 %v578, 0.0
        %v645 = vmax.f32 %v581, 0.0
        %v646 = vmax.f32 %v586, 0.0
        %v647 = vmax.f32 %v589, 0.0
        %v648 = vmax.f32 %v594, 0.0
        %v649 = vmax.f32 %v597, 0.0
        %v650 = vmax.f32 %v602, 0.0
        %v651 = vmax.f32 %v605, 0.0
        %v652 = vmax.f32 %v610, 0.0
        %v653 = vmax.f32 %v613, 0.0
        %v654 = vmax.f32 %v618, 0.0
        %v655 = vmax.f32 %v621, 0.0
        %656 = vst [vmem:[#allocation2] sm:$0xff] 0
        %657 = vst [vmem:[#allocation2 + $0x8] sm:$0xf] 0
        %658 = vst [vmem:[#allocation2 + $0x88] sm:$0xf0] 0
        %659 = vst [vmem:[#allocation2 + $0x90] sm:$0xff] 0
        %v660 = vpack.c.bf16 %v625, %v624
        %v661 = vpack.c.bf16 %v627, %v626
        %v662 = vpack.c.bf16 %v629, %v628
        %v663 = vpack.c.bf16 %v631, %v630
        %v664 = vpack.c.bf16 %v633, %v632
        %v665 = vpack.c.bf16 %v635, %v634
        %v666 = vpack.c.bf16 %v637, %v636
        %v667 = vpack.c.bf16 %v639, %v638
        %v668 = vpack.c.bf16 %v641, %v640
        %v669 = vpack.c.bf16 %v643, %v642
        %v670 = vpack.c.bf16 %v645, %v644
        %v671 = vpack.c.bf16 %v647, %v646
        %v672 = vpack.c.bf16 %v649, %v648
        %v673 = vpack.c.bf16 %v651, %v650
        %v674 = vpack.c.bf16 %v653, %v652
        %v675 = vpack.c.bf16 %v655, %v654
        %vm692 = vcmask 1043456
        %v693 = vrot.slane %v660, 4
        %v694 = vrot.slane %v661, 4
        %v695 = vsel %vm692, %v693, %v694
        %v696 = vrot.slane %v662, 4
        %v697 = vsel %vm692, %v694, %v696
        %v698 = vrot.slane %v663, 4
        %v699 = vsel %vm692, %v696, %v698
        %v700 = vrot.slane %v664, 4
        %v701 = vsel %vm692, %v698, %v700
        %v702 = vrot.slane %v665, 4
        %v703 = vsel %vm692, %v700, %v702
        %v704 = vrot.slane %v666, 4
        %v705 = vsel %vm692, %v702, %v704
        %v706 = vrot.slane %v667, 4
        %v707 = vsel %vm692, %v704, %v706
        %v708 = vrot.slane %v668, 4
        %v709 = vsel %vm692, %v706, %v708
        %v710 = vrot.slane %v669, 4
        %v711 = vsel %vm692, %v708, %v710
        %v712 = vrot.slane %v670, 4
        %v713 = vsel %vm692, %v710, %v712
        %v714 = vrot.slane %v671, 4
        %v715 = vsel %vm692, %v712, %v714
        %v716 = vrot.slane %v672, 4
        %v717 = vsel %vm692, %v714, %v716
        %v718 = vrot.slane %v673, 4
        %v719 = vsel %vm692, %v716, %v718
        %v720 = vrot.slane %v674, 4
        %v721 = vsel %vm692, %v718, %v720
        %v722 = vrot.slane %v675, 4
        %v723 = vsel %vm692, %v720, %v722
        %741 = vst [vmem:[#allocation2 + $0x8] sm:$0xf0] %v693
        %742 = vst [vmem:[#allocation2 + $0x10] sm:$0xff] %v695
        %743 = vst [vmem:[#allocation2 + $0x18] sm:$0xff] %v697
        %744 = vst [vmem:[#allocation2 + $0x20] sm:$0xff] %v699
        %745 = vst [vmem:[#allocation2 + $0x28] sm:$0xff] %v701
        %746 = vst [vmem:[#allocation2 + $0x30] sm:$0xff] %v703
        %747 = vst [vmem:[#allocation2 + $0x38] sm:$0xff] %v705
        %748 = vst [vmem:[#allocation2 + $0x40] sm:$0xff] %v707
        %749 = vst [vmem:[#allocation2 + $0x48] sm:$0xff] %v709
        %750 = vst [vmem:[#allocation2 + $0x50] sm:$0xff] %v711
        %751 = vst [vmem:[#allocation2 + $0x58] sm:$0xff] %v713
        %752 = vst [vmem:[#allocation2 + $0x60] sm:$0xff] %v715
        %753 = vst [vmem:[#allocation2 + $0x68] sm:$0xff] %v717
        %754 = vst [vmem:[#allocation2 + $0x70] sm:$0xff] %v719
        %755 = vst [vmem:[#allocation2 + $0x78] sm:$0xff] %v721
        %756 = vst [vmem:[#allocation2 + $0x80] sm:$0xff] %v723
        %757 = vst [vmem:[#allocation2 + $0x88] sm:$0xf] %v722
        %v758 = vlaneseq
        %v759 = vshrl.u32 %v758, 7
        %v760 = vadd.s32 %v759, 8
        %v761 = vadd.s32 %v759, 16
        %v762 = vadd.s32 %v759, 24
        %v763 = vadd.s32 %v759, 32
        %v764 = vadd.s32 %v759, 40
        %v765 = vadd.s32 %v759, 48
        %v766 = vadd.s32 %v759, 56
        %v767 = vadd.s32 %v759, 64
        %v768 = vadd.s32 %v759, 72
        %v769 = vadd.s32 %v759, 80
        %v770 = vadd.s32 %v759, 88
        %v771 = vadd.s32 %v759, 96
        %v772 = vadd.s32 %v759, 104
        %v773 = vadd.s32 %v759, 112
        %v774 = vadd.s32 %v759, 120
        %v775 = vadd.s32 %v759, 128
        %v776 = vadd.s32 %v759, 136
        %v777 = vadd.s32 %v759, 144
        %v778 = vadd.s32 %v759, 152
        %v779 = vadd.s32 %v759, 160
        %v780 = vadd.s32 %v759, 168
        %v781 = vadd.s32 %v759, 176
        %v782 = vadd.s32 %v759, 184
        %v783 = vadd.s32 %v759, 192
        %v784 = vadd.s32 %v759, 200
        %v785 = vadd.s32 %v759, 208
        %v786 = vadd.s32 %v759, 216
        %v787 = vadd.s32 %v759, 224
        %v788 = vadd.s32 %v759, 232
        %v789 = vadd.s32 %v759, 240
        %v790 = vadd.s32 %v759, 248
        %vm791 = vcmp.lt.s32.totalorder %v759, 0
        %v792 = vsub.s32 0, %v759
        %v793 = vsel %vm791, %v792, %v759
        %v794 = vshrl.u32 %v793, 4
        %v795 = vand.u32 %v793, 15
        %v796 = vsub.s32 0, %v795
        %v797 = vsel %vm791, %v796, %v795
        %vm798 = vcmp.lt.s32.totalorder %v760, 0
        %v799 = vsub.s32 0, %v760
        %v800 = vsel %vm798, %v799, %v760
        %v801 = vshrl.u32 %v800, 4
        %v802 = vand.u32 %v800, 15
        %v803 = vsub.s32 0, %v802
        %v804 = vsel %vm798, %v803, %v802
        %vm805 = vcmp.lt.s32.totalorder %v761, 0
        %v806 = vsub.s32 0, %v761
        %v807 = vsel %vm805, %v806, %v761
        %v808 = vshrl.u32 %v807, 4
        %v809 = vand.u32 %v807, 15
        %v810 = vsub.s32 0, %v809
        %v811 = vsel %vm805, %v810, %v809
        %vm812 = vcmp.lt.s32.totalorder %v762, 0
        %v813 = vsub.s32 0, %v762
        %v814 = vsel %vm812, %v813, %v762
        %v815 = vshrl.u32 %v814, 4
        %v816 = vand.u32 %v814, 15
        %v817 = vsub.s32 0, %v816
        %v818 = vsel %vm812, %v817, %v816
        %vm819 = vcmp.lt.s32.totalorder %v763, 0
        %v820 = vsub.s32 0, %v763
        %v821 = vsel %vm819, %v820, %v763
        %v822 = vshrl.u32 %v821, 4
        %v823 = vand.u32 %v821, 15
        %v824 = vsub.s32 0, %v823
        %v825 = vsel %vm819, %v824, %v823
        %vm826 = vcmp.lt.s32.totalorder %v764, 0
        %v827 = vsub.s32 0, %v764
        %v828 = vsel %vm826, %v827, %v764
        %v829 = vshrl.u32 %v828, 4
        %v830 = vand.u32 %v828, 15
        %v831 = vsub.s32 0, %v830
        %v832 = vsel %vm826, %v831, %v830
        %vm833 = vcmp.lt.s32.totalorder %v765, 0
        %v834 = vsub.s32 0, %v765
        %v835 = vsel %vm833, %v834, %v765
        %v836 = vshrl.u32 %v835, 4
        %v837 = vand.u32 %v835, 15
        %v838 = vsub.s32 0, %v837
        %v839 = vsel %vm833, %v838, %v837
        %vm840 = vcmp.lt.s32.totalorder %v766, 0
        %v841 = vsub.s32 0, %v766
        %v842 = vsel %vm840, %v841, %v766
        %v843 = vshrl.u32 %v842, 4
        %v844 = vand.u32 %v842, 15
        %v845 = vsub.s32 0, %v844
        %v846 = vsel %vm840, %v845, %v844
        %vm847 = vcmp.lt.s32.totalorder %v767, 0
        %v848 = vsub.s32 0, %v767
        %v849 = vsel %vm847, %v848, %v767
        %v850 = vshrl.u32 %v849, 4
        %v851 = vand.u32 %v849, 15
        %v852 = vsub.s32 0, %v851
        %v853 = vsel %vm847, %v852, %v851
        %vm854 = vcmp.lt.s32.totalorder %v768, 0
        %v855 = vsub.s32 0, %v768
        %v856 = vsel %vm854, %v855, %v768
        %v857 = vshrl.u32 %v856, 4
        %v858 = vand.u32 %v856, 15
        %v859 = vsub.s32 0, %v858
        %v860 = vsel %vm854, %v859, %v858
        %vm861 = vcmp.lt.s32.totalorder %v769, 0
        %v862 = vsub.s32 0, %v769
        %v863 = vsel %vm861, %v862, %v769
        %v864 = vshrl.u32 %v863, 4
        %v865 = vand.u32 %v863, 15
        %v866 = vsub.s32 0, %v865
        %v867 = vsel %vm861, %v866, %v865
        %vm868 = vcmp.lt.s32.totalorder %v770, 0
        %v869 = vsub.s32 0, %v770
        %v870 = vsel %vm868, %v869, %v770
        %v871 = vshrl.u32 %v870, 4
        %v872 = vand.u32 %v870, 15
        %v873 = vsub.s32 0, %v872
        %v874 = vsel %vm868, %v873, %v872
        %vm875 = vcmp.lt.s32.totalorder %v771, 0
        %v876 = vsub.s32 0, %v771
        %v877 = vsel %vm875, %v876, %v771
        %v878 = vshrl.u32 %v877, 4
        %v879 = vand.u32 %v877, 15
        %v880 = vsub.s32 0, %v879
        %v881 = vsel %vm875, %v880, %v879
        %vm882 = vcmp.lt.s32.totalorder %v772, 0
        %v883 = vsub.s32 0, %v772
        %v884 = vsel %vm882, %v883, %v772
        %v885 = vshrl.u32 %v884, 4
        %v886 = vand.u32 %v884, 15
        %v887 = vsub.s32 0, %v886
        %v888 = vsel %vm882, %v887, %v886
        %vm889 = vcmp.lt.s32.totalorder %v773, 0
        %v890 = vsub.s32 0, %v773
        %v891 = vsel %vm889, %v890, %v773
        %v892 = vshrl.u32 %v891, 4
        %v893 = vand.u32 %v891, 15
        %v894 = vsub.s32 0, %v893
        %v895 = vsel %vm889, %v894, %v893
        %vm896 = vcmp.lt.s32.totalorder %v774, 0
        %v897 = vsub.s32 0, %v774
        %v898 = vsel %vm896, %v897, %v774
        %v899 = vshrl.u32 %v898, 4
        %v900 = vand.u32 %v898, 15
        %v901 = vsub.s32 0, %v900
        %v902 = vsel %vm896, %v901, %v900
        %vm903 = vcmp.lt.s32.totalorder %v775, 0
        %v904 = vsub.s32 0, %v775
        %v905 = vsel %vm903, %v904, %v775
        %v906 = vshrl.u32 %v905, 4
        %v907 = vand.u32 %v905, 15
        %v908 = vsub.s32 0, %v907
        %v909 = vsel %vm903, %v908, %v907
        %vm910 = vcmp.lt.s32.totalorder %v776, 0
        %v911 = vsub.s32 0, %v776
        %v912 = vsel %vm910, %v911, %v776
        %v913 = vshrl.u32 %v912, 4
        %v914 = vand.u32 %v912, 15
        %v915 = vsub.s32 0, %v914
        %v916 = vsel %vm910, %v915, %v914
        %vm917 = vcmp.lt.s32.totalorder %v777, 0
        %v918 = vsub.s32 0, %v777
        %v919 = vsel %vm917, %v918, %v777
        %v920 = vshrl.u32 %v919, 4
        %v921 = vand.u32 %v919, 15
        %v922 = vsub.s32 0, %v921
        %v923 = vsel %vm917, %v922, %v921
        %vm924 = vcmp.lt.s32.totalorder %v778, 0
        %v925 = vsub.s32 0, %v778
        %v926 = vsel %vm924, %v925, %v778
        %v927 = vshrl.u32 %v926, 4
        %v928 = vand.u32 %v926, 15
        %v929 = vsub.s32 0, %v928
        %v930 = vsel %vm924, %v929, %v928
        %vm931 = vcmp.lt.s32.totalorder %v779, 0
        %v932 = vsub.s32 0, %v779
        %v933 = vsel %vm931, %v932, %v779
        %v934 = vshrl.u32 %v933, 4
        %v935 = vand.u32 %v933, 15
        %v936 = vsub.s32 0, %v935
        %v937 = vsel %vm931, %v936, %v935
        %vm938 = vcmp.lt.s32.totalorder %v780, 0
        %v939 = vsub.s32 0, %v780
        %v940 = vsel %vm938, %v939, %v780
        %v941 = vshrl.u32 %v940, 4
        %v942 = vand.u32 %v940, 15
        %v943 = vsub.s32 0, %v942
        %v944 = vsel %vm938, %v943, %v942
        %vm945 = vcmp.lt.s32.totalorder %v781, 0
        %v946 = vsub.s32 0, %v781
        %v947 = vsel %vm945, %v946, %v781
        %v948 = vshrl.u32 %v947, 4
        %v949 = vand.u32 %v947, 15
        %v950 = vsub.s32 0, %v949
        %v951 = vsel %vm945, %v950, %v949
        %vm952 = vcmp.lt.s32.totalorder %v782, 0
        %v953 = vsub.s32 0, %v782
        %v954 = vsel %vm952, %v953, %v782
        %v955 = vshrl.u32 %v954, 4
        %v956 = vand.u32 %v954, 15
        %v957 = vsub.s32 0, %v956
        %v958 = vsel %vm952, %v957, %v956
        %vm959 = vcmp.lt.s32.totalorder %v783, 0
        %v960 = vsub.s32 0, %v783
        %v961 = vsel %vm959, %v960, %v783
        %v962 = vshrl.u32 %v961, 4
        %v963 = vand.u32 %v961, 15
        %v964 = vsub.s32 0, %v963
        %v965 = vsel %vm959, %v964, %v963
        %vm966 = vcmp.lt.s32.totalorder %v784, 0
        %v967 = vsub.s32 0, %v784
        %v968 = vsel %vm966, %v967, %v784
        %v969 = vshrl.u32 %v968, 4
        %v970 = vand.u32 %v968, 15
        %v971 = vsub.s32 0, %v970
        %v972 = vsel %vm966, %v971, %v970
        %vm973 = vcmp.lt.s32.totalorder %v785, 0
        %v974 = vsub.s32 0, %v785
        %v975 = vsel %vm973, %v974, %v785
        %v976 = vshrl.u32 %v975, 4
        %v977 = vand.u32 %v975, 15
        %v978 = vsub.s32 0, %v977
        %v979 = vsel %vm973, %v978, %v977
        %vm980 = vcmp.lt.s32.totalorder %v786, 0
        %v981 = vsub.s32 0, %v786
        %v982 = vsel %vm980, %v981, %v786
        %v983 = vshrl.u32 %v982, 4
        %v984 = vand.u32 %v982, 15
        %v985 = vsub.s32 0, %v984
        %v986 = vsel %vm980, %v985, %v984
        %vm987 = vcmp.lt.s32.totalorder %v787, 0
        %v988 = vsub.s32 0, %v787
        %v989 = vsel %vm987, %v988, %v787
        %v990 = vshrl.u32 %v989, 4
        %v991 = vand.u32 %v989, 15
        %v992 = vsub.s32 0, %v991
        %v993 = vsel %vm987, %v992, %v991
        %vm994 = vcmp.lt.s32.totalorder %v788, 0
        %v995 = vsub.s32 0, %v788
        %v996 = vsel %vm994, %v995, %v788
        %v997 = vshrl.u32 %v996, 4
        %v998 = vand.u32 %v996, 15
        %v999 = vsub.s32 0, %v998
        %v1000 = vsel %vm994, %v999, %v998
        %vm1001 = vcmp.lt.s32.totalorder %v789, 0
        %v1002 = vsub.s32 0, %v789
        %v1003 = vsel %vm1001, %v1002, %v789
        %v1004 = vshrl.u32 %v1003, 4
        %v1005 = vand.u32 %v1003, 15
        %v1006 = vsub.s32 0, %v1005
        %v1007 = vsel %vm1001, %v1006, %v1005
        %vm1008 = vcmp.lt.s32.totalorder %v790, 0
        %v1009 = vsub.s32 0, %v790
        %v1010 = vsel %vm1008, %v1009, %v790
        %v1011 = vshrl.u32 %v1010, 4
        %v1012 = vand.u32 %v1010, 15
        %v1013 = vsub.s32 0, %v1012
        %v1014 = vsel %vm1008, %v1013, %v1012
        %vm1015 = vcmp.ne.s32.totalorder %v797, 0
        %vm1016 = vcmp.ne.s32.totalorder %v804, 0
        %vm1017 = vcmp.ne.s32.totalorder %v811, 0
        %vm1018 = vcmp.ne.s32.totalorder %v818, 0
        %vm1019 = vcmp.ne.s32.totalorder %v825, 0
        %vm1020 = vcmp.ne.s32.totalorder %v832, 0
        %vm1021 = vcmp.ne.s32.totalorder %v839, 0
        %vm1022 = vcmp.ne.s32.totalorder %v846, 0
        %vm1023 = vcmp.ne.s32.totalorder %v853, 0
        %vm1024 = vcmp.ne.s32.totalorder %v860, 0
        %vm1025 = vcmp.ne.s32.totalorder %v867, 0
        %vm1026 = vcmp.ne.s32.totalorder %v874, 0
        %vm1027 = vcmp.ne.s32.totalorder %v881, 0
        %vm1028 = vcmp.ne.s32.totalorder %v888, 0
        %vm1029 = vcmp.ne.s32.totalorder %v895, 0
        %vm1030 = vcmp.ne.s32.totalorder %v902, 0
        %vm1031 = vcmp.ne.s32.totalorder %v909, 0
        %vm1032 = vcmp.ne.s32.totalorder %v916, 0
        %vm1033 = vcmp.ne.s32.totalorder %v923, 0
        %vm1034 = vcmp.ne.s32.totalorder %v930, 0
        %vm1035 = vcmp.ne.s32.totalorder %v937, 0
        %vm1036 = vcmp.ne.s32.totalorder %v944, 0
        %vm1037 = vcmp.ne.s32.totalorder %v951, 0
        %vm1038 = vcmp.ne.s32.totalorder %v958, 0
        %vm1039 = vcmp.ne.s32.totalorder %v965, 0
        %vm1040 = vcmp.ne.s32.totalorder %v972, 0
        %vm1041 = vcmp.ne.s32.totalorder %v979, 0
        %vm1042 = vcmp.ne.s32.totalorder %v986, 0
        %vm1043 = vcmp.ne.s32.totalorder %v993, 0
        %vm1044 = vcmp.ne.s32.totalorder %v1000, 0
        %vm1045 = vcmp.ne.s32.totalorder %v1007, 0
        %vm1046 = vcmp.ne.s32.totalorder %v1014, 0
        %vm1047 = vcmp.lt.s32.totalorder %v797, 0
        %vm1048 = vcmp.lt.s32.totalorder %v804, 0
        %vm1049 = vcmp.lt.s32.totalorder %v811, 0
        %vm1050 = vcmp.lt.s32.totalorder %v818, 0
        %vm1051 = vcmp.lt.s32.totalorder %v825, 0
        %vm1052 = vcmp.lt.s32.totalorder %v832, 0
        %vm1053 = vcmp.lt.s32.totalorder %v839, 0
        %vm1054 = vcmp.lt.s32.totalorder %v846, 0
        %vm1055 = vcmp.lt.s32.totalorder %v853, 0
        %vm1056 = vcmp.lt.s32.totalorder %v860, 0
        %vm1057 = vcmp.lt.s32.totalorder %v867, 0
        %vm1058 = vcmp.lt.s32.totalorder %v874, 0
        %vm1059 = vcmp.lt.s32.totalorder %v881, 0
        %vm1060 = vcmp.lt.s32.totalorder %v888, 0
        %vm1061 = vcmp.lt.s32.totalorder %v895, 0
        %vm1062 = vcmp.lt.s32.totalorder %v902, 0
        %vm1063 = vcmp.lt.s32.totalorder %v909, 0
        %vm1064 = vcmp.lt.s32.totalorder %v916, 0
        %vm1065 = vcmp.lt.s32.totalorder %v923, 0
        %vm1066 = vcmp.lt.s32.totalorder %v930, 0
        %vm1067 = vcmp.lt.s32.totalorder %v937, 0
        %vm1068 = vcmp.lt.s32.totalorder %v944, 0
        %vm1069 = vcmp.lt.s32.totalorder %v951, 0
        %vm1070 = vcmp.lt.s32.totalorder %v958, 0
        %vm1071 = vcmp.lt.s32.totalorder %v965, 0
        %vm1072 = vcmp.lt.s32.totalorder %v972, 0
        %vm1073 = vcmp.lt.s32.totalorder %v979, 0
        %vm1074 = vcmp.lt.s32.totalorder %v986, 0
        %vm1075 = vcmp.lt.s32.totalorder %v993, 0
        %vm1076 = vcmp.lt.s32.totalorder %v1000, 0
        %vm1077 = vcmp.lt.s32.totalorder %v1007, 0
        %vm1078 = vcmp.lt.s32.totalorder %v1014, 0
        %vm1079 = vmand %vm1047, %vm1015
        %vm1080 = vmand %vm1048, %vm1016
        %vm1081 = vmand %vm1049, %vm1017
        %vm1082 = vmand %vm1050, %vm1018
        %vm1083 = vmand %vm1051, %vm1019
        %vm1084 = vmand %vm1052, %vm1020
        %vm1085 = vmand %vm1053, %vm1021
        %vm1086 = vmand %vm1054, %vm1022
        %vm1087 = vmand %vm1055, %vm1023
        %vm1088 = vmand %vm1056, %vm1024
        %vm1089 = vmand %vm1057, %vm1025
        %vm1090 = vmand %vm1058, %vm1026
        %vm1091 = vmand %vm1059, %vm1027
        %vm1092 = vmand %vm1060, %vm1028
        %vm1093 = vmand %vm1061, %vm1029
        %vm1094 = vmand %vm1062, %vm1030
        %vm1095 = vmand %vm1063, %vm1031
        %vm1096 = vmand %vm1064, %vm1032
        %vm1097 = vmand %vm1065, %vm1033
        %vm1098 = vmand %vm1066, %vm1034
        %vm1099 = vmand %vm1067, %vm1035
        %vm1100 = vmand %vm1068, %vm1036
        %vm1101 = vmand %vm1069, %vm1037
        %vm1102 = vmand %vm1070, %vm1038
        %vm1103 = vmand %vm1071, %vm1039
        %vm1104 = vmand %vm1072, %vm1040
        %vm1105 = vmand %vm1073, %vm1041
        %vm1106 = vmand %vm1074, %vm1042
        %vm1107 = vmand %vm1075, %vm1043
        %vm1108 = vmand %vm1076, %vm1044
        %vm1109 = vmand %vm1077, %vm1045
        %vm1110 = vmand %vm1078, %vm1046
        %v1111 = vadd.s32 %v797, 16
        %v1112 = vadd.s32 %v804, 16
        %v1113 = vadd.s32 %v811, 16
        %v1114 = vadd.s32 %v818, 16
        %v1115 = vadd.s32 %v825, 16
        %v1116 = vadd.s32 %v832, 16
        %v1117 = vadd.s32 %v839, 16
        %v1118 = vadd.s32 %v846, 16
        %v1119 = vadd.s32 %v853, 16
        %v1120 = vadd.s32 %v860, 16
        %v1121 = vadd.s32 %v867, 16
        %v1122 = vadd.s32 %v874, 16
        %v1123 = vadd.s32 %v881, 16
        %v1124 = vadd.s32 %v888, 16
        %v1125 = vadd.s32 %v895, 16
        %v1126 = vadd.s32 %v902, 16
        %v1127 = vadd.s32 %v909, 16
        %v1128 = vadd.s32 %v916, 16
        %v1129 = vadd.s32 %v923, 16
        %v1130 = vadd.s32 %v930, 16
        %v1131 = vadd.s32 %v937, 16
        %v1132 = vadd.s32 %v944, 16
        %v1133 = vadd.s32 %v951, 16
        %v1134 = vadd.s32 %v958, 16
        %v1135 = vadd.s32 %v965, 16
        %v1136 = vadd.s32 %v972, 16
        %v1137 = vadd.s32 %v979, 16
        %v1138 = vadd.s32 %v986, 16
        %v1139 = vadd.s32 %v993, 16
        %v1140 = vadd.s32 %v1000, 16
        %v1141 = vadd.s32 %v1007, 16
        %v1142 = vadd.s32 %v1014, 16
        %v1143 = vsel %vm1079, %v1111, %v797
        %v1144 = vsel %vm1080, %v1112, %v804
        %v1145 = vsel %vm1081, %v1113, %v811
        %v1146 = vsel %vm1082, %v1114, %v818
        %v1147 = vsel %vm1083, %v1115, %v825
        %v1148 = vsel %vm1084, %v1116, %v832
        %v1149 = vsel %vm1085, %v1117, %v839
        %v1150 = vsel %vm1086, %v1118, %v846
        %v1151 = vsel %vm1087, %v1119, %v853
        %v1152 = vsel %vm1088, %v1120, %v860
        %v1153 = vsel %vm1089, %v1121, %v867
        %v1154 = vsel %vm1090, %v1122, %v874
        %v1155 = vsel %vm1091, %v1123, %v881
        %v1156 = vsel %vm1092, %v1124, %v888
        %v1157 = vsel %vm1093, %v1125, %v895
        %v1158 = vsel %vm1094, %v1126, %v902
        %v1159 = vsel %vm1095, %v1127, %v909
        %v1160 = vsel %vm1096, %v1128, %v916
        %v1161 = vsel %vm1097, %v1129, %v923
        %v1162 = vsel %vm1098, %v1130, %v930
        %v1163 = vsel %vm1099, %v1131, %v937
        %v1164 = vsel %vm1100, %v1132, %v944
        %v1165 = vsel %vm1101, %v1133, %v951
        %v1166 = vsel %vm1102, %v1134, %v958
        %v1167 = vsel %vm1103, %v1135, %v965
        %v1168 = vsel %vm1104, %v1136, %v972
        %v1169 = vsel %vm1105, %v1137, %v979
        %v1170 = vsel %vm1106, %v1138, %v986
        %v1171 = vsel %vm1107, %v1139, %v993
        %v1172 = vsel %vm1108, %v1140, %v1000
        %v1173 = vsel %vm1109, %v1141, %v1007
        %v1174 = vsel %vm1110, %v1142, %v1014
        %vm1175 = vcmp.ge.s32.totalorder %v1143, 1
        %vm1176 = vcmp.ge.s32.totalorder %v1144, 1
        %vm1177 = vcmp.ge.s32.totalorder %v1145, 1
        %vm1178 = vcmp.ge.s32.totalorder %v1146, 1
        %vm1179 = vcmp.ge.s32.totalorder %v1147, 1
        %vm1180 = vcmp.ge.s32.totalorder %v1148, 1
        %vm1181 = vcmp.ge.s32.totalorder %v1149, 1
        %vm1182 = vcmp.ge.s32.totalorder %v1150, 1
        %vm1183 = vcmp.ge.s32.totalorder %v1151, 1
        %vm1184 = vcmp.ge.s32.totalorder %v1152, 1
        %vm1185 = vcmp.ge.s32.totalorder %v1153, 1
        %vm1186 = vcmp.ge.s32.totalorder %v1154, 1
        %vm1187 = vcmp.ge.s32.totalorder %v1155, 1
        %vm1188 = vcmp.ge.s32.totalorder %v1156, 1
        %vm1189 = vcmp.ge.s32.totalorder %v1157, 1
        %vm1190 = vcmp.ge.s32.totalorder %v1158, 1
        %vm1191 = vcmp.ge.s32.totalorder %v1159, 1
        %vm1192 = vcmp.ge.s32.totalorder %v1160, 1
        %vm1193 = vcmp.ge.s32.totalorder %v1161, 1
        %vm1194 = vcmp.ge.s32.totalorder %v1162, 1
        %vm1195 = vcmp.ge.s32.totalorder %v1163, 1
        %vm1196 = vcmp.ge.s32.totalorder %v1164, 1
        %vm1197 = vcmp.ge.s32.totalorder %v1165, 1
        %vm1198 = vcmp.ge.s32.totalorder %v1166, 1
        %vm1199 = vcmp.ge.s32.totalorder %v1167, 1
        %vm1200 = vcmp.ge.s32.totalorder %v1168, 1
        %vm1201 = vcmp.ge.s32.totalorder %v1169, 1
        %vm1202 = vcmp.ge.s32.totalorder %v1170, 1
        %vm1203 = vcmp.ge.s32.totalorder %v1171, 1
        %vm1204 = vcmp.ge.s32.totalorder %v1172, 1
        %vm1205 = vcmp.ge.s32.totalorder %v1173, 1
        %vm1206 = vcmp.ge.s32.totalorder %v1174, 1
        %vm1207 = vcmp.le.s32.totalorder %v1143, 14
        %vm1208 = vcmp.le.s32.totalorder %v1144, 14
        %vm1209 = vcmp.le.s32.totalorder %v1145, 14
        %vm1210 = vcmp.le.s32.totalorder %v1146, 14
        %vm1211 = vcmp.le.s32.totalorder %v1147, 14
        %vm1212 = vcmp.le.s32.totalorder %v1148, 14
        %vm1213 = vcmp.le.s32.totalorder %v1149, 14
        %vm1214 = vcmp.le.s32.totalorder %v1150, 14
        %vm1215 = vcmp.le.s32.totalorder %v1151, 14
        %vm1216 = vcmp.le.s32.totalorder %v1152, 14
        %vm1217 = vcmp.le.s32.totalorder %v1153, 14
        %vm1218 = vcmp.le.s32.totalorder %v1154, 14
        %vm1219 = vcmp.le.s32.totalorder %v1155, 14
        %vm1220 = vcmp.le.s32.totalorder %v1156, 14
        %vm1221 = vcmp.le.s32.totalorder %v1157, 14
        %vm1222 = vcmp.le.s32.totalorder %v1158, 14
        %vm1223 = vcmp.le.s32.totalorder %v1159, 14
        %vm1224 = vcmp.le.s32.totalorder %v1160, 14
        %vm1225 = vcmp.le.s32.totalorder %v1161, 14
        %vm1226 = vcmp.le.s32.totalorder %v1162, 14
        %vm1227 = vcmp.le.s32.totalorder %v1163, 14
        %vm1228 = vcmp.le.s32.totalorder %v1164, 14
        %vm1229 = vcmp.le.s32.totalorder %v1165, 14
        %vm1230 = vcmp.le.s32.totalorder %v1166, 14
        %vm1231 = vcmp.le.s32.totalorder %v1167, 14
        %vm1232 = vcmp.le.s32.totalorder %v1168, 14
        %vm1233 = vcmp.le.s32.totalorder %v1169, 14
        %vm1234 = vcmp.le.s32.totalorder %v1170, 14
        %vm1235 = vcmp.le.s32.totalorder %v1171, 14
        %vm1236 = vcmp.le.s32.totalorder %v1172, 14
        %vm1237 = vcmp.le.s32.totalorder %v1173, 14
        %vm1238 = vcmp.le.s32.totalorder %v1174, 14
        %v1239 = vld [vmem:[#allocation2] sm:$0xf8]
        %v1240 = vld [vmem:[#allocation2 + $0x8] sm:$0xff]
        %v1241 = vld [vmem:[#allocation2 + $0x10] sm:$0xff]
        %v1242 = vld [vmem:[#allocation2 + $0x18] sm:$0xff]
        %v1243 = vld [vmem:[#allocation2 + $0x20] sm:$0xff]
        %v1244 = vld [vmem:[#allocation2 + $0x28] sm:$0xff]
        %v1245 = vld [vmem:[#allocation2 + $0x30] sm:$0xff]
        %v1246 = vld [vmem:[#allocation2 + $0x38] sm:$0xff]
        %v1247 = vld [vmem:[#allocation2 + $0x40] sm:$0xff]
        %v1248 = vld [vmem:[#allocation2 + $0x48] sm:$0xff]
        %v1249 = vld [vmem:[#allocation2 + $0x50] sm:$0xff]
        %v1250 = vld [vmem:[#allocation2 + $0x58] sm:$0xff]
        %v1251 = vld [vmem:[#allocation2 + $0x60] sm:$0xff]
        %v1252 = vld [vmem:[#allocation2 + $0x68] sm:$0xff]
        %v1253 = vld [vmem:[#allocation2 + $0x70] sm:$0xff]
        %v1254 = vld [vmem:[#allocation2 + $0x78] sm:$0xff]
        %v1255 = vld [vmem:[#allocation2 + $0x80] sm:$0xf]
        %v1256 = vsel %vm1175, 1, 0
        %v1257 = vsel %vm1176, 1, 0
        %v1258 = vsel %vm1177, 1, 0
        %v1259 = vsel %vm1178, 1, 0
        %v1260 = vsel %vm1179, 1, 0
        %v1261 = vsel %vm1180, 1, 0
        %v1262 = vsel %vm1181, 1, 0
        %v1263 = vsel %vm1182, 1, 0
        %v1264 = vsel %vm1183, 1, 0
        %v1265 = vsel %vm1184, 1, 0
        %v1266 = vsel %vm1185, 1, 0
        %v1267 = vsel %vm1186, 1, 0
        %v1268 = vsel %vm1187, 1, 0
        %v1269 = vsel %vm1188, 1, 0
        %v1270 = vsel %vm1189, 1, 0
        %v1271 = vsel %vm1190, 1, 0
        %v1272 = vsel %vm1191, 1, 0
        %v1273 = vsel %vm1192, 1, 0
        %v1274 = vsel %vm1193, 1, 0
        %v1275 = vsel %vm1194, 1, 0
        %v1276 = vsel %vm1195, 1, 0
        %v1277 = vsel %vm1196, 1, 0
        %v1278 = vsel %vm1197, 1, 0
        %v1279 = vsel %vm1198, 1, 0
        %v1280 = vsel %vm1199, 1, 0
        %v1281 = vsel %vm1200, 1, 0
        %v1282 = vsel %vm1201, 1, 0
        %v1283 = vsel %vm1202, 1, 0
        %v1284 = vsel %vm1203, 1, 0
        %v1285 = vsel %vm1204, 1, 0
        %v1286 = vsel %vm1205, 1, 0
        %v1287 = vsel %vm1206, 1, 0
        %vm1288 = vcmp.eq.s32.totalorder %v1256, 1
        %vm1289 = vcmp.eq.s32.totalorder %v1257, 1
        %vm1290 = vcmp.eq.s32.totalorder %v1258, 1
        %vm1291 = vcmp.eq.s32.totalorder %v1259, 1
        %vm1292 = vcmp.eq.s32.totalorder %v1260, 1
        %vm1293 = vcmp.eq.s32.totalorder %v1261, 1
        %vm1294 = vcmp.eq.s32.totalorder %v1262, 1
        %vm1295 = vcmp.eq.s32.totalorder %v1263, 1
        %vm1296 = vcmp.eq.s32.totalorder %v1264, 1
        %vm1297 = vcmp.eq.s32.totalorder %v1265, 1
        %vm1298 = vcmp.eq.s32.totalorder %v1266, 1
        %vm1299 = vcmp.eq.s32.totalorder %v1267, 1
        %vm1300 = vcmp.eq.s32.totalorder %v1268, 1
        %vm1301 = vcmp.eq.s32.totalorder %v1269, 1
        %vm1302 = vcmp.eq.s32.totalorder %v1270, 1
        %vm1303 = vcmp.eq.s32.totalorder %v1271, 1
        %vm1304 = vcmp.eq.s32.totalorder %v1272, 1
        %vm1305 = vcmp.eq.s32.totalorder %v1273, 1
        %vm1306 = vcmp.eq.s32.totalorder %v1274, 1
        %vm1307 = vcmp.eq.s32.totalorder %v1275, 1
        %vm1308 = vcmp.eq.s32.totalorder %v1276, 1
        %vm1309 = vcmp.eq.s32.totalorder %v1277, 1
        %vm1310 = vcmp.eq.s32.totalorder %v1278, 1
        %vm1311 = vcmp.eq.s32.totalorder %v1279, 1
        %vm1312 = vcmp.eq.s32.totalorder %v1280, 1
        %vm1313 = vcmp.eq.s32.totalorder %v1281, 1
        %vm1314 = vcmp.eq.s32.totalorder %v1282, 1
        %vm1315 = vcmp.eq.s32.totalorder %v1283, 1
        %vm1316 = vcmp.eq.s32.totalorder %v1284, 1
        %vm1317 = vcmp.eq.s32.totalorder %v1285, 1
        %vm1318 = vcmp.eq.s32.totalorder %v1286, 1
        %vm1319 = vcmp.eq.s32.totalorder %v1287, 1
        %vm1320 = vmpackc.low %vm1288, %vm1288
        %vm1321 = vmpackc.low %vm1289, %vm1289
        %vm1322 = vmpackc.low %vm1290, %vm1290
        %vm1323 = vmpackc.low %vm1291, %vm1291
        %vm1324 = vmpackc.low %vm1292, %vm1292
        %vm1325 = vmpackc.low %vm1293, %vm1293
        %vm1326 = vmpackc.low %vm1294, %vm1294
        %vm1327 = vmpackc.low %vm1295, %vm1295
        %vm1328 = vmpackc.low %vm1296, %vm1296
        %vm1329 = vmpackc.low %vm1297, %vm1297
        %vm1330 = vmpackc.low %vm1298, %vm1298
        %vm1331 = vmpackc.low %vm1299, %vm1299
        %vm1332 = vmpackc.low %vm1300, %vm1300
        %vm1333 = vmpackc.low %vm1301, %vm1301
        %vm1334 = vmpackc.low %vm1302, %vm1302
        %vm1335 = vmpackc.low %vm1303, %vm1303
        %vm1336 = vmpackc.low %vm1304, %vm1304
        %vm1337 = vmpackc.low %vm1305, %vm1305
        %vm1338 = vmpackc.low %vm1306, %vm1306
        %vm1339 = vmpackc.low %vm1307, %vm1307
        %vm1340 = vmpackc.low %vm1308, %vm1308
        %vm1341 = vmpackc.low %vm1309, %vm1309
        %vm1342 = vmpackc.low %vm1310, %vm1310
        %vm1343 = vmpackc.low %vm1311, %vm1311
        %vm1344 = vmpackc.low %vm1312, %vm1312
        %vm1345 = vmpackc.low %vm1313, %vm1313
        %vm1346 = vmpackc.low %vm1314, %vm1314
        %vm1347 = vmpackc.low %vm1315, %vm1315
        %vm1348 = vmpackc.low %vm1316, %vm1316
        %vm1349 = vmpackc.low %vm1317, %vm1317
        %vm1350 = vmpackc.low %vm1318, %vm1318
        %vm1351 = vmpackc.low %vm1319, %vm1319
        %v1352 = vsel %vm1320, 65537, 0
        %v1353 = vsel %vm1321, 65537, 0
        %v1354 = vsel %vm1322, 65537, 0
        %v1355 = vsel %vm1323, 65537, 0
        %v1356 = vsel %vm1324, 65537, 0
        %v1357 = vsel %vm1325, 65537, 0
        %v1358 = vsel %vm1326, 65537, 0
        %v1359 = vsel %vm1327, 65537, 0
        %v1360 = vsel %vm1328, 65537, 0
        %v1361 = vsel %vm1329, 65537, 0
        %v1362 = vsel %vm1330, 65537, 0
        %v1363 = vsel %vm1331, 65537, 0
        %v1364 = vsel %vm1332, 65537, 0
        %v1365 = vsel %vm1333, 65537, 0
        %v1366 = vsel %vm1334, 65537, 0
        %v1367 = vsel %vm1335, 65537, 0
        %v1368 = vsel %vm1336, 65537, 0
        %v1369 = vsel %vm1337, 65537, 0
        %v1370 = vsel %vm1338, 65537, 0
        %v1371 = vsel %vm1339, 65537, 0
        %v1372 = vsel %vm1340, 65537, 0
        %v1373 = vsel %vm1341, 65537, 0
        %v1374 = vsel %vm1342, 65537, 0
        %v1375 = vsel %vm1343, 65537, 0
        %v1376 = vsel %vm1344, 65537, 0
        %v1377 = vsel %vm1345, 65537, 0
        %v1378 = vsel %vm1346, 65537, 0
        %v1379 = vsel %vm1347, 65537, 0
        %v1380 = vsel %vm1348, 65537, 0
        %v1381 = vsel %vm1349, 65537, 0
        %v1382 = vsel %vm1350, 65537, 0
        %v1383 = vsel %vm1351, 65537, 0
        %v1384 = vunpack.c.l.b16 %v1352
        %v1385 = vunpack.c.l.b16 %v1353
        %v1386 = vunpack.c.l.b16 %v1354
        %v1387 = vunpack.c.l.b16 %v1355
        %v1388 = vunpack.c.l.b16 %v1356
        %v1389 = vunpack.c.l.b16 %v1357
        %v1390 = vunpack.c.l.b16 %v1358
        %v1391 = vunpack.c.l.b16 %v1359
        %v1392 = vunpack.c.l.b16 %v1360
        %v1393 = vunpack.c.l.b16 %v1361
        %v1394 = vunpack.c.l.b16 %v1362
        %v1395 = vunpack.c.l.b16 %v1363
        %v1396 = vunpack.c.l.b16 %v1364
        %v1397 = vunpack.c.l.b16 %v1365
        %v1398 = vunpack.c.l.b16 %v1366
        %v1399 = vunpack.c.l.b16 %v1367
        %v1400 = vunpack.c.l.b16 %v1368
        %v1401 = vunpack.c.l.b16 %v1369
        %v1402 = vunpack.c.l.b16 %v1370
        %v1403 = vunpack.c.l.b16 %v1371
        %v1404 = vunpack.c.l.b16 %v1372
        %v1405 = vunpack.c.l.b16 %v1373
        %v1406 = vunpack.c.l.b16 %v1374
        %v1407 = vunpack.c.l.b16 %v1375
        %v1408 = vunpack.c.l.b16 %v1376
        %v1409 = vunpack.c.l.b16 %v1377
        %v1410 = vunpack.c.l.b16 %v1378
        %v1411 = vunpack.c.l.b16 %v1379
        %v1412 = vunpack.c.l.b16 %v1380
        %v1413 = vunpack.c.l.b16 %v1381
        %v1414 = vunpack.c.l.b16 %v1382
        %v1415 = vunpack.c.l.b16 %v1383
        %v1416 = vpack.c.b16 %v1385, %v1384
        %v1417 = vpack.c.b16 %v1387, %v1386
        %v1418 = vpack.c.b16 %v1389, %v1388
        %v1419 = vpack.c.b16 %v1391, %v1390
        %v1420 = vpack.c.b16 %v1393, %v1392
        %v1421 = vpack.c.b16 %v1395, %v1394
        %v1422 = vpack.c.b16 %v1397, %v1396
        %v1423 = vpack.c.b16 %v1399, %v1398
        %v1424 = vpack.c.b16 %v1401, %v1400
        %v1425 = vpack.c.b16 %v1403, %v1402
        %v1426 = vpack.c.b16 %v1405, %v1404
        %v1427 = vpack.c.b16 %v1407, %v1406
        %v1428 = vpack.c.b16 %v1409, %v1408
        %v1429 = vpack.c.b16 %v1411, %v1410
        %v1430 = vpack.c.b16 %v1413, %v1412
        %v1431 = vpack.c.b16 %v1415, %v1414
        %vm1432 = vsmask.f32 3328
        %v1434 = vshrl.u32 %v1416, 16
        %v1436 = vrot.slane %v1434, 4
        %v1437 = vshll.u32 %v1416, 16
        %v1439 = vrot.slane %v1437, 5
        %v1440 = vor.u32 %v1436, %v1439
        %v1442 = vshrl.u32 %v1417, 16
        %v1444 = vrot.slane %v1442, 4
        %v1445 = vshll.u32 %v1417, 16
        %v1447 = vrot.slane %v1445, 5
        %v1448 = vor.u32 %v1444, %v1447
        %v1449 = vsel %vm1432, %v1440, %v1448
        %v1451 = vshrl.u32 %v1418, 16
        %v1453 = vrot.slane %v1451, 4
        %v1454 = vshll.u32 %v1418, 16
        %v1456 = vrot.slane %v1454, 5
        %v1457 = vor.u32 %v1453, %v1456
        %v1458 = vsel %vm1432, %v1448, %v1457
        %v1460 = vshrl.u32 %v1419, 16
        %v1462 = vrot.slane %v1460, 4
        %v1463 = vshll.u32 %v1419, 16
        %v1465 = vrot.slane %v1463, 5
        %v1466 = vor.u32 %v1462, %v1465
        %v1467 = vsel %vm1432, %v1457, %v1466
        %v1469 = vshrl.u32 %v1420, 16
        %v1471 = vrot.slane %v1469, 4
        %v1472 = vshll.u32 %v1420, 16
        %v1474 = vrot.slane %v1472, 5
        %v1475 = vor.u32 %v1471, %v1474
        %v1476 = vsel %vm1432, %v1466, %v1475
        %v1478 = vshrl.u32 %v1421, 16
        %v1480 = vrot.slane %v1478, 4
        %v1481 = vshll.u32 %v1421, 16
        %v1483 = vrot.slane %v1481, 5
        %v1484 = vor.u32 %v1480, %v1483
        %v1485 = vsel %vm1432, %v1475, %v1484
        %v1487 = vshrl.u32 %v1422, 16
        %v1489 = vrot.slane %v1487, 4
        %v1490 = vshll.u32 %v1422, 16
        %v1492 = vrot.slane %v1490, 5
        %v1493 = vor.u32 %v1489, %v1492
        %v1494 = vsel %vm1432, %v1484, %v1493
        %v1496 = vshrl.u32 %v1423, 16
        %v1498 = vrot.slane %v1496, 4
        %v1499 = vshll.u32 %v1423, 16
        %v1501 = vrot.slane %v1499, 5
        %v1502 = vor.u32 %v1498, %v1501
        %v1503 = vsel %vm1432, %v1493, %v1502
        %v1505 = vshrl.u32 %v1424, 16
        %v1507 = vrot.slane %v1505, 4
        %v1508 = vshll.u32 %v1424, 16
        %v1510 = vrot.slane %v1508, 5
        %v1511 = vor.u32 %v1507, %v1510
        %v1512 = vsel %vm1432, %v1502, %v1511
        %v1514 = vshrl.u32 %v1425, 16
        %v1516 = vrot.slane %v1514, 4
        %v1517 = vshll.u32 %v1425, 16
        %v1519 = vrot.slane %v1517, 5
        %v1520 = vor.u32 %v1516, %v1519
        %v1521 = vsel %vm1432, %v1511, %v1520
        %v1523 = vshrl.u32 %v1426, 16
        %v1525 = vrot.slane %v1523, 4
        %v1526 = vshll.u32 %v1426, 16
        %v1528 = vrot.slane %v1526, 5
        %v1529 = vor.u32 %v1525, %v1528
        %v1530 = vsel %vm1432, %v1520, %v1529
        %v1532 = vshrl.u32 %v1427, 16
        %v1534 = vrot.slane %v1532, 4
        %v1535 = vshll.u32 %v1427, 16
        %v1537 = vrot.slane %v1535, 5
        %v1538 = vor.u32 %v1534, %v1537
        %v1539 = vsel %vm1432, %v1529, %v1538
        %v1541 = vshrl.u32 %v1428, 16
        %v1543 = vrot.slane %v1541, 4
        %v1544 = vshll.u32 %v1428, 16
        %v1546 = vrot.slane %v1544, 5
        %v1547 = vor.u32 %v1543, %v1546
        %v1548 = vsel %vm1432, %v1538, %v1547
        %v1550 = vshrl.u32 %v1429, 16
        %v1552 = vrot.slane %v1550, 4
        %v1553 = vshll.u32 %v1429, 16
        %v1555 = vrot.slane %v1553, 5
        %v1556 = vor.u32 %v1552, %v1555
        %v1557 = vsel %vm1432, %v1547, %v1556
        %v1559 = vshrl.u32 %v1430, 16
        %v1561 = vrot.slane %v1559, 4
        %v1562 = vshll.u32 %v1430, 16
        %v1564 = vrot.slane %v1562, 5
        %v1565 = vor.u32 %v1561, %v1564
        %v1566 = vsel %vm1432, %v1556, %v1565
        %v1568 = vshrl.u32 %v1431, 16
        %v1570 = vrot.slane %v1568, 4
        %v1571 = vshll.u32 %v1431, 16
        %v1573 = vrot.slane %v1571, 5
        %v1574 = vor.u32 %v1570, %v1573
        %v1575 = vsel %vm1432, %v1565, %v1574
        %vm1576 = vcmp.ne.s16.totalorder %v1440, 0
        %vm1577 = vcmp.ne.s16.totalorder %v1449, 0
        %vm1578 = vcmp.ne.s16.totalorder %v1458, 0
        %vm1579 = vcmp.ne.s16.totalorder %v1467, 0
        %vm1580 = vcmp.ne.s16.totalorder %v1476, 0
        %vm1581 = vcmp.ne.s16.totalorder %v1485, 0
        %vm1582 = vcmp.ne.s16.totalorder %v1494, 0
        %vm1583 = vcmp.ne.s16.totalorder %v1503, 0
        %vm1584 = vcmp.ne.s16.totalorder %v1512, 0
        %vm1585 = vcmp.ne.s16.totalorder %v1521, 0
        %vm1586 = vcmp.ne.s16.totalorder %v1530, 0
        %vm1587 = vcmp.ne.s16.totalorder %v1539, 0
        %vm1588 = vcmp.ne.s16.totalorder %v1548, 0
        %vm1589 = vcmp.ne.s16.totalorder %v1557, 0
        %vm1590 = vcmp.ne.s16.totalorder %v1566, 0
        %vm1591 = vcmp.ne.s16.totalorder %v1575, 0
        %vm1592 = vcmp.ne.s16.totalorder %v1574, 0
        %v1593 = vsel %vm1576, %v1239, 0
        %v1594 = vsel %vm1577, %v1240, 0
        %v1595 = vsel %vm1578, %v1241, 0
        %v1596 = vsel %vm1579, %v1242, 0
        %v1597 = vsel %vm1580, %v1243, 0
        %v1598 = vsel %vm1581, %v1244, 0
        %v1599 = vsel %vm1582, %v1245, 0
        %v1600 = vsel %vm1583, %v1246, 0
        %v1601 = vsel %vm1584, %v1247, 0
        %v1602 = vsel %vm1585, %v1248, 0
        %v1603 = vsel %vm1586, %v1249, 0
        %v1604 = vsel %vm1587, %v1250, 0
        %v1605 = vsel %vm1588, %v1251, 0
        %v1606 = vsel %vm1589, %v1252, 0
        %v1607 = vsel %vm1590, %v1253, 0
        %v1608 = vsel %vm1591, %v1254, 0
        %v1609 = vsel %vm1592, %v1255, 0
        %v1610 = vld [vmem:[#allocation8] sm:$0xf]
        %v1611 = vld [vmem:[#allocation8 + $0x4] sm:$0xf]
        %v1612 = vld [vmem:[#allocation8 + $0x8] sm:$0xf]
        %v1613 = vld [vmem:[#allocation8 + $0xc] sm:$0xf]
        %v1614 = vld [vmem:[#allocation8 + $0x10] sm:$0xf]
        %v1615 = vld [vmem:[#allocation8 + $0x14] sm:$0xf]
        %v1616 = vld [vmem:[#allocation8 + $0x18] sm:$0xf]
        %v1617 = vld [vmem:[#allocation8 + $0x1c] sm:$0xf]
        %v1618 = vld [vmem:[#allocation8 + $0x20] sm:$0xf]
        %v1619 = vld [vmem:[#allocation8 + $0x24] sm:$0xf]
        %v1620 = vld [vmem:[#allocation8 + $0x28] sm:$0xf]
        %v1621 = vld [vmem:[#allocation8 + $0x2c] sm:$0xf]
        %v1622 = vld [vmem:[#allocation8 + $0x30] sm:$0xf]
        %v1623 = vld [vmem:[#allocation8 + $0x34] sm:$0xf]
        %v1624 = vld [vmem:[#allocation8 + $0x38] sm:$0xf]
        %v1625 = vld [vmem:[#allocation8 + $0x3c] sm:$0xf]
        %v1626 = vld [vmem:[#allocation2] sm:$0xf0]
        %s1627 = scalar_lea.vmem [#allocation8], 64
        %v1628 = vld [vmem:[%s1627] sm:$0xf]
        %v1629 = vld [vmem:[%s1627 + $0x4] sm:$0xf]
        %v1630 = vld [vmem:[%s1627 + $0x8] sm:$0xf]
        %v1631 = vld [vmem:[%s1627 + $0xc] sm:$0xf]
        %v1632 = vld [vmem:[%s1627 + $0x10] sm:$0xf]
        %v1633 = vld [vmem:[%s1627 + $0x14] sm:$0xf]
        %v1634 = vld [vmem:[%s1627 + $0x18] sm:$0xf]
        %v1635 = vld [vmem:[%s1627 + $0x1c] sm:$0xf]
        %v1636 = vld [vmem:[%s1627 + $0x20] sm:$0xf]
        %v1637 = vld [vmem:[%s1627 + $0x24] sm:$0xf]
        %v1638 = vld [vmem:[%s1627 + $0x28] sm:$0xf]
        %v1639 = vld [vmem:[%s1627 + $0x2c] sm:$0xf]
        %v1640 = vld [vmem:[%s1627 + $0x30] sm:$0xf]
        %v1641 = vld [vmem:[%s1627 + $0x34] sm:$0xf]
        %v1642 = vld [vmem:[%s1627 + $0x38] sm:$0xf]
        %v1643 = vld [vmem:[%s1627 + $0x3c] sm:$0xf]
        %v1661 = vrot.slane %v1626, 4
        %v1662 = vrot.slane %v1240, 4
        %v1663 = vsel %vm692, %v1661, %v1662
        %v1664 = vrot.slane %v1241, 4
        %v1665 = vsel %vm692, %v1662, %v1664
        %v1666 = vrot.slane %v1242, 4
        %v1667 = vsel %vm692, %v1664, %v1666
        %v1668 = vrot.slane %v1243, 4
        %v1669 = vsel %vm692, %v1666, %v1668
        %v1670 = vrot.slane %v1244, 4
        %v1671 = vsel %vm692, %v1668, %v1670
        %v1672 = vrot.slane %v1245, 4
        %v1673 = vsel %vm692, %v1670, %v1672
        %v1674 = vrot.slane %v1246, 4
        %v1675 = vsel %vm692, %v1672, %v1674
        %v1676 = vrot.slane %v1247, 4
        %v1677 = vsel %vm692, %v1674, %v1676
        %v1678 = vrot.slane %v1248, 4
        %v1679 = vsel %vm692, %v1676, %v1678
        %v1680 = vrot.slane %v1249, 4
        %v1681 = vsel %vm692, %v1678, %v1680
        %v1682 = vrot.slane %v1250, 4
        %v1683 = vsel %vm692, %v1680, %v1682
        %v1684 = vrot.slane %v1251, 4
        %v1685 = vsel %vm692, %v1682, %v1684
        %v1686 = vrot.slane %v1252, 4
        %v1687 = vsel %vm692, %v1684, %v1686
        %v1688 = vrot.slane %v1253, 4
        %v1689 = vsel %vm692, %v1686, %v1688
        %v1690 = vrot.slane %v1254, 4
        %v1691 = vsel %vm692, %v1688, %v1690
        %v1692 = vrot.slane %v1255, 4
        %v1693 = vsel %vm692, %v1690, %v1692
        %v1726 = vunpack.c.l.b16 %v1628
        %v1727 = vunpack.c.l.b16 %v1629
        %v1728 = vunpack.c.l.b16 %v1630
        %v1729 = vunpack.c.l.b16 %v1631
        %v1730 = vunpack.c.l.b16 %v1632
        %v1731 = vunpack.c.l.b16 %v1633
        %v1732 = vunpack.c.l.b16 %v1634
        %v1733 = vunpack.c.l.b16 %v1635
        %v1734 = vunpack.c.l.b16 %v1636
        %v1735 = vunpack.c.l.b16 %v1637
        %v1736 = vunpack.c.l.b16 %v1638
        %v1737 = vunpack.c.l.b16 %v1639
        %v1738 = vunpack.c.l.b16 %v1640
        %v1739 = vunpack.c.l.b16 %v1641
        %v1740 = vunpack.c.l.b16 %v1642
        %v1741 = vunpack.c.l.b16 %v1643
        %v1742 = vpack.c.b16 %v1727, %v1726
        %v1743 = vpack.c.b16 %v1729, %v1728
        %v1744 = vpack.c.b16 %v1731, %v1730
        %v1745 = vpack.c.b16 %v1733, %v1732
        %v1746 = vpack.c.b16 %v1735, %v1734
        %v1747 = vpack.c.b16 %v1737, %v1736
        %v1748 = vpack.c.b16 %v1739, %v1738
        %v1749 = vpack.c.b16 %v1741, %v1740
        %1758 = vmatprep.subr.bf16.mxu0 0
        %1759 = vmatpush1.bf16.msra.mxu0 %v1742
        %1760 = vmatprep.subr.bf16.mxu0 0
        %1761 = vmatpush1.bf16.msra.mxu0 %v1743
        %1762 = vmatprep.subr.bf16.mxu0 0
        %1763 = vmatpush1.bf16.msra.mxu0 %v1744
        %1764 = vmatprep.subr.bf16.mxu0 0
        %1765 = vmatpush1.bf16.msra.mxu0 %v1745
        %1766 = vmatprep.subr.bf16.mxu0 0
        %1767 = vmatpush1.bf16.msra.mxu0 %v1746
        %1768 = vmatprep.subr.bf16.mxu0 0
        %1769 = vmatpush1.bf16.msra.mxu0 %v1747
        %1770 = vmatprep.subr.bf16.mxu0 0
        %1771 = vmatpush1.bf16.msra.mxu0 %v1748
        %1772 = vmatprep.subr.bf16.mxu0 0
        %1773 = vmatpush1.bf16.msra.mxu0 %v1749
        %1774 = vmatprep.subr.bf16.mxu0 0
        %1775 = vmatpush1.bf16.msra.mxu0 0
        %1776 = vmatprep.subr.bf16.mxu0 0
        %1777 = vmatpush1.bf16.msra.mxu0 0
        %1778 = vmatprep.subr.bf16.mxu0 0
        %1779 = vmatpush1.bf16.msra.mxu0 0
        %1780 = vmatprep.subr.bf16.mxu0 0
        %1781 = vmatpush1.bf16.msra.mxu0 0
        %1782 = vmatprep.subr.bf16.mxu0 0
        %1783 = vmatpush1.bf16.msra.mxu0 0
        %1784 = vmatprep.subr.bf16.mxu0 0
        %1785 = vmatpush1.bf16.msra.mxu0 0
        %1786 = vmatprep.subr.bf16.mxu0 0
        %1787 = vmatpush1.bf16.msra.mxu0 0
        %1788 = vmatprep.subr.bf16.mxu0 0
        %1789 = vmatpush1.bf16.msra.mxu0 0
        %1790 = vmatprep.mubr.bf16.mxu0 0
        %1791 = vmatmul.mubr.bf16.gmra.mrb[0].mxu0 %v1663
        %v1792 = vpop.f32.mrb[0].mxu0
        %v1793 = vadd.f32 0.0, %v1792
        %v1794 = vpop.f32.mrb[0].mxu0
        %v1795 = vpop.f32.mrb[0].mxu0
        %v1796 = vadd.f32 0.0, %v1795
        %v1797 = vpop.f32.mrb[0].mxu0
        %1798 = vmatprep.mubr.bf16.mxu0 0
        %1799 = vmatmul.mubr.bf16.gmra.mrb[0].mxu0 %v1665
        %v1800 = vpop.f32.mrb[0].mxu0
        %v1801 = vadd.f32 0.0, %v1800
        %v1802 = vpop.f32.mrb[0].mxu0
        %v1803 = vpop.f32.mrb[0].mxu0
        %v1804 = vadd.f32 0.0, %v1803
        %v1805 = vpop.f32.mrb[0].mxu0
        %1806 = vmatprep.mubr.bf16.mxu0 0
        %1807 = vmatmul.mubr.bf16.gmra.mrb[0].mxu0 %v1667
        %v1808 = vpop.f32.mrb[0].mxu0
        %v1809 = vadd.f32 0.0, %v1808
        %v1810 = vpop.f32.mrb[0].mxu0
        %v1811 = vpop.f32.mrb[0].mxu0
        %v1812 = vadd.f32 0.0, %v1811
        %v1813 = vpop.f32.mrb[0].mxu0
        %1814 = vmatprep.mubr.bf16.mxu0 0
        %1815 = vmatmul.mubr.bf16.gmra.mrb[0].mxu0 %v1669
        %v1816 = vpop.f32.mrb[0].mxu0
        %v1817 = vadd.f32 0.0, %v1816
        %v1818 = vpop.f32.mrb[0].mxu0
        %v1819 = vpop.f32.mrb[0].mxu0
        %v1820 = vadd.f32 0.0, %v1819
        %v1821 = vpop.f32.mrb[0].mxu0
        %1822 = vmatprep.mubr.bf16.mxu0 0
        %1823 = vmatmul.mubr.bf16.gmra.mrb[0].mxu0 %v1671
        %v1824 = vpop.f32.mrb[0].mxu0
        %v1825 = vadd.f32 0.0, %v1824
        %v1826 = vpop.f32.mrb[0].mxu0
        %v1827 = vpop.f32.mrb[0].mxu0
        %v1828 = vadd.f32 0.0, %v1827
        %v1829 = vpop.f32.mrb[0].mxu0
        %1830 = vmatprep.mubr.bf16.mxu0 0
        %1831 = vmatmul.mubr.bf16.gmra.mrb[0].mxu0 %v1673
        %v1832 = vpop.f32.mrb[0].mxu0
        %v1833 = vadd.f32 0.0, %v1832
        %v1834 = vpop.f32.mrb[0].mxu0
        %v1835 = vpop.f32.mrb[0].mxu0
        %v1836 = vadd.f32 0.0, %v1835
        %v1837 = vpop.f32.mrb[0].mxu0
        %1838 = vmatprep.mubr.bf16.mxu0 0
        %1839 = vmatmul.mubr.bf16.gmra.mrb[0].mxu0 %v1675
        %v1840 = vpop.f32.mrb[0].mxu0
        %v1841 = vadd.f32 0.0, %v1840
        %v1842 = vpop.f32.mrb[0].mxu0
        %v1843 = vpop.f32.mrb[0].mxu0
        %v1844 = vadd.f32 0.0, %v1843
        %v1845 = vpop.f32.mrb[0].mxu0
        %1846 = vmatprep.mubr.bf16.mxu0 0
        %1847 = vmatmul.mubr.bf16.gmra.mrb[0].mxu0 %v1677
        %v1848 = vpop.f32.mrb[0].mxu0
        %v1849 = vadd.f32 0.0, %v1848
        %v1850 = vpop.f32.mrb[0].mxu0
        %v1851 = vpop.f32.mrb[0].mxu0
        %v1852 = vadd.f32 0.0, %v1851
        %v1853 = vpop.f32.mrb[0].mxu0
        %1854 = vmatprep.mubr.bf16.mxu0 0
        %1855 = vmatmul.mubr.bf16.gmra.mrb[0].mxu0 %v1679
        %v1856 = vpop.f32.mrb[0].mxu0
        %v1857 = vadd.f32 0.0, %v1856
        %v1858 = vpop.f32.mrb[0].mxu0
        %v1859 = vpop.f32.mrb[0].mxu0
        %v1860 = vadd.f32 0.0, %v1859
        %v1861 = vpop.f32.mrb[0].mxu0
        %1862 = vmatprep.mubr.bf16.mxu0 0
        %1863 = vmatmul.mubr.bf16.gmra.mrb[0].mxu0 %v1681
        %v1864 = vpop.f32.mrb[0].mxu0
        %v1865 = vadd.f32 0.0, %v1864
        %v1866 = vpop.f32.mrb[0].mxu0
        %v1867 = vpop.f32.mrb[0].mxu0
        %v1868 = vadd.f32 0.0, %v1867
        %v1869 = vpop.f32.mrb[0].mxu0
        %1870 = vmatprep.mubr.bf16.mxu0 0
        %1871 = vmatmul.mubr.bf16.gmra.mrb[0].mxu0 %v1683
        %v1872 = vpop.f32.mrb[0].mxu0
        %v1873 = vadd.f32 0.0, %v1872
        %v1874 = vpop.f32.mrb[0].mxu0
        %v1875 = vpop.f32.mrb[0].mxu0
        %v1876 = vadd.f32 0.0, %v1875
        %v1877 = vpop.f32.mrb[0].mxu0
        %1878 = vmatprep.mubr.bf16.mxu0 0
        %1879 = vmatmul.mubr.bf16.gmra.mrb[0].mxu0 %v1685
        %v1880 = vpop.f32.mrb[0].mxu0
        %v1881 = vadd.f32 0.0, %v1880
        %v1882 = vpop.f32.mrb[0].mxu0
        %v1883 = vpop.f32.mrb[0].mxu0
        %v1884 = vadd.f32 0.0, %v1883
        %v1885 = vpop.f32.mrb[0].mxu0
        %1886 = vmatprep.mubr.bf16.mxu0 0
        %1887 = vmatmul.mubr.bf16.gmra.mrb[0].mxu0 %v1687
        %v1888 = vpop.f32.mrb[0].mxu0
        %v1889 = vadd.f32 0.0, %v1888
        %v1890 = vpop.f32.mrb[0].mxu0
        %v1891 = vpop.f32.mrb[0].mxu0
        %v1892 = vadd.f32 0.0, %v1891
        %v1893 = vpop.f32.mrb[0].mxu0
        %1894 = vmatprep.mubr.bf16.mxu0 0
        %1895 = vmatmul.mubr.bf16.gmra.mrb[0].mxu0 %v1689
        %v1896 = vpop.f32.mrb[0].mxu0
        %v1897 = vadd.f32 0.0, %v1896
        %v1898 = vpop.f32.mrb[0].mxu0
        %v1899 = vpop.f32.mrb[0].mxu0
        %v1900 = vadd.f32 0.0, %v1899
        %v1901 = vpop.f32.mrb[0].mxu0
        %1902 = vmatprep.mubr.bf16.mxu0 0
        %1903 = vmatmul.mubr.bf16.gmra.mrb[0].mxu0 %v1691
        %v1904 = vpop.f32.mrb[0].mxu0
        %v1905 = vadd.f32 0.0, %v1904
        %v1906 = vpop.f32.mrb[0].mxu0
        %v1907 = vpop.f32.mrb[0].mxu0
        %v1908 = vadd.f32 0.0, %v1907
        %v1909 = vpop.f32.mrb[0].mxu0
        %1910 = vmatprep.mubr.bf16.mxu0 0
        %1911 = vmatmul.mubr.bf16.gmra.mrb[0].mxu0 %v1693
        %v1912 = vpop.f32.mrb[0].mxu0
        %v1913 = vadd.f32 0.0, %v1912
        %v1914 = vpop.f32.mrb[0].mxu0
        %v1915 = vpop.f32.mrb[0].mxu0
        %v1916 = vadd.f32 0.0, %v1915
        %v1917 = vpop.f32.mrb[0].mxu0
        %1918 = vdwg.mxu0
        %vm1919 = vsmask.f32 4352
        %v1921 = vshrl.u32 %v1593, 16
        %v1923 = vrot.slane %v1921, 3
        %v1924 = vshll.u32 %v1593, 16
        %v1926 = vrot.slane %v1924, 4
        %v1927 = vor.u32 %v1923, %v1926
        %v1929 = vshrl.u32 %v1594, 16
        %v1931 = vrot.slane %v1929, 3
        %v1932 = vshll.u32 %v1594, 16
        %v1934 = vrot.slane %v1932, 4
        %v1935 = vor.u32 %v1931, %v1934
        %v1936 = vsel %vm1919, %v1927, %v1935
        %v1938 = vshrl.u32 %v1595, 16
        %v1940 = vrot.slane %v1938, 3
        %v1941 = vshll.u32 %v1595, 16
        %v1943 = vrot.slane %v1941, 4
        %v1944 = vor.u32 %v1940, %v1943
        %v1945 = vsel %vm1919, %v1935, %v1944
        %v1947 = vshrl.u32 %v1596, 16
        %v1949 = vrot.slane %v1947, 3
        %v1950 = vshll.u32 %v1596, 16
        %v1952 = vrot.slane %v1950, 4
        %v1953 = vor.u32 %v1949, %v1952
        %v1954 = vsel %vm1919, %v1944, %v1953
        %v1956 = vshrl.u32 %v1597, 16
        %v1958 = vrot.slane %v1956, 3
        %v1959 = vshll.u32 %v1597, 16
        %v1961 = vrot.slane %v1959, 4
        %v1962 = vor.u32 %v1958, %v1961
        %v1963 = vsel %vm1919, %v1953, %v1962
        %v1965 = vshrl.u32 %v1598, 16
        %v1967 = vrot.slane %v1965, 3
        %v1968 = vshll.u32 %v1598, 16
        %v1970 = vrot.slane %v1968, 4
        %v1971 = vor.u32 %v1967, %v1970
        %v1972 = vsel %vm1919, %v1962, %v1971
        %v1974 = vshrl.u32 %v1599, 16
        %v1976 = vrot.slane %v1974, 3
        %v1977 = vshll.u32 %v1599, 16
        %v1979 = vrot.slane %v1977, 4
        %v1980 = vor.u32 %v1976, %v1979
        %v1981 = vsel %vm1919, %v1971, %v1980
        %v1983 = vshrl.u32 %v1600, 16
        %v1985 = vrot.slane %v1983, 3
        %v1986 = vshll.u32 %v1600, 16
        %v1988 = vrot.slane %v1986, 4
        %v1989 = vor.u32 %v1985, %v1988
        %v1990 = vsel %vm1919, %v1980, %v1989
        %v1992 = vshrl.u32 %v1601, 16
        %v1994 = vrot.slane %v1992, 3
        %v1995 = vshll.u32 %v1601, 16
        %v1997 = vrot.slane %v1995, 4
        %v1998 = vor.u32 %v1994, %v1997
        %v1999 = vsel %vm1919, %v1989, %v1998
        %v2001 = vshrl.u32 %v1602, 16
        %v2003 = vrot.slane %v2001, 3
        %v2004 = vshll.u32 %v1602, 16
        %v2006 = vrot.slane %v2004, 4
        %v2007 = vor.u32 %v2003, %v2006
        %v2008 = vsel %vm1919, %v1998, %v2007
        %v2010 = vshrl.u32 %v1603, 16
        %v2012 = vrot.slane %v2010, 3
        %v2013 = vshll.u32 %v1603, 16
        %v2015 = vrot.slane %v2013, 4
        %v2016 = vor.u32 %v2012, %v2015
        %v2017 = vsel %vm1919, %v2007, %v2016
        %v2019 = vshrl.u32 %v1604, 16
        %v2021 = vrot.slane %v2019, 3
        %v2022 = vshll.u32 %v1604, 16
        %v2024 = vrot.slane %v2022, 4
        %v2025 = vor.u32 %v2021, %v2024
        %v2026 = vsel %vm1919, %v2016, %v2025
        %v2028 = vshrl.u32 %v1605, 16
        %v2030 = vrot.slane %v2028, 3
        %v2031 = vshll.u32 %v1605, 16
        %v2033 = vrot.slane %v2031, 4
        %v2034 = vor.u32 %v2030, %v2033
        %v2035 = vsel %vm1919, %v2025, %v2034
        %v2037 = vshrl.u32 %v1606, 16
        %v2039 = vrot.slane %v2037, 3
        %v2040 = vshll.u32 %v1606, 16
        %v2042 = vrot.slane %v2040, 4
        %v2043 = vor.u32 %v2039, %v2042
        %v2044 = vsel %vm1919, %v2034, %v2043
        %v2046 = vshrl.u32 %v1607, 16
        %v2048 = vrot.slane %v2046, 3
        %v2049 = vshll.u32 %v1607, 16
        %v2051 = vrot.slane %v2049, 4
        %v2052 = vor.u32 %v2048, %v2051
        %v2053 = vsel %vm1919, %v2043, %v2052
        %v2055 = vshrl.u32 %v1608, 16
        %v2057 = vrot.slane %v2055, 3
        %v2058 = vshll.u32 %v1608, 16
        %v2060 = vrot.slane %v2058, 4
        %v2061 = vor.u32 %v2057, %v2060
        %v2062 = vsel %vm1919, %v2052, %v2061
        %v2064 = vshrl.u32 %v1609, 16
        %v2066 = vrot.slane %v2064, 3
        %v2067 = vshll.u32 %v1609, 16
        %v2069 = vrot.slane %v2067, 4
        %v2070 = vor.u32 %v2066, %v2069
        %v2071 = vsel %vm1919, %v2061, %v2070
        %v2104 = vunpack.c.l.b16 %v1610
        %v2105 = vunpack.c.l.b16 %v1611
        %v2106 = vunpack.c.l.b16 %v1612
        %v2107 = vunpack.c.l.b16 %v1613
        %v2108 = vunpack.c.l.b16 %v1614
        %v2109 = vunpack.c.l.b16 %v1615
        %v2110 = vunpack.c.l.b16 %v1616
        %v2111 = vunpack.c.l.b16 %v1617
        %v2112 = vunpack.c.l.b16 %v1618
        %v2113 = vunpack.c.l.b16 %v1619
        %v2114 = vunpack.c.l.b16 %v1620
        %v2115 = vunpack.c.l.b16 %v1621
        %v2116 = vunpack.c.l.b16 %v1622
        %v2117 = vunpack.c.l.b16 %v1623
        %v2118 = vunpack.c.l.b16 %v1624
        %v2119 = vunpack.c.l.b16 %v1625
        %v2120 = vpack.c.b16 %v2105, %v2104
        %v2121 = vpack.c.b16 %v2107, %v2106
        %v2122 = vpack.c.b16 %v2109, %v2108
        %v2123 = vpack.c.b16 %v2111, %v2110
        %v2124 = vpack.c.b16 %v2113, %v2112
        %v2125 = vpack.c.b16 %v2115, %v2114
        %v2126 = vpack.c.b16 %v2117, %v2116
        %v2127 = vpack.c.b16 %v2119, %v2118
        %2136 = vmatprep.subr.bf16.mxu0 0
        %2137 = vmatpush1.bf16.msra.mxu0 %v2120
        %2138 = vmatprep.subr.bf16.mxu0 0
        %2139 = vmatpush1.bf16.msra.mxu0 %v2121
        %2140 = vmatprep.subr.bf16.mxu0 0
        %2141 = vmatpush1.bf16.msra.mxu0 %v2122
        %2142 = vmatprep.subr.bf16.mxu0 0
        %2143 = vmatpush1.bf16.msra.mxu0 %v2123
        %2144 = vmatprep.subr.bf16.mxu0 0
        %2145 = vmatpush1.bf16.msra.mxu0 %v2124
        %2146 = vmatprep.subr.bf16.mxu0 0
        %2147 = vmatpush1.bf16.msra.mxu0 %v2125
        %2148 = vmatprep.subr.bf16.mxu0 0
        %2149 = vmatpush1.bf16.msra.mxu0 %v2126
        %2150 = vmatprep.subr.bf16.mxu0 0
        %2151 = vmatpush1.bf16.msra.mxu0 %v2127
        %2152 = vmatprep.subr.bf16.mxu0 0
        %2153 = vmatpush1.bf16.msra.mxu0 0
        %2154 = vmatprep.subr.bf16.mxu0 0
        %2155 = vmatpush1.bf16.msra.mxu0 0
        %2156 = vmatprep.subr.bf16.mxu0 0
        %2157 = vmatpush1.bf16.msra.mxu0 0
        %2158 = vmatprep.subr.bf16.mxu0 0
        %2159 = vmatpush1.bf16.msra.mxu0 0
        %2160 = vmatprep.subr.bf16.mxu0 0
        %2161 = vmatpush1.bf16.msra.mxu0 0
        %2162 = vmatprep.subr.bf16.mxu0 0
        %2163 = vmatpush1.bf16.msra.mxu0 0
        %2164 = vmatprep.subr.bf16.mxu0 0
        %2165 = vmatpush1.bf16.msra.mxu0 0
        %2166 = vmatprep.subr.bf16.mxu0 0
        %2167 = vmatpush1.bf16.msra.mxu0 0
        %2168 = vmatprep.mubr.bf16.mxu0 0
        %2169 = vmatmul.mubr.bf16.gmra.mrb[0].mxu0 %v1936
        %v2170 = vpop.f32.mrb[0].mxu0
        %v2171 = vadd.f32 %v1793, %v2170
        %v2172 = vpop.f32.mrb[0].mxu0
        %v2173 = vpop.f32.mrb[0].mxu0
        %v2174 = vadd.f32 %v1796, %v2173
        %v2175 = vpop.f32.mrb[0].mxu0
        %2176 = vmatprep.mubr.bf16.mxu0 0
        %2177 = vmatmul.mubr.bf16.gmra.mrb[0].mxu0 %v1945
        %v2178 = vpop.f32.mrb[0].mxu0
        %v2179 = vadd.f32 %v1801, %v2178
        %v2180 = vpop.f32.mrb[0].mxu0
        %v2181 = vpop.f32.mrb[0].mxu0
        %v2182 = vadd.f32 %v1804, %v2181
        %v2183 = vpop.f32.mrb[0].mxu0
        %2184 = vmatprep.mubr.bf16.mxu0 0
        %2185 = vmatmul.mubr.bf16.gmra.mrb[0].mxu0 %v1954
        %v2186 = vpop.f32.mrb[0].mxu0
        %v2187 = vadd.f32 %v1809, %v2186
        %v2188 = vpop.f32.mrb[0].mxu0
        %v2189 = vpop.f32.mrb[0].mxu0
        %v2190 = vadd.f32 %v1812, %v2189
        %v2191 = vpop.f32.mrb[0].mxu0
        %2192 = vmatprep.mubr.bf16.mxu0 0
        %2193 = vmatmul.mubr.bf16.gmra.mrb[0].mxu0 %v1963
        %v2194 = vpop.f32.mrb[0].mxu0
        %v2195 = vadd.f32 %v1817, %v2194
        %v2196 = vpop.f32.mrb[0].mxu0
        %v2197 = vpop.f32.mrb[0].mxu0
        %v2198 = vadd.f32 %v1820, %v2197
        %v2199 = vpop.f32.mrb[0].mxu0
        %2200 = vmatprep.mubr.bf16.mxu0 0
        %2201 = vmatmul.mubr.bf16.gmra.mrb[0].mxu0 %v1972
        %v2202 = vpop.f32.mrb[0].mxu0
        %v2203 = vadd.f32 %v1825, %v2202
        %v2204 = vpop.f32.mrb[0].mxu0
        %v2205 = vpop.f32.mrb[0].mxu0
        %v2206 = vadd.f32 %v1828, %v2205
        %v2207 = vpop.f32.mrb[0].mxu0
        %2208 = vmatprep.mubr.bf16.mxu0 0
        %2209 = vmatmul.mubr.bf16.gmra.mrb[0].mxu0 %v1981
        %v2210 = vpop.f32.mrb[0].mxu0
        %v2211 = vadd.f32 %v1833, %v2210
        %v2212 = vpop.f32.mrb[0].mxu0
        %v2213 = vpop.f32.mrb[0].mxu0
        %v2214 = vadd.f32 %v1836, %v2213
        %v2215 = vpop.f32.mrb[0].mxu0
        %2216 = vmatprep.mubr.bf16.mxu0 0
        %2217 = vmatmul.mubr.bf16.gmra.mrb[0].mxu0 %v1990
        %v2218 = vpop.f32.mrb[0].mxu0
        %v2219 = vadd.f32 %v1841, %v2218
        %v2220 = vpop.f32.mrb[0].mxu0
        %v2221 = vpop.f32.mrb[0].mxu0
        %v2222 = vadd.f32 %v1844, %v2221
        %v2223 = vpop.f32.mrb[0].mxu0
        %2224 = vmatprep.mubr.bf16.mxu0 0
        %2225 = vmatmul.mubr.bf16.gmra.mrb[0].mxu0 %v1999
        %v2226 = vpop.f32.mrb[0].mxu0
        %v2227 = vadd.f32 %v1849, %v2226
        %v2228 = vpop.f32.mrb[0].mxu0
        %v2229 = vpop.f32.mrb[0].mxu0
        %v2230 = vadd.f32 %v1852, %v2229
        %v2231 = vpop.f32.mrb[0].mxu0
        %2232 = vmatprep.mubr.bf16.mxu0 0
        %2233 = vmatmul.mubr.bf16.gmra.mrb[0].mxu0 %v2008
        %v2234 = vpop.f32.mrb[0].mxu0
        %v2235 = vadd.f32 %v1857, %v2234
        %v2236 = vpop.f32.mrb[0].mxu0
        %v2237 = vpop.f32.mrb[0].mxu0
        %v2238 = vadd.f32 %v1860, %v2237
        %v2239 = vpop.f32.mrb[0].mxu0
        %2240 = vmatprep.mubr.bf16.mxu0 0
        %2241 = vmatmul.mubr.bf16.gmra.mrb[0].mxu0 %v2017
        %v2242 = vpop.f32.mrb[0].mxu0
        %v2243 = vadd.f32 %v1865, %v2242
        %v2244 = vpop.f32.mrb[0].mxu0
        %v2245 = vpop.f32.mrb[0].mxu0
        %v2246 = vadd.f32 %v1868, %v2245
        %v2247 = vpop.f32.mrb[0].mxu0
        %2248 = vmatprep.mubr.bf16.mxu0 0
        %2249 = vmatmul.mubr.bf16.gmra.mrb[0].mxu0 %v2026
        %v2250 = vpop.f32.mrb[0].mxu0
        %v2251 = vadd.f32 %v1873, %v2250
        %v2252 = vpop.f32.mrb[0].mxu0
        %v2253 = vpop.f32.mrb[0].mxu0
        %v2254 = vadd.f32 %v1876, %v2253
        %v2255 = vpop.f32.mrb[0].mxu0
        %2256 = vmatprep.mubr.bf16.mxu0 0
        %2257 = vmatmul.mubr.bf16.gmra.mrb[0].mxu0 %v2035
        %v2258 = vpop.f32.mrb[0].mxu0
        %v2259 = vadd.f32 %v1881, %v2258
        %v2260 = vpop.f32.mrb[0].mxu0
        %v2261 = vpop.f32.mrb[0].mxu0
        %v2262 = vadd.f32 %v1884, %v2261
        %v2263 = vpop.f32.mrb[0].mxu0
        %2264 = vmatprep.mubr.bf16.mxu0 0
        %2265 = vmatmul.mubr.bf16.gmra.mrb[0].mxu0 %v2044
        %v2266 = vpop.f32.mrb[0].mxu0
        %v2267 = vadd.f32 %v1889, %v2266
        %v2268 = vpop.f32.mrb[0].mxu0
        %v2269 = vpop.f32.mrb[0].mxu0
        %v2270 = vadd.f32 %v1892, %v2269
        %v2271 = vpop.f32.mrb[0].mxu0
        %2272 = vmatprep.mubr.bf16.mxu0 0
        %2273 = vmatmul.mubr.bf16.gmra.mrb[0].mxu0 %v2053
        %v2274 = vpop.f32.mrb[0].mxu0
        %v2275 = vadd.f32 %v1897, %v2274
        %v2276 = vpop.f32.mrb[0].mxu0
        %v2277 = vpop.f32.mrb[0].mxu0
        %v2278 = vadd.f32 %v1900, %v2277
        %v2279 = vpop.f32.mrb[0].mxu0
        %2280 = vmatprep.mubr.bf16.mxu0 0
        %2281 = vmatmul.mubr.bf16.gmra.mrb[0].mxu0 %v2062
        %v2282 = vpop.f32.mrb[0].mxu0
        %v2283 = vadd.f32 %v1905, %v2282
        %v2284 = vpop.f32.mrb[0].mxu0
        %v2285 = vpop.f32.mrb[0].mxu0
        %v2286 = vadd.f32 %v1908, %v2285
        %v2287 = vpop.f32.mrb[0].mxu0
        %2288 = vmatprep.mubr.bf16.mxu0 0
        %2289 = vmatmul.mubr.bf16.gmra.mrb[0].mxu0 %v2071
        %v2290 = vpop.f32.mrb[0].mxu0
        %v2291 = vadd.f32 %v1913, %v2290
        %v2292 = vpop.f32.mrb[0].mxu0
        %v2293 = vpop.f32.mrb[0].mxu0
        %v2294 = vadd.f32 %v1916, %v2293
        %v2295 = vpop.f32.mrb[0].mxu0
        %2296 = vdwg.mxu0
        %v2297 = vld [vmem:[#allocation2 + $0x80] sm:$0x1f]
        %v2298 = vsel %vm1207, 1, 0
        %v2299 = vsel %vm1208, 1, 0
        %v2300 = vsel %vm1209, 1, 0
        %v2301 = vsel %vm1210, 1, 0
        %v2302 = vsel %vm1211, 1, 0
        %v2303 = vsel %vm1212, 1, 0
        %v2304 = vsel %vm1213, 1, 0
        %v2305 = vsel %vm1214, 1, 0
        %v2306 = vsel %vm1215, 1, 0
        %v2307 = vsel %vm1216, 1, 0
        %v2308 = vsel %vm1217, 1, 0
        %v2309 = vsel %vm1218, 1, 0
        %v2310 = vsel %vm1219, 1, 0
        %v2311 = vsel %vm1220, 1, 0
        %v2312 = vsel %vm1221, 1, 0
        %v2313 = vsel %vm1222, 1, 0
        %v2314 = vsel %vm1223, 1, 0
        %v2315 = vsel %vm1224, 1, 0
        %v2316 = vsel %vm1225, 1, 0
        %v2317 = vsel %vm1226, 1, 0
        %v2318 = vsel %vm1227, 1, 0
        %v2319 = vsel %vm1228, 1, 0
        %v2320 = vsel %vm1229, 1, 0
        %v2321 = vsel %vm1230, 1, 0
        %v2322 = vsel %vm1231, 1, 0
        %v2323 = vsel %vm1232, 1, 0
        %v2324 = vsel %vm1233, 1, 0
        %v2325 = vsel %vm1234, 1, 0
        %v2326 = vsel %vm1235, 1, 0
        %v2327 = vsel %vm1236, 1, 0
        %v2328 = vsel %vm1237, 1, 0
        %v2329 = vsel %vm1238, 1, 0
        %vm2330 = vcmp.eq.s32.totalorder %v2298, 1
        %vm2331 = vcmp.eq.s32.totalorder %v2299, 1
        %vm2332 = vcmp.eq.s32.totalorder %v2300, 1
        %vm2333 = vcmp.eq.s32.totalorder %v2301, 1
        %vm2334 = vcmp.eq.s32.totalorder %v2302, 1
        %vm2335 = vcmp.eq.s32.totalorder %v2303, 1
        %vm2336 = vcmp.eq.s32.totalorder %v2304, 1
        %vm2337 = vcmp.eq.s32.totalorder %v2305, 1
        %vm2338 = vcmp.eq.s32.totalorder %v2306, 1
        %vm2339 = vcmp.eq.s32.totalorder %v2307, 1
        %vm2340 = vcmp.eq.s32.totalorder %v2308, 1
        %vm2341 = vcmp.eq.s32.totalorder %v2309, 1
        %vm2342 = vcmp.eq.s32.totalorder %v2310, 1
        %vm2343 = vcmp.eq.s32.totalorder %v2311, 1
        %vm2344 = vcmp.eq.s32.totalorder %v2312, 1
        %vm2345 = vcmp.eq.s32.totalorder %v2313, 1
        %vm2346 = vcmp.eq.s32.totalorder %v2314, 1
        %vm2347 = vcmp.eq.s32.totalorder %v2315, 1
        %vm2348 = vcmp.eq.s32.totalorder %v2316, 1
        %vm2349 = vcmp.eq.s32.totalorder %v2317, 1
        %vm2350 = vcmp.eq.s32.totalorder %v2318, 1
        %vm2351 = vcmp.eq.s32.totalorder %v2319, 1
        %vm2352 = vcmp.eq.s32.totalorder %v2320, 1
        %vm2353 = vcmp.eq.s32.totalorder %v2321, 1
        %vm2354 = vcmp.eq.s32.totalorder %v2322, 1
        %vm2355 = vcmp.eq.s32.totalorder %v2323, 1
        %vm2356 = vcmp.eq.s32.totalorder %v2324, 1
        %vm2357 = vcmp.eq.s32.totalorder %v2325, 1
        %vm2358 = vcmp.eq.s32.totalorder %v2326, 1
        %vm2359 = vcmp.eq.s32.totalorder %v2327, 1
        %vm2360 = vcmp.eq.s32.totalorder %v2328, 1
        %vm2361 = vcmp.eq.s32.totalorder %v2329, 1
        %vm2362 = vmpackc.low %vm2330, %vm2330
        %vm2363 = vmpackc.low %vm2331, %vm2331
        %vm2364 = vmpackc.low %vm2332, %vm2332
        %vm2365 = vmpackc.low %vm2333, %vm2333
        %vm2366 = vmpackc.low %vm2334, %vm2334
        %vm2367 = vmpackc.low %vm2335, %vm2335
        %vm2368 = vmpackc.low %vm2336, %vm2336
        %vm2369 = vmpackc.low %vm2337, %vm2337
        %vm2370 = vmpackc.low %vm2338, %vm2338
        %vm2371 = vmpackc.low %vm2339, %vm2339
        %vm2372 = vmpackc.low %vm2340, %vm2340
        %vm2373 = vmpackc.low %vm2341, %vm2341
        %vm2374 = vmpackc.low %vm2342, %vm2342
        %vm2375 = vmpackc.low %vm2343, %vm2343
        %vm2376 = vmpackc.low %vm2344, %vm2344
        %vm2377 = vmpackc.low %vm2345, %vm2345
        %vm2378 = vmpackc.low %vm2346, %vm2346
        %vm2379 = vmpackc.low %vm2347, %vm2347
        %vm2380 = vmpackc.low %vm2348, %vm2348
        %vm2381 = vmpackc.low %vm2349, %vm2349
        %vm2382 = vmpackc.low %vm2350, %vm2350
        %vm2383 = vmpackc.low %vm2351, %vm2351
        %vm2384 = vmpackc.low %vm2352, %vm2352
        %vm2385 = vmpackc.low %vm2353, %vm2353
        %vm2386 = vmpackc.low %vm2354, %vm2354
        %vm2387 = vmpackc.low %vm2355, %vm2355
        %vm2388 = vmpackc.low %vm2356, %vm2356
        %vm2389 = vmpackc.low %vm2357, %vm2357
        %vm2390 = vmpackc.low %vm2358, %vm2358
        %vm2391 = vmpackc.low %vm2359, %vm2359
        %vm2392 = vmpackc.low %vm2360, %vm2360
        %vm2393 = vmpackc.low %vm2361, %vm2361
        %v2394 = vsel %vm2362, 65537, 0
        %v2395 = vsel %vm2363, 65537, 0
        %v2396 = vsel %vm2364, 65537, 0
        %v2397 = vsel %vm2365, 65537, 0
        %v2398 = vsel %vm2366, 65537, 0
        %v2399 = vsel %vm2367, 65537, 0
        %v2400 = vsel %vm2368, 65537, 0
        %v2401 = vsel %vm2369, 65537, 0
        %v2402 = vsel %vm2370, 65537, 0
        %v2403 = vsel %vm2371, 65537, 0
        %v2404 = vsel %vm2372, 65537, 0
        %v2405 = vsel %vm2373, 65537, 0
        %v2406 = vsel %vm2374, 65537, 0
        %v2407 = vsel %vm2375, 65537, 0
        %v2408 = vsel %vm2376, 65537, 0
        %v2409 = vsel %vm2377, 65537, 0
        %v2410 = vsel %vm2378, 65537, 0
        %v2411 = vsel %vm2379, 65537, 0
        %v2412 = vsel %vm2380, 65537, 0
        %v2413 = vsel %vm2381, 65537, 0
        %v2414 = vsel %vm2382, 65537, 0
        %v2415 = vsel %vm2383, 65537, 0
        %v2416 = vsel %vm2384, 65537, 0
        %v2417 = vsel %vm2385, 65537, 0
        %v2418 = vsel %vm2386, 65537, 0
        %v2419 = vsel %vm2387, 65537, 0
        %v2420 = vsel %vm2388, 65537, 0
        %v2421 = vsel %vm2389, 65537, 0
        %v2422 = vsel %vm2390, 65537, 0
        %v2423 = vsel %vm2391, 65537, 0
        %v2424 = vsel %vm2392, 65537, 0
        %v2425 = vsel %vm2393, 65537, 0
        %v2426 = vunpack.c.l.b16 %v2394
        %v2427 = vunpack.c.l.b16 %v2395
        %v2428 = vunpack.c.l.b16 %v2396
        %v2429 = vunpack.c.l.b16 %v2397
        %v2430 = vunpack.c.l.b16 %v2398
        %v2431 = vunpack.c.l.b16 %v2399
        %v2432 = vunpack.c.l.b16 %v2400
        %v2433 = vunpack.c.l.b16 %v2401
        %v2434 = vunpack.c.l.b16 %v2402
        %v2435 = vunpack.c.l.b16 %v2403
        %v2436 = vunpack.c.l.b16 %v2404
        %v2437 = vunpack.c.l.b16 %v2405
        %v2438 = vunpack.c.l.b16 %v2406
        %v2439 = vunpack.c.l.b16 %v2407
        %v2440 = vunpack.c.l.b16 %v2408
        %v2441 = vunpack.c.l.b16 %v2409
        %v2442 = vunpack.c.l.b16 %v2410
        %v2443 = vunpack.c.l.b16 %v2411
        %v2444 = vunpack.c.l.b16 %v2412
        %v2445 = vunpack.c.l.b16 %v2413
        %v2446 = vunpack.c.l.b16 %v2414
        %v2447 = vunpack.c.l.b16 %v2415
        %v2448 = vunpack.c.l.b16 %v2416
        %v2449 = vunpack.c.l.b16 %v2417
        %v2450 = vunpack.c.l.b16 %v2418
        %v2451 = vunpack.c.l.b16 %v2419
        %v2452 = vunpack.c.l.b16 %v2420
        %v2453 = vunpack.c.l.b16 %v2421
        %v2454 = vunpack.c.l.b16 %v2422
        %v2455 = vunpack.c.l.b16 %v2423
        %v2456 = vunpack.c.l.b16 %v2424
        %v2457 = vunpack.c.l.b16 %v2425
        %v2458 = vpack.c.b16 %v2427, %v2426
        %v2459 = vpack.c.b16 %v2429, %v2428
        %v2460 = vpack.c.b16 %v2431, %v2430
        %v2461 = vpack.c.b16 %v2433, %v2432
        %v2462 = vpack.c.b16 %v2435, %v2434
        %v2463 = vpack.c.b16 %v2437, %v2436
        %v2464 = vpack.c.b16 %v2439, %v2438
        %v2465 = vpack.c.b16 %v2441, %v2440
        %v2466 = vpack.c.b16 %v2443, %v2442
        %v2467 = vpack.c.b16 %v2445, %v2444
        %v2468 = vpack.c.b16 %v2447, %v2446
        %v2469 = vpack.c.b16 %v2449, %v2448
        %v2470 = vpack.c.b16 %v2451, %v2450
        %v2471 = vpack.c.b16 %v2453, %v2452
        %v2472 = vpack.c.b16 %v2455, %v2454
        %v2473 = vpack.c.b16 %v2457, %v2456
        %v2475 = vshrl.u32 %v2458, 16
        %v2477 = vrot.slane %v2475, 3
        %v2478 = vshll.u32 %v2458, 16
        %v2480 = vrot.slane %v2478, 4
        %v2481 = vor.u32 %v2477, %v2480
        %v2483 = vshrl.u32 %v2459, 16
        %v2485 = vrot.slane %v2483, 3
        %v2486 = vshll.u32 %v2459, 16
        %v2488 = vrot.slane %v2486, 4
        %v2489 = vor.u32 %v2485, %v2488
        %v2490 = vsel %vm1919, %v2481, %v2489
        %v2492 = vshrl.u32 %v2460, 16
        %v2494 = vrot.slane %v2492, 3
        %v2495 = vshll.u32 %v2460, 16
        %v2497 = vrot.slane %v2495, 4
        %v2498 = vor.u32 %v2494, %v2497
        %v2499 = vsel %vm1919, %v2489, %v2498
        %v2501 = vshrl.u32 %v2461, 16
        %v2503 = vrot.slane %v2501, 3
        %v2504 = vshll.u32 %v2461, 16
        %v2506 = vrot.slane %v2504, 4
        %v2507 = vor.u32 %v2503, %v2506
        %v2508 = vsel %vm1919, %v2498, %v2507
        %v2510 = vshrl.u32 %v2462, 16
        %v2512 = vrot.slane %v2510, 3
        %v2513 = vshll.u32 %v2462, 16
        %v2515 = vrot.slane %v2513, 4
        %v2516 = vor.u32 %v2512, %v2515
        %v2517 = vsel %vm1919, %v2507, %v2516
        %v2519 = vshrl.u32 %v2463, 16
        %v2521 = vrot.slane %v2519, 3
        %v2522 = vshll.u32 %v2463, 16
        %v2524 = vrot.slane %v2522, 4
        %v2525 = vor.u32 %v2521, %v2524
        %v2526 = vsel %vm1919, %v2516, %v2525
        %v2528 = vshrl.u32 %v2464, 16
        %v2530 = vrot.slane %v2528, 3
        %v2531 = vshll.u32 %v2464, 16
        %v2533 = vrot.slane %v2531, 4
        %v2534 = vor.u32 %v2530, %v2533
        %v2535 = vsel %vm1919, %v2525, %v2534
        %v2537 = vshrl.u32 %v2465, 16
        %v2539 = vrot.slane %v2537, 3
        %v2540 = vshll.u32 %v2465, 16
        %v2542 = vrot.slane %v2540, 4
        %v2543 = vor.u32 %v2539, %v2542
        %v2544 = vsel %vm1919, %v2534, %v2543
        %v2546 = vshrl.u32 %v2466, 16
        %v2548 = vrot.slane %v2546, 3
        %v2549 = vshll.u32 %v2466, 16
        %v2551 = vrot.slane %v2549, 4
        %v2552 = vor.u32 %v2548, %v2551
        %v2553 = vsel %vm1919, %v2543, %v2552
        %v2555 = vshrl.u32 %v2467, 16
        %v2557 = vrot.slane %v2555, 3
        %v2558 = vshll.u32 %v2467, 16
        %v2560 = vrot.slane %v2558, 4
        %v2561 = vor.u32 %v2557, %v2560
        %v2562 = vsel %vm1919, %v2552, %v2561
        %v2564 = vshrl.u32 %v2468, 16
        %v2566 = vrot.slane %v2564, 3
        %v2567 = vshll.u32 %v2468, 16
        %v2569 = vrot.slane %v2567, 4
        %v2570 = vor.u32 %v2566, %v2569
        %v2571 = vsel %vm1919, %v2561, %v2570
        %v2573 = vshrl.u32 %v2469, 16
        %v2575 = vrot.slane %v2573, 3
        %v2576 = vshll.u32 %v2469, 16
        %v2578 = vrot.slane %v2576, 4
        %v2579 = vor.u32 %v2575, %v2578
        %v2580 = vsel %vm1919, %v2570, %v2579
        %v2582 = vshrl.u32 %v2470, 16
        %v2584 = vrot.slane %v2582, 3
        %v2585 = vshll.u32 %v2470, 16
        %v2587 = vrot.slane %v2585, 4
        %v2588 = vor.u32 %v2584, %v2587
        %v2589 = vsel %vm1919, %v2579, %v2588
        %v2591 = vshrl.u32 %v2471, 16
        %v2593 = vrot.slane %v2591, 3
        %v2594 = vshll.u32 %v2471, 16
        %v2596 = vrot.slane %v2594, 4
        %v2597 = vor.u32 %v2593, %v2596
        %v2598 = vsel %vm1919, %v2588, %v2597
        %v2600 = vshrl.u32 %v2472, 16
        %v2602 = vrot.slane %v2600, 3
        %v2603 = vshll.u32 %v2472, 16
        %v2605 = vrot.slane %v2603, 4
        %v2606 = vor.u32 %v2602, %v2605
        %v2607 = vsel %vm1919, %v2597, %v2606
        %v2609 = vshrl.u32 %v2473, 16
        %v2611 = vrot.slane %v2609, 3
        %v2612 = vshll.u32 %v2473, 16
        %v2614 = vrot.slane %v2612, 4
        %v2615 = vor.u32 %v2611, %v2614
        %v2616 = vsel %vm1919, %v2606, %v2615
        %vm2617 = vcmp.ne.s16.totalorder %v2481, 0
        %vm2618 = vcmp.ne.s16.totalorder %v2490, 0
        %vm2619 = vcmp.ne.s16.totalorder %v2499, 0
        %vm2620 = vcmp.ne.s16.totalorder %v2508, 0
        %vm2621 = vcmp.ne.s16.totalorder %v2517, 0
        %vm2622 = vcmp.ne.s16.totalorder %v2526, 0
        %vm2623 = vcmp.ne.s16.totalorder %v2535, 0
        %vm2624 = vcmp.ne.s16.totalorder %v2544, 0
        %vm2625 = vcmp.ne.s16.totalorder %v2553, 0
        %vm2626 = vcmp.ne.s16.totalorder %v2562, 0
        %vm2627 = vcmp.ne.s16.totalorder %v2571, 0
        %vm2628 = vcmp.ne.s16.totalorder %v2580, 0
        %vm2629 = vcmp.ne.s16.totalorder %v2589, 0
        %vm2630 = vcmp.ne.s16.totalorder %v2598, 0
        %vm2631 = vcmp.ne.s16.totalorder %v2607, 0
        %vm2632 = vcmp.ne.s16.totalorder %v2616, 0
        %vm2633 = vcmp.ne.s16.totalorder %v2615, 0
        %v2634 = vsel %vm2617, %v1626, 0
        %v2635 = vsel %vm2618, %v1240, 0
        %v2636 = vsel %vm2619, %v1241, 0
        %v2637 = vsel %vm2620, %v1242, 0
        %v2638 = vsel %vm2621, %v1243, 0
        %v2639 = vsel %vm2622, %v1244, 0
        %v2640 = vsel %vm2623, %v1245, 0
        %v2641 = vsel %vm2624, %v1246, 0
        %v2642 = vsel %vm2625, %v1247, 0
        %v2643 = vsel %vm2626, %v1248, 0
        %v2644 = vsel %vm2627, %v1249, 0
        %v2645 = vsel %vm2628, %v1250, 0
        %v2646 = vsel %vm2629, %v1251, 0
        %v2647 = vsel %vm2630, %v1252, 0
        %v2648 = vsel %vm2631, %v1253, 0
        %v2649 = vsel %vm2632, %v1254, 0
        %v2650 = vsel %vm2633, %v2297, 0
        %s2651 = scalar_lea.vmem [#allocation8], 128
        %v2652 = vld [vmem:[%s2651] sm:$0xf]
        %v2653 = vld [vmem:[%s2651 + $0x4] sm:$0xf]
        %v2654 = vld [vmem:[%s2651 + $0x8] sm:$0xf]
        %v2655 = vld [vmem:[%s2651 + $0xc] sm:$0xf]
        %v2656 = vld [vmem:[%s2651 + $0x10] sm:$0xf]
        %v2657 = vld [vmem:[%s2651 + $0x14] sm:$0xf]
        %v2658 = vld [vmem:[%s2651 + $0x18] sm:$0xf]
        %v2659 = vld [vmem:[%s2651 + $0x1c] sm:$0xf]
        %v2660 = vld [vmem:[%s2651 + $0x20] sm:$0xf]
        %v2661 = vld [vmem:[%s2651 + $0x24] sm:$0xf]
        %v2662 = vld [vmem:[%s2651 + $0x28] sm:$0xf]
        %v2663 = vld [vmem:[%s2651 + $0x2c] sm:$0xf]
        %v2664 = vld [vmem:[%s2651 + $0x30] sm:$0xf]
        %v2665 = vld [vmem:[%s2651 + $0x34] sm:$0xf]
        %v2666 = vld [vmem:[%s2651 + $0x38] sm:$0xf]
        %v2667 = vld [vmem:[%s2651 + $0x3c] sm:$0xf]
        %v2669 = vshrl.u32 %v2634, 16
        %v2671 = vrot.slane %v2669, 4
        %v2672 = vshll.u32 %v2634, 16
        %v2674 = vrot.slane %v2672, 5
        %v2675 = vor.u32 %v2671, %v2674
        %v2677 = vshrl.u32 %v2635, 16
        %v2679 = vrot.slane %v2677, 4
        %v2680 = vshll.u32 %v2635, 16
        %v2682 = vrot.slane %v2680, 5
        %v2683 = vor.u32 %v2679, %v2682
        %v2684 = vsel %vm1432, %v2675, %v2683
        %v2686 = vshrl.u32 %v2636, 16
        %v2688 = vrot.slane %v2686, 4
        %v2689 = vshll.u32 %v2636, 16
        %v2691 = vrot.slane %v2689, 5
        %v2692 = vor.u32 %v2688, %v2691
        %v2693 = vsel %vm1432, %v2683, %v2692
        %v2695 = vshrl.u32 %v2637, 16
        %v2697 = vrot.slane %v2695, 4
        %v2698 = vshll.u32 %v2637, 16
        %v2700 = vrot.slane %v2698, 5
        %v2701 = vor.u32 %v2697, %v2700
        %v2702 = vsel %vm1432, %v2692, %v2701
        %v2704 = vshrl.u32 %v2638, 16
        %v2706 = vrot.slane %v2704, 4
        %v2707 = vshll.u32 %v2638, 16
        %v2709 = vrot.slane %v2707, 5
        %v2710 = vor.u32 %v2706, %v2709
        %v2711 = vsel %vm1432, %v2701, %v2710
        %v2713 = vshrl.u32 %v2639, 16
        %v2715 = vrot.slane %v2713, 4
        %v2716 = vshll.u32 %v2639, 16
        %v2718 = vrot.slane %v2716, 5
        %v2719 = vor.u32 %v2715, %v2718
        %v2720 = vsel %vm1432, %v2710, %v2719
        %v2722 = vshrl.u32 %v2640, 16
        %v2724 = vrot.slane %v2722, 4
        %v2725 = vshll.u32 %v2640, 16
        %v2727 = vrot.slane %v2725, 5
        %v2728 = vor.u32 %v2724, %v2727
        %v2729 = vsel %vm1432, %v2719, %v2728
        %v2731 = vshrl.u32 %v2641, 16
        %v2733 = vrot.slane %v2731, 4
        %v2734 = vshll.u32 %v2641, 16
        %v2736 = vrot.slane %v2734, 5
        %v2737 = vor.u32 %v2733, %v2736
        %v2738 = vsel %vm1432, %v2728, %v2737
        %v2740 = vshrl.u32 %v2642, 16
        %v2742 = vrot.slane %v2740, 4
        %v2743 = vshll.u32 %v2642, 16
        %v2745 = vrot.slane %v2743, 5
        %v2746 = vor.u32 %v2742, %v2745
        %v2747 = vsel %vm1432, %v2737, %v2746
        %v2749 = vshrl.u32 %v2643, 16
        %v2751 = vrot.slane %v2749, 4
        %v2752 = vshll.u32 %v2643, 16
        %v2754 = vrot.slane %v2752, 5
        %v2755 = vor.u32 %v2751, %v2754
        %v2756 = vsel %vm1432, %v2746, %v2755
        %v2758 = vshrl.u32 %v2644, 16
        %v2760 = vrot.slane %v2758, 4
        %v2761 = vshll.u32 %v2644, 16
        %v2763 = vrot.slane %v2761, 5
        %v2764 = vor.u32 %v2760, %v2763
        %v2765 = vsel %vm1432, %v2755, %v2764
        %v2767 = vshrl.u32 %v2645, 16
        %v2769 = vrot.slane %v2767, 4
        %v2770 = vshll.u32 %v2645, 16
        %v2772 = vrot.slane %v2770, 5
        %v2773 = vor.u32 %v2769, %v2772
        %v2774 = vsel %vm1432, %v2764, %v2773
        %v2776 = vshrl.u32 %v2646, 16
        %v2778 = vrot.slane %v2776, 4
        %v2779 = vshll.u32 %v2646, 16
        %v2781 = vrot.slane %v2779, 5
        %v2782 = vor.u32 %v2778, %v2781
        %v2783 = vsel %vm1432, %v2773, %v2782
        %v2785 = vshrl.u32 %v2647, 16
        %v2787 = vrot.slane %v2785, 4
        %v2788 = vshll.u32 %v2647, 16
        %v2790 = vrot.slane %v2788, 5
        %v2791 = vor.u32 %v2787, %v2790
        %v2792 = vsel %vm1432, %v2782, %v2791
        %v2794 = vshrl.u32 %v2648, 16
        %v2796 = vrot.slane %v2794, 4
        %v2797 = vshll.u32 %v2648, 16
        %v2799 = vrot.slane %v2797, 5
        %v2800 = vor.u32 %v2796, %v2799
        %v2801 = vsel %vm1432, %v2791, %v2800
        %v2803 = vshrl.u32 %v2649, 16
        %v2805 = vrot.slane %v2803, 4
        %v2806 = vshll.u32 %v2649, 16
        %v2808 = vrot.slane %v2806, 5
        %v2809 = vor.u32 %v2805, %v2808
        %v2810 = vsel %vm1432, %v2800, %v2809
        %v2812 = vshrl.u32 %v2650, 16
        %v2814 = vrot.slane %v2812, 4
        %v2815 = vshll.u32 %v2650, 16
        %v2817 = vrot.slane %v2815, 5
        %v2818 = vor.u32 %v2814, %v2817
        %v2819 = vsel %vm1432, %v2809, %v2818
        %v2852 = vunpack.c.l.b16 %v2652
        %v2853 = vunpack.c.l.b16 %v2653
        %v2854 = vunpack.c.l.b16 %v2654
        %v2855 = vunpack.c.l.b16 %v2655
        %v2856 = vunpack.c.l.b16 %v2656
        %v2857 = vunpack.c.l.b16 %v2657
        %v2858 = vunpack.c.l.b16 %v2658
        %v2859 = vunpack.c.l.b16 %v2659
        %v2860 = vunpack.c.l.b16 %v2660
        %v2861 = vunpack.c.l.b16 %v2661
        %v2862 = vunpack.c.l.b16 %v2662
        %v2863 = vunpack.c.l.b16 %v2663
        %v2864 = vunpack.c.l.b16 %v2664
        %v2865 = vunpack.c.l.b16 %v2665
        %v2866 = vunpack.c.l.b16 %v2666
        %v2867 = vunpack.c.l.b16 %v2667
        %v2868 = vpack.c.b16 %v2853, %v2852
        %v2869 = vpack.c.b16 %v2855, %v2854
        %v2870 = vpack.c.b16 %v2857, %v2856
        %v2871 = vpack.c.b16 %v2859, %v2858
        %v2872 = vpack.c.b16 %v2861, %v2860
        %v2873 = vpack.c.b16 %v2863, %v2862
        %v2874 = vpack.c.b16 %v2865, %v2864
        %v2875 = vpack.c.b16 %v2867, %v2866
        %2884 = vmatprep.subr.bf16.mxu0 0
        %2885 = vmatpush1.bf16.msra.mxu0 %v2868
        %2886 = vmatprep.subr.bf16.mxu0 0
        %2887 = vmatpush1.bf16.msra.mxu0 %v2869
        %2888 = vmatprep.subr.bf16.mxu0 0
        %2889 = vmatpush1.bf16.msra.mxu0 %v2870
        %2890 = vmatprep.subr.bf16.mxu0 0
        %2891 = vmatpush1.bf16.msra.mxu0 %v2871
        %2892 = vmatprep.subr.bf16.mxu0 0
        %2893 = vmatpush1.bf16.msra.mxu0 %v2872
        %2894 = vmatprep.subr.bf16.mxu0 0
        %2895 = vmatpush1.bf16.msra.mxu0 %v2873
        %2896 = vmatprep.subr.bf16.mxu0 0
        %2897 = vmatpush1.bf16.msra.mxu0 %v2874
        %2898 = vmatprep.subr.bf16.mxu0 0
        %2899 = vmatpush1.bf16.msra.mxu0 %v2875
        %2900 = vmatprep.subr.bf16.mxu0 0
        %2901 = vmatpush1.bf16.msra.mxu0 0
        %2902 = vmatprep.subr.bf16.mxu0 0
        %2903 = vmatpush1.bf16.msra.mxu0 0
        %2904 = vmatprep.subr.bf16.mxu0 0
        %2905 = vmatpush1.bf16.msra.mxu0 0
        %2906 = vmatprep.subr.bf16.mxu0 0
        %2907 = vmatpush1.bf16.msra.mxu0 0
        %2908 = vmatprep.subr.bf16.mxu0 0
        %2909 = vmatpush1.bf16.msra.mxu0 0
        %2910 = vmatprep.subr.bf16.mxu0 0
        %2911 = vmatpush1.bf16.msra.mxu0 0
        %2912 = vmatprep.subr.bf16.mxu0 0
        %2913 = vmatpush1.bf16.msra.mxu0 0
        %2914 = vmatprep.subr.bf16.mxu0 0
        %2915 = vmatpush1.bf16.msra.mxu0 0
        %2916 = vmatprep.mubr.bf16.mxu0 0
        %2917 = vmatmul.mubr.bf16.gmra.mrb[0].mxu0 %v2684
        %v2918 = vpop.f32.mrb[0].mxu0
        %v2919 = vadd.f32 0.0, %v2918
        %v2920 = vpop.f32.mrb[0].mxu0
        %v2921 = vpop.f32.mrb[0].mxu0
        %v2922 = vadd.f32 0.0, %v2921
        %v2923 = vpop.f32.mrb[0].mxu0
        %2924 = vmatprep.mubr.bf16.mxu0 0
        %2925 = vmatmul.mubr.bf16.gmra.mrb[0].mxu0 %v2693
        %v2926 = vpop.f32.mrb[0].mxu0
        %v2927 = vadd.f32 0.0, %v2926
        %v2928 = vpop.f32.mrb[0].mxu0
        %v2929 = vpop.f32.mrb[0].mxu0
        %v2930 = vadd.f32 0.0, %v2929
        %v2931 = vpop.f32.mrb[0].mxu0
        %2932 = vmatprep.mubr.bf16.mxu0 0
        %2933 = vmatmul.mubr.bf16.gmra.mrb[0].mxu0 %v2702
        %v2934 = vpop.f32.mrb[0].mxu0
        %v2935 = vadd.f32 0.0, %v2934
        %v2936 = vpop.f32.mrb[0].mxu0
        %v2937 = vpop.f32.mrb[0].mxu0
        %v2938 = vadd.f32 0.0, %v2937
        %v2939 = vpop.f32.mrb[0].mxu0
        %2940 = vmatprep.mubr.bf16.mxu0 0
        %2941 = vmatmul.mubr.bf16.gmra.mrb[0].mxu0 %v2711
        %v2942 = vpop.f32.mrb[0].mxu0
        %v2943 = vadd.f32 0.0, %v2942
        %v2944 = vpop.f32.mrb[0].mxu0
        %v2945 = vpop.f32.mrb[0].mxu0
        %v2946 = vadd.f32 0.0, %v2945
        %v2947 = vpop.f32.mrb[0].mxu0
        %2948 = vmatprep.mubr.bf16.mxu0 0
        %2949 = vmatmul.mubr.bf16.gmra.mrb[0].mxu0 %v2720
        %v2950 = vpop.f32.mrb[0].mxu0
        %v2951 = vadd.f32 0.0, %v2950
        %v2952 = vpop.f32.mrb[0].mxu0
        %v2953 = vpop.f32.mrb[0].mxu0
        %v2954 = vadd.f32 0.0, %v2953
        %v2955 = vpop.f32.mrb[0].mxu0
        %2956 = vmatprep.mubr.bf16.mxu0 0
        %2957 = vmatmul.mubr.bf16.gmra.mrb[0].mxu0 %v2729
        %v2958 = vpop.f32.mrb[0].mxu0
        %v2959 = vadd.f32 0.0, %v2958
        %v2960 = vpop.f32.mrb[0].mxu0
        %v2961 = vpop.f32.mrb[0].mxu0
        %v2962 = vadd.f32 0.0, %v2961
        %v2963 = vpop.f32.mrb[0].mxu0
        %2964 = vmatprep.mubr.bf16.mxu0 0
        %2965 = vmatmul.mubr.bf16.gmra.mrb[0].mxu0 %v2738
        %v2966 = vpop.f32.mrb[0].mxu0
        %v2967 = vadd.f32 0.0, %v2966
        %v2968 = vpop.f32.mrb[0].mxu0
        %v2969 = vpop.f32.mrb[0].mxu0
        %v2970 = vadd.f32 0.0, %v2969
        %v2971 = vpop.f32.mrb[0].mxu0
        %2972 = vmatprep.mubr.bf16.mxu0 0
        %2973 = vmatmul.mubr.bf16.gmra.mrb[0].mxu0 %v2747
        %v2974 = vpop.f32.mrb[0].mxu0
        %v2975 = vadd.f32 0.0, %v2974
        %v2976 = vpop.f32.mrb[0].mxu0
        %v2977 = vpop.f32.mrb[0].mxu0
        %v2978 = vadd.f32 0.0, %v2977
        %v2979 = vpop.f32.mrb[0].mxu0
        %2980 = vmatprep.mubr.bf16.mxu0 0
        %2981 = vmatmul.mubr.bf16.gmra.mrb[0].mxu0 %v2756
        %v2982 = vpop.f32.mrb[0].mxu0
        %v2983 = vadd.f32 0.0, %v2982
        %v2984 = vpop.f32.mrb[0].mxu0
        %v2985 = vpop.f32.mrb[0].mxu0
        %v2986 = vadd.f32 0.0, %v2985
        %v2987 = vpop.f32.mrb[0].mxu0
        %2988 = vmatprep.mubr.bf16.mxu0 0
        %2989 = vmatmul.mubr.bf16.gmra.mrb[0].mxu0 %v2765
        %v2990 = vpop.f32.mrb[0].mxu0
        %v2991 = vadd.f32 0.0, %v2990
        %v2992 = vpop.f32.mrb[0].mxu0
        %v2993 = vpop.f32.mrb[0].mxu0
        %v2994 = vadd.f32 0.0, %v2993
        %v2995 = vpop.f32.mrb[0].mxu0
        %2996 = vmatprep.mubr.bf16.mxu0 0
        %2997 = vmatmul.mubr.bf16.gmra.mrb[0].mxu0 %v2774
        %v2998 = vpop.f32.mrb[0].mxu0
        %v2999 = vadd.f32 0.0, %v2998
        %v3000 = vpop.f32.mrb[0].mxu0
        %v3001 = vpop.f32.mrb[0].mxu0
        %v3002 = vadd.f32 0.0, %v3001
        %v3003 = vpop.f32.mrb[0].mxu0
        %3004 = vmatprep.mubr.bf16.mxu0 0
        %3005 = vmatmul.mubr.bf16.gmra.mrb[0].mxu0 %v2783
        %v3006 = vpop.f32.mrb[0].mxu0
        %v3007 = vadd.f32 0.0, %v3006
        %v3008 = vpop.f32.mrb[0].mxu0
        %v3009 = vpop.f32.mrb[0].mxu0
        %v3010 = vadd.f32 0.0, %v3009
        %v3011 = vpop.f32.mrb[0].mxu0
        %3012 = vmatprep.mubr.bf16.mxu0 0
        %3013 = vmatmul.mubr.bf16.gmra.mrb[0].mxu0 %v2792
        %v3014 = vpop.f32.mrb[0].mxu0
        %v3015 = vadd.f32 0.0, %v3014
        %v3016 = vpop.f32.mrb[0].mxu0
        %v3017 = vpop.f32.mrb[0].mxu0
        %v3018 = vadd.f32 0.0, %v3017
        %v3019 = vpop.f32.mrb[0].mxu0
        %3020 = vmatprep.mubr.bf16.mxu0 0
        %3021 = vmatmul.mubr.bf16.gmra.mrb[0].mxu0 %v2801
        %v3022 = vpop.f32.mrb[0].mxu0
        %v3023 = vadd.f32 0.0, %v3022
        %v3024 = vpop.f32.mrb[0].mxu0
        %v3025 = vpop.f32.mrb[0].mxu0
        %v3026 = vadd.f32 0.0, %v3025
        %v3027 = vpop.f32.mrb[0].mxu0
        %3028 = vmatprep.mubr.bf16.mxu0 0
        %3029 = vmatmul.mubr.bf16.gmra.mrb[0].mxu0 %v2810
        %v3030 = vpop.f32.mrb[0].mxu0
        %v3031 = vadd.f32 0.0, %v3030
        %v3032 = vpop.f32.mrb[0].mxu0
        %v3033 = vpop.f32.mrb[0].mxu0
        %v3034 = vadd.f32 0.0, %v3033
        %v3035 = vpop.f32.mrb[0].mxu0
        %3036 = vmatprep.mubr.bf16.mxu0 0
        %3037 = vmatmul.mubr.bf16.gmra.mrb[0].mxu0 %v2819
        %v3038 = vpop.f32.mrb[0].mxu0
        %v3039 = vadd.f32 0.0, %v3038
        %v3040 = vpop.f32.mrb[0].mxu0
        %v3041 = vpop.f32.mrb[0].mxu0
        %v3042 = vadd.f32 0.0, %v3041
        %v3043 = vpop.f32.mrb[0].mxu0
        %3044 = vdwg.mxu0
        %v3045 = vadd.f32 %v2171, %v2919
        %v3046 = vadd.f32 %v2174, %v2922
        %v3047 = vadd.f32 %v2179, %v2927
        %v3048 = vadd.f32 %v2182, %v2930
        %v3049 = vadd.f32 %v2187, %v2935
        %v3050 = vadd.f32 %v2190, %v2938
        %v3051 = vadd.f32 %v2195, %v2943
        %v3052 = vadd.f32 %v2198, %v2946
        %v3053 = vadd.f32 %v2203, %v2951
        %v3054 = vadd.f32 %v2206, %v2954
        %v3055 = vadd.f32 %v2211, %v2959
        %v3056 = vadd.f32 %v2214, %v2962
        %v3057 = vadd.f32 %v2219, %v2967
        %v3058 = vadd.f32 %v2222, %v2970
        %v3059 = vadd.f32 %v2227, %v2975
        %v3060 = vadd.f32 %v2230, %v2978
        %v3061 = vadd.f32 %v2235, %v2983
        %v3062 = vadd.f32 %v2238, %v2986
        %v3063 = vadd.f32 %v2243, %v2991
        %v3064 = vadd.f32 %v2246, %v2994
        %v3065 = vadd.f32 %v2251, %v2999
        %v3066 = vadd.f32 %v2254, %v3002
        %v3067 = vadd.f32 %v2259, %v3007
        %v3068 = vadd.f32 %v2262, %v3010
        %v3069 = vadd.f32 %v2267, %v3015
        %v3070 = vadd.f32 %v2270, %v3018
        %v3071 = vadd.f32 %v2275, %v3023
        %v3072 = vadd.f32 %v2278, %v3026
        %v3073 = vadd.f32 %v2283, %v3031
        %v3074 = vadd.f32 %v2286, %v3034
        %v3075 = vadd.f32 %v2291, %v3039
        %v3076 = vadd.f32 %v2294, %v3042
        %v3077 = vld [vmem:[#allocation2 + $0x8] sm:$0xf8]
        %v3078 = vld [vmem:[#allocation2 + $0x10] sm:$0xff]
        %v3079 = vld [vmem:[#allocation2 + $0x18] sm:$0xff]
        %v3080 = vld [vmem:[#allocation2 + $0x20] sm:$0xff]
        %v3081 = vld [vmem:[#allocation2 + $0x28] sm:$0xff]
        %v3082 = vld [vmem:[#allocation2 + $0x30] sm:$0xff]
        %v3083 = vld [vmem:[#allocation2 + $0x38] sm:$0xff]
        %v3084 = vld [vmem:[#allocation2 + $0x40] sm:$0xff]
        %v3085 = vld [vmem:[#allocation2 + $0x48] sm:$0xff]
        %v3086 = vld [vmem:[#allocation2 + $0x50] sm:$0xff]
        %v3087 = vld [vmem:[#allocation2 + $0x58] sm:$0xff]
        %v3088 = vld [vmem:[#allocation2 + $0x60] sm:$0xff]
        %v3089 = vld [vmem:[#allocation2 + $0x68] sm:$0xff]
        %v3090 = vld [vmem:[#allocation2 + $0x70] sm:$0xff]
        %v3091 = vld [vmem:[#allocation2 + $0x78] sm:$0xff]
        %v3092 = vld [vmem:[#allocation2 + $0x80] sm:$0xff]
        %v3093 = vld [vmem:[#allocation2 + $0x88] sm:$0xf]
        %v3094 = vsel %vm1576, %v3077, 0
        %v3095 = vsel %vm1577, %v3078, 0
        %v3096 = vsel %vm1578, %v3079, 0
        %v3097 = vsel %vm1579, %v3080, 0
        %v3098 = vsel %vm1580, %v3081, 0
        %v3099 = vsel %vm1581, %v3082, 0
        %v3100 = vsel %vm1582, %v3083, 0
        %v3101 = vsel %vm1583, %v3084, 0
        %v3102 = vsel %vm1584, %v3085, 0
        %v3103 = vsel %vm1585, %v3086, 0
        %v3104 = vsel %vm1586, %v3087, 0
        %v3105 = vsel %vm1587, %v3088, 0
        %v3106 = vsel %vm1588, %v3089, 0
        %v3107 = vsel %vm1589, %v3090, 0
        %v3108 = vsel %vm1590, %v3091, 0
        %v3109 = vsel %vm1591, %v3092, 0
        %v3110 = vsel %vm1592, %v3093, 0
        %s3111 = scalar_lea.vmem [#allocation8], 192
        %v3112 = vld [vmem:[%s3111] sm:$0xf]
        %v3113 = vld [vmem:[%s3111 + $0x4] sm:$0xf]
        %v3114 = vld [vmem:[%s3111 + $0x8] sm:$0xf]
        %v3115 = vld [vmem:[%s3111 + $0xc] sm:$0xf]
        %v3116 = vld [vmem:[%s3111 + $0x10] sm:$0xf]
        %v3117 = vld [vmem:[%s3111 + $0x14] sm:$0xf]
        %v3118 = vld [vmem:[%s3111 + $0x18] sm:$0xf]
        %v3119 = vld [vmem:[%s3111 + $0x1c] sm:$0xf]
        %v3120 = vld [vmem:[%s3111 + $0x20] sm:$0xf]
        %v3121 = vld [vmem:[%s3111 + $0x24] sm:$0xf]
        %v3122 = vld [vmem:[%s3111 + $0x28] sm:$0xf]
        %v3123 = vld [vmem:[%s3111 + $0x2c] sm:$0xf]
        %v3124 = vld [vmem:[%s3111 + $0x30] sm:$0xf]
        %v3125 = vld [vmem:[%s3111 + $0x34] sm:$0xf]
        %v3126 = vld [vmem:[%s3111 + $0x38] sm:$0xf]
        %v3127 = vld [vmem:[%s3111 + $0x3c] sm:$0xf]
        %v3129 = vshrl.u32 %v3094, 16
        %v3131 = vrot.slane %v3129, 3
        %v3132 = vshll.u32 %v3094, 16
        %v3134 = vrot.slane %v3132, 4
        %v3135 = vor.u32 %v3131, %v3134
        %v3137 = vshrl.u32 %v3095, 16
        %v3139 = vrot.slane %v3137, 3
        %v3140 = vshll.u32 %v3095, 16
        %v3142 = vrot.slane %v3140, 4
        %v3143 = vor.u32 %v3139, %v3142
        %v3144 = vsel %vm1919, %v3135, %v3143
        %v3146 = vshrl.u32 %v3096, 16
        %v3148 = vrot.slane %v3146, 3
        %v3149 = vshll.u32 %v3096, 16
        %v3151 = vrot.slane %v3149, 4
        %v3152 = vor.u32 %v3148, %v3151
        %v3153 = vsel %vm1919, %v3143, %v3152
        %v3155 = vshrl.u32 %v3097, 16
        %v3157 = vrot.slane %v3155, 3
        %v3158 = vshll.u32 %v3097, 16
        %v3160 = vrot.slane %v3158, 4
        %v3161 = vor.u32 %v3157, %v3160
        %v3162 = vsel %vm1919, %v3152, %v3161
        %v3164 = vshrl.u32 %v3098, 16
        %v3166 = vrot.slane %v3164, 3
        %v3167 = vshll.u32 %v3098, 16
        %v3169 = vrot.slane %v3167, 4
        %v3170 = vor.u32 %v3166, %v3169
        %v3171 = vsel %vm1919, %v3161, %v3170
        %v3173 = vshrl.u32 %v3099, 16
        %v3175 = vrot.slane %v3173, 3
        %v3176 = vshll.u32 %v3099, 16
        %v3178 = vrot.slane %v3176, 4
        %v3179 = vor.u32 %v3175, %v3178
        %v3180 = vsel %vm1919, %v3170, %v3179
        %v3182 = vshrl.u32 %v3100, 16
        %v3184 = vrot.slane %v3182, 3
        %v3185 = vshll.u32 %v3100, 16
        %v3187 = vrot.slane %v3185, 4
        %v3188 = vor.u32 %v3184, %v3187
        %v3189 = vsel %vm1919, %v3179, %v3188
        %v3191 = vshrl.u32 %v3101, 16
        %v3193 = vrot.slane %v3191, 3
        %v3194 = vshll.u32 %v3101, 16
        %v3196 = vrot.slane %v3194, 4
        %v3197 = vor.u32 %v3193, %v3196
        %v3198 = vsel %vm1919, %v3188, %v3197
        %v3200 = vshrl.u32 %v3102, 16
        %v3202 = vrot.slane %v3200, 3
        %v3203 = vshll.u32 %v3102, 16
        %v3205 = vrot.slane %v3203, 4
        %v3206 = vor.u32 %v3202, %v3205
        %v3207 = vsel %vm1919, %v3197, %v3206
        %v3209 = vshrl.u32 %v3103, 16
        %v3211 = vrot.slane %v3209, 3
        %v3212 = vshll.u32 %v3103, 16
        %v3214 = vrot.slane %v3212, 4
        %v3215 = vor.u32 %v3211, %v3214
        %v3216 = vsel %vm1919, %v3206, %v3215
        %v3218 = vshrl.u32 %v3104, 16
        %v3220 = vrot.slane %v3218, 3
        %v3221 = vshll.u32 %v3104, 16
        %v3223 = vrot.slane %v3221, 4
        %v3224 = vor.u32 %v3220, %v3223
        %v3225 = vsel %vm1919, %v3215, %v3224
        %v3227 = vshrl.u32 %v3105, 16
        %v3229 = vrot.slane %v3227, 3
        %v3230 = vshll.u32 %v3105, 16
        %v3232 = vrot.slane %v3230, 4
        %v3233 = vor.u32 %v3229, %v3232
        %v3234 = vsel %vm1919, %v3224, %v3233
        %v3236 = vshrl.u32 %v3106, 16
        %v3238 = vrot.slane %v3236, 3
        %v3239 = vshll.u32 %v3106, 16
        %v3241 = vrot.slane %v3239, 4
        %v3242 = vor.u32 %v3238, %v3241
        %v3243 = vsel %vm1919, %v3233, %v3242
        %v3245 = vshrl.u32 %v3107, 16
        %v3247 = vrot.slane %v3245, 3
        %v3248 = vshll.u32 %v3107, 16
        %v3250 = vrot.slane %v3248, 4
        %v3251 = vor.u32 %v3247, %v3250
        %v3252 = vsel %vm1919, %v3242, %v3251
        %v3254 = vshrl.u32 %v3108, 16
        %v3256 = vrot.slane %v3254, 3
        %v3257 = vshll.u32 %v3108, 16
        %v3259 = vrot.slane %v3257, 4
        %v3260 = vor.u32 %v3256, %v3259
        %v3261 = vsel %vm1919, %v3251, %v3260
        %v3263 = vshrl.u32 %v3109, 16
        %v3265 = vrot.slane %v3263, 3
        %v3266 = vshll.u32 %v3109, 16
        %v3268 = vrot.slane %v3266, 4
        %v3269 = vor.u32 %v3265, %v3268
        %v3270 = vsel %vm1919, %v3260, %v3269
        %v3272 = vshrl.u32 %v3110, 16
        %v3274 = vrot.slane %v3272, 3
        %v3275 = vshll.u32 %v3110, 16
        %v3277 = vrot.slane %v3275, 4
        %v3278 = vor.u32 %v3274, %v3277
        %v3279 = vsel %vm1919, %v3269, %v3278
        %v3312 = vunpack.c.l.b16 %v3112
        %v3313 = vunpack.c.l.b16 %v3113
        %v3314 = vunpack.c.l.b16 %v3114
        %v3315 = vunpack.c.l.b16 %v3115
        %v3316 = vunpack.c.l.b16 %v3116
        %v3317 = vunpack.c.l.b16 %v3117
        %v3318 = vunpack.c.l.b16 %v3118
        %v3319 = vunpack.c.l.b16 %v3119
        %v3320 = vunpack.c.l.b16 %v3120
        %v3321 = vunpack.c.l.b16 %v3121
        %v3322 = vunpack.c.l.b16 %v3122
        %v3323 = vunpack.c.l.b16 %v3123
        %v3324 = vunpack.c.l.b16 %v3124
        %v3325 = vunpack.c.l.b16 %v3125
        %v3326 = vunpack.c.l.b16 %v3126
        %v3327 = vunpack.c.l.b16 %v3127
        %v3328 = vpack.c.b16 %v3313, %v3312
        %v3329 = vpack.c.b16 %v3315, %v3314
        %v3330 = vpack.c.b16 %v3317, %v3316
        %v3331 = vpack.c.b16 %v3319, %v3318
        %v3332 = vpack.c.b16 %v3321, %v3320
        %v3333 = vpack.c.b16 %v3323, %v3322
        %v3334 = vpack.c.b16 %v3325, %v3324
        %v3335 = vpack.c.b16 %v3327, %v3326
        %3344 = vmatprep.subr.bf16.mxu0 0
        %3345 = vmatpush1.bf16.msra.mxu0 %v3328
        %3346 = vmatprep.subr.bf16.mxu0 0
        %3347 = vmatpush1.bf16.msra.mxu0 %v3329
        %3348 = vmatprep.subr.bf16.mxu0 0
        %3349 = vmatpush1.bf16.msra.mxu0 %v3330
        %3350 = vmatprep.subr.bf16.mxu0 0
        %3351 = vmatpush1.bf16.msra.mxu0 %v3331
        %3352 = vmatprep.subr.bf16.mxu0 0
        %3353 = vmatpush1.bf16.msra.mxu0 %v3332
        %3354 = vmatprep.subr.bf16.mxu0 0
        %3355 = vmatpush1.bf16.msra.mxu0 %v3333
        %3356 = vmatprep.subr.bf16.mxu0 0
        %3357 = vmatpush1.bf16.msra.mxu0 %v3334
        %3358 = vmatprep.subr.bf16.mxu0 0
        %3359 = vmatpush1.bf16.msra.mxu0 %v3335
        %3360 = vmatprep.subr.bf16.mxu0 0
        %3361 = vmatpush1.bf16.msra.mxu0 0
        %3362 = vmatprep.subr.bf16.mxu0 0
        %3363 = vmatpush1.bf16.msra.mxu0 0
        %3364 = vmatprep.subr.bf16.mxu0 0
        %3365 = vmatpush1.bf16.msra.mxu0 0
        %3366 = vmatprep.subr.bf16.mxu0 0
        %3367 = vmatpush1.bf16.msra.mxu0 0
        %3368 = vmatprep.subr.bf16.mxu0 0
        %3369 = vmatpush1.bf16.msra.mxu0 0
        %3370 = vmatprep.subr.bf16.mxu0 0
        %3371 = vmatpush1.bf16.msra.mxu0 0
        %3372 = vmatprep.subr.bf16.mxu0 0
        %3373 = vmatpush1.bf16.msra.mxu0 0
        %3374 = vmatprep.subr.bf16.mxu0 0
        %3375 = vmatpush1.bf16.msra.mxu0 0
        %3376 = vmatprep.mubr.bf16.mxu0 0
        %3377 = vmatmul.mubr.bf16.gmra.mrb[0].mxu0 %v3144
        %v3378 = vpop.f32.mrb[0].mxu0
        %v3379 = vadd.f32 0.0, %v3378
        %v3380 = vpop.f32.mrb[0].mxu0
        %v3381 = vpop.f32.mrb[0].mxu0
        %v3382 = vadd.f32 0.0, %v3381
        %v3383 = vpop.f32.mrb[0].mxu0
        %3384 = vmatprep.mubr.bf16.mxu0 0
        %3385 = vmatmul.mubr.bf16.gmra.mrb[0].mxu0 %v3153
        %v3386 = vpop.f32.mrb[0].mxu0
        %v3387 = vadd.f32 0.0, %v3386
        %v3388 = vpop.f32.mrb[0].mxu0
        %v3389 = vpop.f32.mrb[0].mxu0
        %v3390 = vadd.f32 0.0, %v3389
        %v3391 = vpop.f32.mrb[0].mxu0
        %3392 = vmatprep.mubr.bf16.mxu0 0
        %3393 = vmatmul.mubr.bf16.gmra.mrb[0].mxu0 %v3162
        %v3394 = vpop.f32.mrb[0].mxu0
        %v3395 = vadd.f32 0.0, %v3394
        %v3396 = vpop.f32.mrb[0].mxu0
        %v3397 = vpop.f32.mrb[0].mxu0
        %v3398 = vadd.f32 0.0, %v3397
        %v3399 = vpop.f32.mrb[0].mxu0
        %3400 = vmatprep.mubr.bf16.mxu0 0
        %3401 = vmatmul.mubr.bf16.gmra.mrb[0].mxu0 %v3171
        %v3402 = vpop.f32.mrb[0].mxu0
        %v3403 = vadd.f32 0.0, %v3402
        %v3404 = vpop.f32.mrb[0].mxu0
        %v3405 = vpop.f32.mrb[0].mxu0
        %v3406 = vadd.f32 0.0, %v3405
        %v3407 = vpop.f32.mrb[0].mxu0
        %3408 = vmatprep.mubr.bf16.mxu0 0
        %3409 = vmatmul.mubr.bf16.gmra.mrb[0].mxu0 %v3180
        %v3410 = vpop.f32.mrb[0].mxu0
        %v3411 = vadd.f32 0.0, %v3410
        %v3412 = vpop.f32.mrb[0].mxu0
        %v3413 = vpop.f32.mrb[0].mxu0
        %v3414 = vadd.f32 0.0, %v3413
        %v3415 = vpop.f32.mrb[0].mxu0
        %3416 = vmatprep.mubr.bf16.mxu0 0
        %3417 = vmatmul.mubr.bf16.gmra.mrb[0].mxu0 %v3189
        %v3418 = vpop.f32.mrb[0].mxu0
        %v3419 = vadd.f32 0.0, %v3418
        %v3420 = vpop.f32.mrb[0].mxu0
        %v3421 = vpop.f32.mrb[0].mxu0
        %v3422 = vadd.f32 0.0, %v3421
        %v3423 = vpop.f32.mrb[0].mxu0
        %3424 = vmatprep.mubr.bf16.mxu0 0
        %3425 = vmatmul.mubr.bf16.gmra.mrb[0].mxu0 %v3198
        %v3426 = vpop.f32.mrb[0].mxu0
        %v3427 = vadd.f32 0.0, %v3426
        %v3428 = vpop.f32.mrb[0].mxu0
        %v3429 = vpop.f32.mrb[0].mxu0
        %v3430 = vadd.f32 0.0, %v3429
        %v3431 = vpop.f32.mrb[0].mxu0
        %3432 = vmatprep.mubr.bf16.mxu0 0
        %3433 = vmatmul.mubr.bf16.gmra.mrb[0].mxu0 %v3207
        %v3434 = vpop.f32.mrb[0].mxu0
        %v3435 = vadd.f32 0.0, %v3434
        %v3436 = vpop.f32.mrb[0].mxu0
        %v3437 = vpop.f32.mrb[0].mxu0
        %v3438 = vadd.f32 0.0, %v3437
        %v3439 = vpop.f32.mrb[0].mxu0
        %3440 = vmatprep.mubr.bf16.mxu0 0
        %3441 = vmatmul.mubr.bf16.gmra.mrb[0].mxu0 %v3216
        %v3442 = vpop.f32.mrb[0].mxu0
        %v3443 = vadd.f32 0.0, %v3442
        %v3444 = vpop.f32.mrb[0].mxu0
        %v3445 = vpop.f32.mrb[0].mxu0
        %v3446 = vadd.f32 0.0, %v3445
        %v3447 = vpop.f32.mrb[0].mxu0
        %3448 = vmatprep.mubr.bf16.mxu0 0
        %3449 = vmatmul.mubr.bf16.gmra.mrb[0].mxu0 %v3225
        %v3450 = vpop.f32.mrb[0].mxu0
        %v3451 = vadd.f32 0.0, %v3450
        %v3452 = vpop.f32.mrb[0].mxu0
        %v3453 = vpop.f32.mrb[0].mxu0
        %v3454 = vadd.f32 0.0, %v3453
        %v3455 = vpop.f32.mrb[0].mxu0
        %3456 = vmatprep.mubr.bf16.mxu0 0
        %3457 = vmatmul.mubr.bf16.gmra.mrb[0].mxu0 %v3234
        %v3458 = vpop.f32.mrb[0].mxu0
        %v3459 = vadd.f32 0.0, %v3458
        %v3460 = vpop.f32.mrb[0].mxu0
        %v3461 = vpop.f32.mrb[0].mxu0
        %v3462 = vadd.f32 0.0, %v3461
        %v3463 = vpop.f32.mrb[0].mxu0
        %3464 = vmatprep.mubr.bf16.mxu0 0
        %3465 = vmatmul.mubr.bf16.gmra.mrb[0].mxu0 %v3243
        %v3466 = vpop.f32.mrb[0].mxu0
        %v3467 = vadd.f32 0.0, %v3466
        %v3468 = vpop.f32.mrb[0].mxu0
        %v3469 = vpop.f32.mrb[0].mxu0
        %v3470 = vadd.f32 0.0, %v3469
        %v3471 = vpop.f32.mrb[0].mxu0
        %3472 = vmatprep.mubr.bf16.mxu0 0
        %3473 = vmatmul.mubr.bf16.gmra.mrb[0].mxu0 %v3252
        %v3474 = vpop.f32.mrb[0].mxu0
        %v3475 = vadd.f32 0.0, %v3474
        %v3476 = vpop.f32.mrb[0].mxu0
        %v3477 = vpop.f32.mrb[0].mxu0
        %v3478 = vadd.f32 0.0, %v3477
        %v3479 = vpop.f32.mrb[0].mxu0
        %3480 = vmatprep.mubr.bf16.mxu0 0
        %3481 = vmatmul.mubr.bf16.gmra.mrb[0].mxu0 %v3261
        %v3482 = vpop.f32.mrb[0].mxu0
        %v3483 = vadd.f32 0.0, %v3482
        %v3484 = vpop.f32.mrb[0].mxu0
        %v3485 = vpop.f32.mrb[0].mxu0
        %v3486 = vadd.f32 0.0, %v3485
        %v3487 = vpop.f32.mrb[0].mxu0
        %3488 = vmatprep.mubr.bf16.mxu0 0
        %3489 = vmatmul.mubr.bf16.gmra.mrb[0].mxu0 %v3270
        %v3490 = vpop.f32.mrb[0].mxu0
        %v3491 = vadd.f32 0.0, %v3490
        %v3492 = vpop.f32.mrb[0].mxu0
        %v3493 = vpop.f32.mrb[0].mxu0
        %v3494 = vadd.f32 0.0, %v3493
        %v3495 = vpop.f32.mrb[0].mxu0
        %3496 = vmatprep.mubr.bf16.mxu0 0
        %3497 = vmatmul.mubr.bf16.gmra.mrb[0].mxu0 %v3279
        %v3498 = vpop.f32.mrb[0].mxu0
        %v3499 = vadd.f32 0.0, %v3498
        %v3500 = vpop.f32.mrb[0].mxu0
        %v3501 = vpop.f32.mrb[0].mxu0
        %v3502 = vadd.f32 0.0, %v3501
        %v3503 = vpop.f32.mrb[0].mxu0
        %3504 = vdwg.mxu0
        %v3505 = vadd.f32 %v3045, %v3379
        %v3506 = vadd.f32 %v3046, %v3382
        %v3507 = vadd.f32 %v3047, %v3387
        %v3508 = vadd.f32 %v3048, %v3390
        %v3509 = vadd.f32 %v3049, %v3395
        %v3510 = vadd.f32 %v3050, %v3398
        %v3511 = vadd.f32 %v3051, %v3403
        %v3512 = vadd.f32 %v3052, %v3406
        %v3513 = vadd.f32 %v3053, %v3411
        %v3514 = vadd.f32 %v3054, %v3414
        %v3515 = vadd.f32 %v3055, %v3419
        %v3516 = vadd.f32 %v3056, %v3422
        %v3517 = vadd.f32 %v3057, %v3427
        %v3518 = vadd.f32 %v3058, %v3430
        %v3519 = vadd.f32 %v3059, %v3435
        %v3520 = vadd.f32 %v3060, %v3438
        %v3521 = vadd.f32 %v3061, %v3443
        %v3522 = vadd.f32 %v3062, %v3446
        %v3523 = vadd.f32 %v3063, %v3451
        %v3524 = vadd.f32 %v3064, %v3454
        %v3525 = vadd.f32 %v3065, %v3459
        %v3526 = vadd.f32 %v3066, %v3462
        %v3527 = vadd.f32 %v3067, %v3467
        %v3528 = vadd.f32 %v3068, %v3470
        %v3529 = vadd.f32 %v3069, %v3475
        %v3530 = vadd.f32 %v3070, %v3478
        %v3531 = vadd.f32 %v3071, %v3483
        %v3532 = vadd.f32 %v3072, %v3486
        %v3533 = vadd.f32 %v3073, %v3491
        %v3534 = vadd.f32 %v3074, %v3494
        %v3535 = vadd.f32 %v3075, %v3499
        %v3536 = vadd.f32 %v3076, %v3502
        %v3537 = vld [vmem:[#allocation2 + $0x8] sm:$0xf0]
        %s3538 = scalar_lea.vmem [#allocation8], 256
        %v3539 = vld [vmem:[%s3538] sm:$0xf]
        %v3540 = vld [vmem:[%s3538 + $0x4] sm:$0xf]
        %v3541 = vld [vmem:[%s3538 + $0x8] sm:$0xf]
        %v3542 = vld [vmem:[%s3538 + $0xc] sm:$0xf]
        %v3543 = vld [vmem:[%s3538 + $0x10] sm:$0xf]
        %v3544 = vld [vmem:[%s3538 + $0x14] sm:$0xf]
        %v3545 = vld [vmem:[%s3538 + $0x18] sm:$0xf]
        %v3546 = vld [vmem:[%s3538 + $0x1c] sm:$0xf]
        %v3547 = vld [vmem:[%s3538 + $0x20] sm:$0xf]
        %v3548 = vld [vmem:[%s3538 + $0x24] sm:$0xf]
        %v3549 = vld [vmem:[%s3538 + $0x28] sm:$0xf]
        %v3550 = vld [vmem:[%s3538 + $0x2c] sm:$0xf]
        %v3551 = vld [vmem:[%s3538 + $0x30] sm:$0xf]
        %v3552 = vld [vmem:[%s3538 + $0x34] sm:$0xf]
        %v3553 = vld [vmem:[%s3538 + $0x38] sm:$0xf]
        %v3554 = vld [vmem:[%s3538 + $0x3c] sm:$0xf]
        %v3572 = vrot.slane %v3537, 4
        %v3573 = vrot.slane %v3078, 4
        %v3574 = vsel %vm692, %v3572, %v3573
        %v3575 = vrot.slane %v3079, 4
        %v3576 = vsel %vm692, %v3573, %v3575
        %v3577 = vrot.slane %v3080, 4
        %v3578 = vsel %vm692, %v3575, %v3577
        %v3579 = vrot.slane %v3081, 4
        %v3580 = vsel %vm692, %v3577, %v3579
        %v3581 = vrot.slane %v3082, 4
        %v3582 = vsel %vm692, %v3579, %v3581
        %v3583 = vrot.slane %v3083, 4
        %v3584 = vsel %vm692, %v3581, %v3583
        %v3585 = vrot.slane %v3084, 4
        %v3586 = vsel %vm692, %v3583, %v3585
        %v3587 = vrot.slane %v3085, 4
        %v3588 = vsel %vm692, %v3585, %v3587
        %v3589 = vrot.slane %v3086, 4
        %v3590 = vsel %vm692, %v3587, %v3589
        %v3591 = vrot.slane %v3087, 4
        %v3592 = vsel %vm692, %v3589, %v3591
        %v3593 = vrot.slane %v3088, 4
        %v3594 = vsel %vm692, %v3591, %v3593
        %v3595 = vrot.slane %v3089, 4
        %v3596 = vsel %vm692, %v3593, %v3595
        %v3597 = vrot.slane %v3090, 4
        %v3598 = vsel %vm692, %v3595, %v3597
        %v3599 = vrot.slane %v3091, 4
        %v3600 = vsel %vm692, %v3597, %v3599
        %v3601 = vrot.slane %v3092, 4
        %v3602 = vsel %vm692, %v3599, %v3601
        %v3603 = vrot.slane %v3093, 4
        %v3604 = vsel %vm692, %v3601, %v3603
        %v3637 = vunpack.c.l.b16 %v3539
        %v3638 = vunpack.c.l.b16 %v3540
        %v3639 = vunpack.c.l.b16 %v3541
        %v3640 = vunpack.c.l.b16 %v3542
        %v3641 = vunpack.c.l.b16 %v3543
        %v3642 = vunpack.c.l.b16 %v3544
        %v3643 = vunpack.c.l.b16 %v3545
        %v3644 = vunpack.c.l.b16 %v3546
        %v3645 = vunpack.c.l.b16 %v3547
        %v3646 = vunpack.c.l.b16 %v3548
        %v3647 = vunpack.c.l.b16 %v3549
        %v3648 = vunpack.c.l.b16 %v3550
        %v3649 = vunpack.c.l.b16 %v3551
        %v3650 = vunpack.c.l.b16 %v3552
        %v3651 = vunpack.c.l.b16 %v3553
        %v3652 = vunpack.c.l.b16 %v3554
        %v3653 = vpack.c.b16 %v3638, %v3637
        %v3654 = vpack.c.b16 %v3640, %v3639
        %v3655 = vpack.c.b16 %v3642, %v3641
        %v3656 = vpack.c.b16 %v3644, %v3643
        %v3657 = vpack.c.b16 %v3646, %v3645
        %v3658 = vpack.c.b16 %v3648, %v3647
        %v3659 = vpack.c.b16 %v3650, %v3649
        %v3660 = vpack.c.b16 %v3652, %v3651
        %3669 = vmatprep.subr.bf16.mxu0 0
        %3670 = vmatpush1.bf16.msra.mxu0 %v3653
        %3671 = vmatprep.subr.bf16.mxu0 0
        %3672 = vmatpush1.bf16.msra.mxu0 %v3654
        %3673 = vmatprep.subr.bf16.mxu0 0
        %3674 = vmatpush1.bf16.msra.mxu0 %v3655
        %3675 = vmatprep.subr.bf16.mxu0 0
        %3676 = vmatpush1.bf16.msra.mxu0 %v3656
        %3677 = vmatprep.subr.bf16.mxu0 0
        %3678 = vmatpush1.bf16.msra.mxu0 %v3657
        %3679 = vmatprep.subr.bf16.mxu0 0
        %3680 = vmatpush1.bf16.msra.mxu0 %v3658
        %3681 = vmatprep.subr.bf16.mxu0 0
        %3682 = vmatpush1.bf16.msra.mxu0 %v3659
        %3683 = vmatprep.subr.bf16.mxu0 0
        %3684 = vmatpush1.bf16.msra.mxu0 %v3660
        %3685 = vmatprep.subr.bf16.mxu0 0
        %3686 = vmatpush1.bf16.msra.mxu0 0
        %3687 = vmatprep.subr.bf16.mxu0 0
        %3688 = vmatpush1.bf16.msra.mxu0 0
        %3689 = vmatprep.subr.bf16.mxu0 0
        %3690 = vmatpush1.bf16.msra.mxu0 0
        %3691 = vmatprep.subr.bf16.mxu0 0
        %3692 = vmatpush1.bf16.msra.mxu0 0
        %3693 = vmatprep.subr.bf16.mxu0 0
        %3694 = vmatpush1.bf16.msra.mxu0 0
        %3695 = vmatprep.subr.bf16.mxu0 0
        %3696 = vmatpush1.bf16.msra.mxu0 0
        %3697 = vmatprep.subr.bf16.mxu0 0
        %3698 = vmatpush1.bf16.msra.mxu0 0
        %3699 = vmatprep.subr.bf16.mxu0 0
        %3700 = vmatpush1.bf16.msra.mxu0 0
        %3701 = vmatprep.mubr.bf16.mxu0 0
        %3702 = vmatmul.mubr.bf16.gmra.mrb[0].mxu0 %v3574
        %v3703 = vpop.f32.mrb[0].mxu0
        %v3704 = vadd.f32 0.0, %v3703
        %v3705 = vpop.f32.mrb[0].mxu0
        %v3706 = vpop.f32.mrb[0].mxu0
        %v3707 = vadd.f32 0.0, %v3706
        %v3708 = vpop.f32.mrb[0].mxu0
        %3709 = vmatprep.mubr.bf16.mxu0 0
        %3710 = vmatmul.mubr.bf16.gmra.mrb[0].mxu0 %v3576
        %v3711 = vpop.f32.mrb[0].mxu0
        %v3712 = vadd.f32 0.0, %v3711
        %v3713 = vpop.f32.mrb[0].mxu0
        %v3714 = vpop.f32.mrb[0].mxu0
        %v3715 = vadd.f32 0.0, %v3714
        %v3716 = vpop.f32.mrb[0].mxu0
        %3717 = vmatprep.mubr.bf16.mxu0 0
        %3718 = vmatmul.mubr.bf16.gmra.mrb[0].mxu0 %v3578
        %v3719 = vpop.f32.mrb[0].mxu0
        %v3720 = vadd.f32 0.0, %v3719
        %v3721 = vpop.f32.mrb[0].mxu0
        %v3722 = vpop.f32.mrb[0].mxu0
        %v3723 = vadd.f32 0.0, %v3722
        %v3724 = vpop.f32.mrb[0].mxu0
        %3725 = vmatprep.mubr.bf16.mxu0 0
        %3726 = vmatmul.mubr.bf16.gmra.mrb[0].mxu0 %v3580
        %v3727 = vpop.f32.mrb[0].mxu0
        %v3728 = vadd.f32 0.0, %v3727
        %v3729 = vpop.f32.mrb[0].mxu0
        %v3730 = vpop.f32.mrb[0].mxu0
        %v3731 = vadd.f32 0.0, %v3730
        %v3732 = vpop.f32.mrb[0].mxu0
        %3733 = vmatprep.mubr.bf16.mxu0 0
        %3734 = vmatmul.mubr.bf16.gmra.mrb[0].mxu0 %v3582
        %v3735 = vpop.f32.mrb[0].mxu0
        %v3736 = vadd.f32 0.0, %v3735
        %v3737 = vpop.f32.mrb[0].mxu0
        %v3738 = vpop.f32.mrb[0].mxu0
        %v3739 = vadd.f32 0.0, %v3738
        %v3740 = vpop.f32.mrb[0].mxu0
        %3741 = vmatprep.mubr.bf16.mxu0 0
        %3742 = vmatmul.mubr.bf16.gmra.mrb[0].mxu0 %v3584
        %v3743 = vpop.f32.mrb[0].mxu0
        %v3744 = vadd.f32 0.0, %v3743
        %v3745 = vpop.f32.mrb[0].mxu0
        %v3746 = vpop.f32.mrb[0].mxu0
        %v3747 = vadd.f32 0.0, %v3746
        %v3748 = vpop.f32.mrb[0].mxu0
        %3749 = vmatprep.mubr.bf16.mxu0 0
        %3750 = vmatmul.mubr.bf16.gmra.mrb[0].mxu0 %v3586
        %v3751 = vpop.f32.mrb[0].mxu0
        %v3752 = vadd.f32 0.0, %v3751
        %v3753 = vpop.f32.mrb[0].mxu0
        %v3754 = vpop.f32.mrb[0].mxu0
        %v3755 = vadd.f32 0.0, %v3754
        %v3756 = vpop.f32.mrb[0].mxu0
        %3757 = vmatprep.mubr.bf16.mxu0 0
        %3758 = vmatmul.mubr.bf16.gmra.mrb[0].mxu0 %v3588
        %v3759 = vpop.f32.mrb[0].mxu0
        %v3760 = vadd.f32 0.0, %v3759
        %v3761 = vpop.f32.mrb[0].mxu0
        %v3762 = vpop.f32.mrb[0].mxu0
        %v3763 = vadd.f32 0.0, %v3762
        %v3764 = vpop.f32.mrb[0].mxu0
        %3765 = vmatprep.mubr.bf16.mxu0 0
        %3766 = vmatmul.mubr.bf16.gmra.mrb[0].mxu0 %v3590
        %v3767 = vpop.f32.mrb[0].mxu0
        %v3768 = vadd.f32 0.0, %v3767
        %v3769 = vpop.f32.mrb[0].mxu0
        %v3770 = vpop.f32.mrb[0].mxu0
        %v3771 = vadd.f32 0.0, %v3770
        %v3772 = vpop.f32.mrb[0].mxu0
        %3773 = vmatprep.mubr.bf16.mxu0 0
        %3774 = vmatmul.mubr.bf16.gmra.mrb[0].mxu0 %v3592
        %v3775 = vpop.f32.mrb[0].mxu0
        %v3776 = vadd.f32 0.0, %v3775
        %v3777 = vpop.f32.mrb[0].mxu0
        %v3778 = vpop.f32.mrb[0].mxu0
        %v3779 = vadd.f32 0.0, %v3778
        %v3780 = vpop.f32.mrb[0].mxu0
        %3781 = vmatprep.mubr.bf16.mxu0 0
        %3782 = vmatmul.mubr.bf16.gmra.mrb[0].mxu0 %v3594
        %v3783 = vpop.f32.mrb[0].mxu0
        %v3784 = vadd.f32 0.0, %v3783
        %v3785 = vpop.f32.mrb[0].mxu0
        %v3786 = vpop.f32.mrb[0].mxu0
        %v3787 = vadd.f32 0.0, %v3786
        %v3788 = vpop.f32.mrb[0].mxu0
        %3789 = vmatprep.mubr.bf16.mxu0 0
        %3790 = vmatmul.mubr.bf16.gmra.mrb[0].mxu0 %v3596
        %v3791 = vpop.f32.mrb[0].mxu0
        %v3792 = vadd.f32 0.0, %v3791
        %v3793 = vpop.f32.mrb[0].mxu0
        %v3794 = vpop.f32.mrb[0].mxu0
        %v3795 = vadd.f32 0.0, %v3794
        %v3796 = vpop.f32.mrb[0].mxu0
        %3797 = vmatprep.mubr.bf16.mxu0 0
        %3798 = vmatmul.mubr.bf16.gmra.mrb[0].mxu0 %v3598
        %v3799 = vpop.f32.mrb[0].mxu0
        %v3800 = vadd.f32 0.0, %v3799
        %v3801 = vpop.f32.mrb[0].mxu0
        %v3802 = vpop.f32.mrb[0].mxu0
        %v3803 = vadd.f32 0.0, %v3802
        %v3804 = vpop.f32.mrb[0].mxu0
        %3805 = vmatprep.mubr.bf16.mxu0 0
        %3806 = vmatmul.mubr.bf16.gmra.mrb[0].mxu0 %v3600
        %v3807 = vpop.f32.mrb[0].mxu0
        %v3808 = vadd.f32 0.0, %v3807
        %v3809 = vpop.f32.mrb[0].mxu0
        %v3810 = vpop.f32.mrb[0].mxu0
        %v3811 = vadd.f32 0.0, %v3810
        %v3812 = vpop.f32.mrb[0].mxu0
        %3813 = vmatprep.mubr.bf16.mxu0 0
        %3814 = vmatmul.mubr.bf16.gmra.mrb[0].mxu0 %v3602
        %v3815 = vpop.f32.mrb[0].mxu0
        %v3816 = vadd.f32 0.0, %v3815
        %v3817 = vpop.f32.mrb[0].mxu0
        %v3818 = vpop.f32.mrb[0].mxu0
        %v3819 = vadd.f32 0.0, %v3818
        %v3820 = vpop.f32.mrb[0].mxu0
        %3821 = vmatprep.mubr.bf16.mxu0 0
        %3822 = vmatmul.mubr.bf16.gmra.mrb[0].mxu0 %v3604
        %v3823 = vpop.f32.mrb[0].mxu0
        %v3824 = vadd.f32 0.0, %v3823
        %v3825 = vpop.f32.mrb[0].mxu0
        %v3826 = vpop.f32.mrb[0].mxu0
        %v3827 = vadd.f32 0.0, %v3826
        %v3828 = vpop.f32.mrb[0].mxu0
        %3829 = vdwg.mxu0
        %v3830 = vadd.f32 %v3505, %v3704
        %v3831 = vadd.f32 %v3506, %v3707
        %v3832 = vadd.f32 %v3507, %v3712
        %v3833 = vadd.f32 %v3508, %v3715
        %v3834 = vadd.f32 %v3509, %v3720
        %v3835 = vadd.f32 %v3510, %v3723
        %v3836 = vadd.f32 %v3511, %v3728
        %v3837 = vadd.f32 %v3512, %v3731
        %v3838 = vadd.f32 %v3513, %v3736
        %v3839 = vadd.f32 %v3514, %v3739
        %v3840 = vadd.f32 %v3515, %v3744
        %v3841 = vadd.f32 %v3516, %v3747
        %v3842 = vadd.f32 %v3517, %v3752
        %v3843 = vadd.f32 %v3518, %v3755
        %v3844 = vadd.f32 %v3519, %v3760
        %v3845 = vadd.f32 %v3520, %v3763
        %v3846 = vadd.f32 %v3521, %v3768
        %v3847 = vadd.f32 %v3522, %v3771
        %v3848 = vadd.f32 %v3523, %v3776
        %v3849 = vadd.f32 %v3524, %v3779
        %v3850 = vadd.f32 %v3525, %v3784
        %v3851 = vadd.f32 %v3526, %v3787
        %v3852 = vadd.f32 %v3527, %v3792
        %v3853 = vadd.f32 %v3528, %v3795
        %v3854 = vadd.f32 %v3529, %v3800
        %v3855 = vadd.f32 %v3530, %v3803
        %v3856 = vadd.f32 %v3531, %v3808
        %v3857 = vadd.f32 %v3532, %v3811
        %v3858 = vadd.f32 %v3533, %v3816
        %v3859 = vadd.f32 %v3534, %v3819
        %v3860 = vadd.f32 %v3535, %v3824
        %v3861 = vadd.f32 %v3536, %v3827
        %v3862 = vld [vmem:[#allocation2 + $0x88] sm:$0x1f]
        %v3863 = vsel %vm2617, %v3537, 0
        %v3864 = vsel %vm2618, %v3078, 0
        %v3865 = vsel %vm2619, %v3079, 0
        %v3866 = vsel %vm2620, %v3080, 0
        %v3867 = vsel %vm2621, %v3081, 0
        %v3868 = vsel %vm2622, %v3082, 0
        %v3869 = vsel %vm2623, %v3083, 0
        %v3870 = vsel %vm2624, %v3084, 0
        %v3871 = vsel %vm2625, %v3085, 0
        %v3872 = vsel %vm2626, %v3086, 0
        %v3873 = vsel %vm2627, %v3087, 0
        %v3874 = vsel %vm2628, %v3088, 0
        %v3875 = vsel %vm2629, %v3089, 0
        %v3876 = vsel %vm2630, %v3090, 0
        %v3877 = vsel %vm2631, %v3091, 0
        %v3878 = vsel %vm2632, %v3092, 0
        %v3879 = vsel %vm2633, %v3862, 0
        %s3880 = scalar_lea.vmem [#allocation8], 320
        %v3881 = vld [vmem:[%s3880] sm:$0xf]
        %v3882 = vld [vmem:[%s3880 + $0x4] sm:$0xf]
        %v3883 = vld [vmem:[%s3880 + $0x8] sm:$0xf]
        %v3884 = vld [vmem:[%s3880 + $0xc] sm:$0xf]
        %v3885 = vld [vmem:[%s3880 + $0x10] sm:$0xf]
        %v3886 = vld [vmem:[%s3880 + $0x14] sm:$0xf]
        %v3887 = vld [vmem:[%s3880 + $0x18] sm:$0xf]
        %v3888 = vld [vmem:[%s3880 + $0x1c] sm:$0xf]
        %v3889 = vld [vmem:[%s3880 + $0x20] sm:$0xf]
        %v3890 = vld [vmem:[%s3880 + $0x24] sm:$0xf]
        %v3891 = vld [vmem:[%s3880 + $0x28] sm:$0xf]
        %v3892 = vld [vmem:[%s3880 + $0x2c] sm:$0xf]
        %v3893 = vld [vmem:[%s3880 + $0x30] sm:$0xf]
        %v3894 = vld [vmem:[%s3880 + $0x34] sm:$0xf]
        %v3895 = vld [vmem:[%s3880 + $0x38] sm:$0xf]
        %v3896 = vld [vmem:[%s3880 + $0x3c] sm:$0xf]
        %v3898 = vshrl.u32 %v3863, 16
        %v3900 = vrot.slane %v3898, 4
        %v3901 = vshll.u32 %v3863, 16
        %v3903 = vrot.slane %v3901, 5
        %v3904 = vor.u32 %v3900, %v3903
        %v3906 = vshrl.u32 %v3864, 16
        %v3908 = vrot.slane %v3906, 4
        %v3909 = vshll.u32 %v3864, 16
        %v3911 = vrot.slane %v3909, 5
        %v3912 = vor.u32 %v3908, %v3911
        %v3913 = vsel %vm1432, %v3904, %v3912
        %v3915 = vshrl.u32 %v3865, 16
        %v3917 = vrot.slane %v3915, 4
        %v3918 = vshll.u32 %v3865, 16
        %v3920 = vrot.slane %v3918, 5
        %v3921 = vor.u32 %v3917, %v3920
        %v3922 = vsel %vm1432, %v3912, %v3921
        %v3924 = vshrl.u32 %v3866, 16
        %v3926 = vrot.slane %v3924, 4
        %v3927 = vshll.u32 %v3866, 16
        %v3929 = vrot.slane %v3927, 5
        %v3930 = vor.u32 %v3926, %v3929
        %v3931 = vsel %vm1432, %v3921, %v3930
        %v3933 = vshrl.u32 %v3867, 16
        %v3935 = vrot.slane %v3933, 4
        %v3936 = vshll.u32 %v3867, 16
        %v3938 = vrot.slane %v3936, 5
        %v3939 = vor.u32 %v3935, %v3938
        %v3940 = vsel %vm1432, %v3930, %v3939
        %v3942 = vshrl.u32 %v3868, 16
        %v3944 = vrot.slane %v3942, 4
        %v3945 = vshll.u32 %v3868, 16
        %v3947 = vrot.slane %v3945, 5
        %v3948 = vor.u32 %v3944, %v3947
        %v3949 = vsel %vm1432, %v3939, %v3948
        %v3951 = vshrl.u32 %v3869, 16
        %v3953 = vrot.slane %v3951, 4
        %v3954 = vshll.u32 %v3869, 16
        %v3956 = vrot.slane %v3954, 5
        %v3957 = vor.u32 %v3953, %v3956
        %v3958 = vsel %vm1432, %v3948, %v3957
        %v3960 = vshrl.u32 %v3870, 16
        %v3962 = vrot.slane %v3960, 4
        %v3963 = vshll.u32 %v3870, 16
        %v3965 = vrot.slane %v3963, 5
        %v3966 = vor.u32 %v3962, %v3965
        %v3967 = vsel %vm1432, %v3957, %v3966
        %v3969 = vshrl.u32 %v3871, 16
        %v3971 = vrot.slane %v3969, 4
        %v3972 = vshll.u32 %v3871, 16
        %v3974 = vrot.slane %v3972, 5
        %v3975 = vor.u32 %v3971, %v3974
        %v3976 = vsel %vm1432, %v3966, %v3975
        %v3978 = vshrl.u32 %v3872, 16
        %v3980 = vrot.slane %v3978, 4
        %v3981 = vshll.u32 %v3872, 16
        %v3983 = vrot.slane %v3981, 5
        %v3984 = vor.u32 %v3980, %v3983
        %v3985 = vsel %vm1432, %v3975, %v3984
        %v3987 = vshrl.u32 %v3873, 16
        %v3989 = vrot.slane %v3987, 4
        %v3990 = vshll.u32 %v3873, 16
        %v3992 = vrot.slane %v3990, 5
        %v3993 = vor.u32 %v3989, %v3992
        %v3994 = vsel %vm1432, %v3984, %v3993
        %v3996 = vshrl.u32 %v3874, 16
        %v3998 = vrot.slane %v3996, 4
        %v3999 = vshll.u32 %v3874, 16
        %v4001 = vrot.slane %v3999, 5
        %v4002 = vor.u32 %v3998, %v4001
        %v4003 = vsel %vm1432, %v3993, %v4002
        %v4005 = vshrl.u32 %v3875, 16
        %v4007 = vrot.slane %v4005, 4
        %v4008 = vshll.u32 %v3875, 16
        %v4010 = vrot.slane %v4008, 5
        %v4011 = vor.u32 %v4007, %v4010
        %v4012 = vsel %vm1432, %v4002, %v4011
        %v4014 = vshrl.u32 %v3876, 16
        %v4016 = vrot.slane %v4014, 4
        %v4017 = vshll.u32 %v3876, 16
        %v4019 = vrot.slane %v4017, 5
        %v4020 = vor.u32 %v4016, %v4019
        %v4021 = vsel %vm1432, %v4011, %v4020
        %v4023 = vshrl.u32 %v3877, 16
        %v4025 = vrot.slane %v4023, 4
        %v4026 = vshll.u32 %v3877, 16
        %v4028 = vrot.slane %v4026, 5
        %v4029 = vor.u32 %v4025, %v4028
        %v4030 = vsel %vm1432, %v4020, %v4029
        %v4032 = vshrl.u32 %v3878, 16
        %v4034 = vrot.slane %v4032, 4
        %v4035 = vshll.u32 %v3878, 16
        %v4037 = vrot.slane %v4035, 5
        %v4038 = vor.u32 %v4034, %v4037
        %v4039 = vsel %vm1432, %v4029, %v4038
        %v4041 = vshrl.u32 %v3879, 16
        %v4043 = vrot.slane %v4041, 4
        %v4044 = vshll.u32 %v3879, 16
        %v4046 = vrot.slane %v4044, 5
        %v4047 = vor.u32 %v4043, %v4046
        %v4048 = vsel %vm1432, %v4038, %v4047
        %v4081 = vunpack.c.l.b16 %v3881
        %v4082 = vunpack.c.l.b16 %v3882
        %v4083 = vunpack.c.l.b16 %v3883
        %v4084 = vunpack.c.l.b16 %v3884
        %v4085 = vunpack.c.l.b16 %v3885
        %v4086 = vunpack.c.l.b16 %v3886
        %v4087 = vunpack.c.l.b16 %v3887
        %v4088 = vunpack.c.l.b16 %v3888
        %v4089 = vunpack.c.l.b16 %v3889
        %v4090 = vunpack.c.l.b16 %v3890
        %v4091 = vunpack.c.l.b16 %v3891
        %v4092 = vunpack.c.l.b16 %v3892
        %v4093 = vunpack.c.l.b16 %v3893
        %v4094 = vunpack.c.l.b16 %v3894
        %v4095 = vunpack.c.l.b16 %v3895
        %v4096 = vunpack.c.l.b16 %v3896
        %v4097 = vpack.c.b16 %v4082, %v4081
        %v4098 = vpack.c.b16 %v4084, %v4083
        %v4099 = vpack.c.b16 %v4086, %v4085
        %v4100 = vpack.c.b16 %v4088, %v4087
        %v4101 = vpack.c.b16 %v4090, %v4089
        %v4102 = vpack.c.b16 %v4092, %v4091
        %v4103 = vpack.c.b16 %v4094, %v4093
        %v4104 = vpack.c.b16 %v4096, %v4095
        %4113 = vmatprep.subr.bf16.mxu0 0
        %4114 = vmatpush1.bf16.msra.mxu0 %v4097
        %4115 = vmatprep.subr.bf16.mxu0 0
        %4116 = vmatpush1.bf16.msra.mxu0 %v4098
        %4117 = vmatprep.subr.bf16.mxu0 0
        %4118 = vmatpush1.bf16.msra.mxu0 %v4099
        %4119 = vmatprep.subr.bf16.mxu0 0
        %4120 = vmatpush1.bf16.msra.mxu0 %v4100
        %4121 = vmatprep.subr.bf16.mxu0 0
        %4122 = vmatpush1.bf16.msra.mxu0 %v4101
        %4123 = vmatprep.subr.bf16.mxu0 0
        %4124 = vmatpush1.bf16.msra.mxu0 %v4102
        %4125 = vmatprep.subr.bf16.mxu0 0
        %4126 = vmatpush1.bf16.msra.mxu0 %v4103
        %4127 = vmatprep.subr.bf16.mxu0 0
        %4128 = vmatpush1.bf16.msra.mxu0 %v4104
        %4129 = vmatprep.subr.bf16.mxu0 0
        %4130 = vmatpush1.bf16.msra.mxu0 0
        %4131 = vmatprep.subr.bf16.mxu0 0
        %4132 = vmatpush1.bf16.msra.mxu0 0
        %4133 = vmatprep.subr.bf16.mxu0 0
        %4134 = vmatpush1.bf16.msra.mxu0 0
        %4135 = vmatprep.subr.bf16.mxu0 0
        %4136 = vmatpush1.bf16.msra.mxu0 0
        %4137 = vmatprep.subr.bf16.mxu0 0
        %4138 = vmatpush1.bf16.msra.mxu0 0
        %4139 = vmatprep.subr.bf16.mxu0 0
        %4140 = vmatpush1.bf16.msra.mxu0 0
        %4141 = vmatprep.subr.bf16.mxu0 0
        %4142 = vmatpush1.bf16.msra.mxu0 0
        %4143 = vmatprep.subr.bf16.mxu0 0
        %4144 = vmatpush1.bf16.msra.mxu0 0
        %4145 = vmatprep.mubr.bf16.mxu0 0
        %4146 = vmatmul.mubr.bf16.gmra.mrb[0].mxu0 %v3913
        %v4147 = vpop.f32.mrb[0].mxu0
        %v4148 = vadd.f32 0.0, %v4147
        %v4149 = vpop.f32.mrb[0].mxu0
        %v4150 = vpop.f32.mrb[0].mxu0
        %v4151 = vadd.f32 0.0, %v4150
        %v4152 = vpop.f32.mrb[0].mxu0
        %4153 = vmatprep.mubr.bf16.mxu0 0
        %4154 = vmatmul.mubr.bf16.gmra.mrb[0].mxu0 %v3922
        %v4155 = vpop.f32.mrb[0].mxu0
        %v4156 = vadd.f32 0.0, %v4155
        %v4157 = vpop.f32.mrb[0].mxu0
        %v4158 = vpop.f32.mrb[0].mxu0
        %v4159 = vadd.f32 0.0, %v4158
        %v4160 = vpop.f32.mrb[0].mxu0
        %4161 = vmatprep.mubr.bf16.mxu0 0
        %4162 = vmatmul.mubr.bf16.gmra.mrb[0].mxu0 %v3931
        %v4163 = vpop.f32.mrb[0].mxu0
        %v4164 = vadd.f32 0.0, %v4163
        %v4165 = vpop.f32.mrb[0].mxu0
        %v4166 = vpop.f32.mrb[0].mxu0
        %v4167 = vadd.f32 0.0, %v4166
        %v4168 = vpop.f32.mrb[0].mxu0
        %4169 = vmatprep.mubr.bf16.mxu0 0
        %4170 = vmatmul.mubr.bf16.gmra.mrb[0].mxu0 %v3940
        %v4171 = vpop.f32.mrb[0].mxu0
        %v4172 = vadd.f32 0.0, %v4171
        %v4173 = vpop.f32.mrb[0].mxu0
        %v4174 = vpop.f32.mrb[0].mxu0
        %v4175 = vadd.f32 0.0, %v4174
        %v4176 = vpop.f32.mrb[0].mxu0
        %4177 = vmatprep.mubr.bf16.mxu0 0
        %4178 = vmatmul.mubr.bf16.gmra.mrb[0].mxu0 %v3949
        %v4179 = vpop.f32.mrb[0].mxu0
        %v4180 = vadd.f32 0.0, %v4179
        %v4181 = vpop.f32.mrb[0].mxu0
        %v4182 = vpop.f32.mrb[0].mxu0
        %v4183 = vadd.f32 0.0, %v4182
        %v4184 = vpop.f32.mrb[0].mxu0
        %4185 = vmatprep.mubr.bf16.mxu0 0
        %4186 = vmatmul.mubr.bf16.gmra.mrb[0].mxu0 %v3958
        %v4187 = vpop.f32.mrb[0].mxu0
        %v4188 = vadd.f32 0.0, %v4187
        %v4189 = vpop.f32.mrb[0].mxu0
        %v4190 = vpop.f32.mrb[0].mxu0
        %v4191 = vadd.f32 0.0, %v4190
        %v4192 = vpop.f32.mrb[0].mxu0
        %4193 = vmatprep.mubr.bf16.mxu0 0
        %4194 = vmatmul.mubr.bf16.gmra.mrb[0].mxu0 %v3967
        %v4195 = vpop.f32.mrb[0].mxu0
        %v4196 = vadd.f32 0.0, %v4195
        %v4197 = vpop.f32.mrb[0].mxu0
        %v4198 = vpop.f32.mrb[0].mxu0
        %v4199 = vadd.f32 0.0, %v4198
        %v4200 = vpop.f32.mrb[0].mxu0
        %4201 = vmatprep.mubr.bf16.mxu0 0
        %4202 = vmatmul.mubr.bf16.gmra.mrb[0].mxu0 %v3976
        %v4203 = vpop.f32.mrb[0].mxu0
        %v4204 = vadd.f32 0.0, %v4203
        %v4205 = vpop.f32.mrb[0].mxu0
        %v4206 = vpop.f32.mrb[0].mxu0
        %v4207 = vadd.f32 0.0, %v4206
        %v4208 = vpop.f32.mrb[0].mxu0
        %4209 = vmatprep.mubr.bf16.mxu0 0
        %4210 = vmatmul.mubr.bf16.gmra.mrb[0].mxu0 %v3985
        %v4211 = vpop.f32.mrb[0].mxu0
        %v4212 = vadd.f32 0.0, %v4211
        %v4213 = vpop.f32.mrb[0].mxu0
        %v4214 = vpop.f32.mrb[0].mxu0
        %v4215 = vadd.f32 0.0, %v4214
        %v4216 = vpop.f32.mrb[0].mxu0
        %4217 = vmatprep.mubr.bf16.mxu0 0
        %4218 = vmatmul.mubr.bf16.gmra.mrb[0].mxu0 %v3994
        %v4219 = vpop.f32.mrb[0].mxu0
        %v4220 = vadd.f32 0.0, %v4219
        %v4221 = vpop.f32.mrb[0].mxu0
        %v4222 = vpop.f32.mrb[0].mxu0
        %v4223 = vadd.f32 0.0, %v4222
        %v4224 = vpop.f32.mrb[0].mxu0
        %4225 = vmatprep.mubr.bf16.mxu0 0
        %4226 = vmatmul.mubr.bf16.gmra.mrb[0].mxu0 %v4003
        %v4227 = vpop.f32.mrb[0].mxu0
        %v4228 = vadd.f32 0.0, %v4227
        %v4229 = vpop.f32.mrb[0].mxu0
        %v4230 = vpop.f32.mrb[0].mxu0
        %v4231 = vadd.f32 0.0, %v4230
        %v4232 = vpop.f32.mrb[0].mxu0
        %4233 = vmatprep.mubr.bf16.mxu0 0
        %4234 = vmatmul.mubr.bf16.gmra.mrb[0].mxu0 %v4012
        %v4235 = vpop.f32.mrb[0].mxu0
        %v4236 = vadd.f32 0.0, %v4235
        %v4237 = vpop.f32.mrb[0].mxu0
        %v4238 = vpop.f32.mrb[0].mxu0
        %v4239 = vadd.f32 0.0, %v4238
        %v4240 = vpop.f32.mrb[0].mxu0
        %4241 = vmatprep.mubr.bf16.mxu0 0
        %4242 = vmatmul.mubr.bf16.gmra.mrb[0].mxu0 %v4021
        %v4243 = vpop.f32.mrb[0].mxu0
        %v4244 = vadd.f32 0.0, %v4243
        %v4245 = vpop.f32.mrb[0].mxu0
        %v4246 = vpop.f32.mrb[0].mxu0
        %v4247 = vadd.f32 0.0, %v4246
        %v4248 = vpop.f32.mrb[0].mxu0
        %4249 = vmatprep.mubr.bf16.mxu0 0
        %4250 = vmatmul.mubr.bf16.gmra.mrb[0].mxu0 %v4030
        %v4251 = vpop.f32.mrb[0].mxu0
        %v4252 = vadd.f32 0.0, %v4251
        %v4253 = vpop.f32.mrb[0].mxu0
        %v4254 = vpop.f32.mrb[0].mxu0
        %v4255 = vadd.f32 0.0, %v4254
        %v4256 = vpop.f32.mrb[0].mxu0
        %4257 = vmatprep.mubr.bf16.mxu0 0
        %4258 = vmatmul.mubr.bf16.gmra.mrb[0].mxu0 %v4039
        %v4259 = vpop.f32.mrb[0].mxu0
        %v4260 = vadd.f32 0.0, %v4259
        %v4261 = vpop.f32.mrb[0].mxu0
        %v4262 = vpop.f32.mrb[0].mxu0
        %v4263 = vadd.f32 0.0, %v4262
        %v4264 = vpop.f32.mrb[0].mxu0
        %4265 = vmatprep.mubr.bf16.mxu0 0
        %4266 = vmatmul.mubr.bf16.gmra.mrb[0].mxu0 %v4048
        %v4267 = vpop.f32.mrb[0].mxu0
        %v4268 = vadd.f32 0.0, %v4267
        %v4269 = vpop.f32.mrb[0].mxu0
        %v4270 = vpop.f32.mrb[0].mxu0
        %v4271 = vadd.f32 0.0, %v4270
        %v4272 = vpop.f32.mrb[0].mxu0
        %4273 = vdwg.mxu0
        %v4274 = vadd.f32 %v3830, %v4148
        %v4275 = vadd.f32 %v3831, %v4151
        %v4276 = vadd.f32 %v3832, %v4156
        %v4277 = vadd.f32 %v3833, %v4159
        %v4278 = vadd.f32 %v3834, %v4164
        %v4279 = vadd.f32 %v3835, %v4167
        %v4280 = vadd.f32 %v3836, %v4172
        %v4281 = vadd.f32 %v3837, %v4175
        %v4282 = vadd.f32 %v3838, %v4180
        %v4283 = vadd.f32 %v3839, %v4183
        %v4284 = vadd.f32 %v3840, %v4188
        %v4285 = vadd.f32 %v3841, %v4191
        %v4286 = vadd.f32 %v3842, %v4196
        %v4287 = vadd.f32 %v3843, %v4199
        %v4288 = vadd.f32 %v3844, %v4204
        %v4289 = vadd.f32 %v3845, %v4207
        %v4290 = vadd.f32 %v3846, %v4212
        %v4291 = vadd.f32 %v3847, %v4215
        %v4292 = vadd.f32 %v3848, %v4220
        %v4293 = vadd.f32 %v3849, %v4223
        %v4294 = vadd.f32 %v3850, %v4228
        %v4295 = vadd.f32 %v3851, %v4231
        %v4296 = vadd.f32 %v3852, %v4236
        %v4297 = vadd.f32 %v3853, %v4239
        %v4298 = vadd.f32 %v3854, %v4244
        %v4299 = vadd.f32 %v3855, %v4247
        %v4300 = vadd.f32 %v3856, %v4252
        %v4301 = vadd.f32 %v3857, %v4255
        %v4302 = vadd.f32 %v3858, %v4260
        %v4303 = vadd.f32 %v3859, %v4263
        %v4304 = vadd.f32 %v3860, %v4268
        %v4305 = vadd.f32 %v3861, %v4271
        %v4306 = vld [vmem:[#allocation2 + $0x10] sm:$0xf8]
        %v4307 = vld [vmem:[#allocation2 + $0x18] sm:$0xff]
        %v4308 = vld [vmem:[#allocation2 + $0x20] sm:$0xff]
        %v4309 = vld [vmem:[#allocation2 + $0x28] sm:$0xff]
        %v4310 = vld [vmem:[#allocation2 + $0x30] sm:$0xff]
        %v4311 = vld [vmem:[#allocation2 + $0x38] sm:$0xff]
        %v4312 = vld [vmem:[#allocation2 + $0x40] sm:$0xff]
        %v4313 = vld [vmem:[#allocation2 + $0x48] sm:$0xff]
        %v4314 = vld [vmem:[#allocation2 + $0x50] sm:$0xff]
        %v4315 = vld [vmem:[#allocation2 + $0x58] sm:$0xff]
        %v4316 = vld [vmem:[#allocation2 + $0x60] sm:$0xff]
        %v4317 = vld [vmem:[#allocation2 + $0x68] sm:$0xff]
        %v4318 = vld [vmem:[#allocation2 + $0x70] sm:$0xff]
        %v4319 = vld [vmem:[#allocation2 + $0x78] sm:$0xff]
        %v4320 = vld [vmem:[#allocation2 + $0x80] sm:$0xff]
        %v4321 = vld [vmem:[#allocation2 + $0x88] sm:$0xff]
        %v4322 = vld [vmem:[#allocation2 + $0x90] sm:$0xf]
        %v4323 = vsel %vm1576, %v4306, 0
        %v4324 = vsel %vm1577, %v4307, 0
        %v4325 = vsel %vm1578, %v4308, 0
        %v4326 = vsel %vm1579, %v4309, 0
        %v4327 = vsel %vm1580, %v4310, 0
        %v4328 = vsel %vm1581, %v4311, 0
        %v4329 = vsel %vm1582, %v4312, 0
        %v4330 = vsel %vm1583, %v4313, 0
        %v4331 = vsel %vm1584, %v4314, 0
        %v4332 = vsel %vm1585, %v4315, 0
        %v4333 = vsel %vm1586, %v4316, 0
        %v4334 = vsel %vm1587, %v4317, 0
        %v4335 = vsel %vm1588, %v4318, 0
        %v4336 = vsel %vm1589, %v4319, 0
        %v4337 = vsel %vm1590, %v4320, 0
        %v4338 = vsel %vm1591, %v4321, 0
        %v4339 = vsel %vm1592, %v4322, 0
        %s4340 = scalar_lea.vmem [#allocation8], 384
        %v4341 = vld [vmem:[%s4340] sm:$0xf]
        %v4342 = vld [vmem:[%s4340 + $0x4] sm:$0xf]
        %v4343 = vld [vmem:[%s4340 + $0x8] sm:$0xf]
        %v4344 = vld [vmem:[%s4340 + $0xc] sm:$0xf]
        %v4345 = vld [vmem:[%s4340 + $0x10] sm:$0xf]
        %v4346 = vld [vmem:[%s4340 + $0x14] sm:$0xf]
        %v4347 = vld [vmem:[%s4340 + $0x18] sm:$0xf]
        %v4348 = vld [vmem:[%s4340 + $0x1c] sm:$0xf]
        %v4349 = vld [vmem:[%s4340 + $0x20] sm:$0xf]
        %v4350 = vld [vmem:[%s4340 + $0x24] sm:$0xf]
        %v4351 = vld [vmem:[%s4340 + $0x28] sm:$0xf]
        %v4352 = vld [vmem:[%s4340 + $0x2c] sm:$0xf]
        %v4353 = vld [vmem:[%s4340 + $0x30] sm:$0xf]
        %v4354 = vld [vmem:[%s4340 + $0x34] sm:$0xf]
        %v4355 = vld [vmem:[%s4340 + $0x38] sm:$0xf]
        %v4356 = vld [vmem:[%s4340 + $0x3c] sm:$0xf]
        %v4358 = vshrl.u32 %v4323, 16
        %v4360 = vrot.slane %v4358, 3
        %v4361 = vshll.u32 %v4323, 16
        %v4363 = vrot.slane %v4361, 4
        %v4364 = vor.u32 %v4360, %v4363
        %v4366 = vshrl.u32 %v4324, 16
        %v4368 = vrot.slane %v4366, 3
        %v4369 = vshll.u32 %v4324, 16
        %v4371 = vrot.slane %v4369, 4
        %v4372 = vor.u32 %v4368, %v4371
        %v4373 = vsel %vm1919, %v4364, %v4372
        %v4375 = vshrl.u32 %v4325, 16
        %v4377 = vrot.slane %v4375, 3
        %v4378 = vshll.u32 %v4325, 16
        %v4380 = vrot.slane %v4378, 4
        %v4381 = vor.u32 %v4377, %v4380
        %v4382 = vsel %vm1919, %v4372, %v4381
        %v4384 = vshrl.u32 %v4326, 16
        %v4386 = vrot.slane %v4384, 3
        %v4387 = vshll.u32 %v4326, 16
        %v4389 = vrot.slane %v4387, 4
        %v4390 = vor.u32 %v4386, %v4389
        %v4391 = vsel %vm1919, %v4381, %v4390
        %v4393 = vshrl.u32 %v4327, 16
        %v4395 = vrot.slane %v4393, 3
        %v4396 = vshll.u32 %v4327, 16
        %v4398 = vrot.slane %v4396, 4
        %v4399 = vor.u32 %v4395, %v4398
        %v4400 = vsel %vm1919, %v4390, %v4399
        %v4402 = vshrl.u32 %v4328, 16
        %v4404 = vrot.slane %v4402, 3
        %v4405 = vshll.u32 %v4328, 16
        %v4407 = vrot.slane %v4405, 4
        %v4408 = vor.u32 %v4404, %v4407
        %v4409 = vsel %vm1919, %v4399, %v4408
        %v4411 = vshrl.u32 %v4329, 16
        %v4413 = vrot.slane %v4411, 3
        %v4414 = vshll.u32 %v4329, 16
        %v4416 = vrot.slane %v4414, 4
        %v4417 = vor.u32 %v4413, %v4416
        %v4418 = vsel %vm1919, %v4408, %v4417
        %v4420 = vshrl.u32 %v4330, 16
        %v4422 = vrot.slane %v4420, 3
        %v4423 = vshll.u32 %v4330, 16
        %v4425 = vrot.slane %v4423, 4
        %v4426 = vor.u32 %v4422, %v4425
        %v4427 = vsel %vm1919, %v4417, %v4426
        %v4429 = vshrl.u32 %v4331, 16
        %v4431 = vrot.slane %v4429, 3
        %v4432 = vshll.u32 %v4331, 16
        %v4434 = vrot.slane %v4432, 4
        %v4435 = vor.u32 %v4431, %v4434
        %v4436 = vsel %vm1919, %v4426, %v4435
        %v4438 = vshrl.u32 %v4332, 16
        %v4440 = vrot.slane %v4438, 3
        %v4441 = vshll.u32 %v4332, 16
        %v4443 = vrot.slane %v4441, 4
        %v4444 = vor.u32 %v4440, %v4443
        %v4445 = vsel %vm1919, %v4435, %v4444
        %v4447 = vshrl.u32 %v4333, 16
        %v4449 = vrot.slane %v4447, 3
        %v4450 = vshll.u32 %v4333, 16
        %v4452 = vrot.slane %v4450, 4
        %v4453 = vor.u32 %v4449, %v4452
        %v4454 = vsel %vm1919, %v4444, %v4453
        %v4456 = vshrl.u32 %v4334, 16
        %v4458 = vrot.slane %v4456, 3
        %v4459 = vshll.u32 %v4334, 16
        %v4461 = vrot.slane %v4459, 4
        %v4462 = vor.u32 %v4458, %v4461
        %v4463 = vsel %vm1919, %v4453, %v4462
        %v4465 = vshrl.u32 %v4335, 16
        %v4467 = vrot.slane %v4465, 3
        %v4468 = vshll.u32 %v4335, 16
        %v4470 = vrot.slane %v4468, 4
        %v4471 = vor.u32 %v4467, %v4470
        %v4472 = vsel %vm1919, %v4462, %v4471
        %v4474 = vshrl.u32 %v4336, 16
        %v4476 = vrot.slane %v4474, 3
        %v4477 = vshll.u32 %v4336, 16
        %v4479 = vrot.slane %v4477, 4
        %v4480 = vor.u32 %v4476, %v4479
        %v4481 = vsel %vm1919, %v4471, %v4480
        %v4483 = vshrl.u32 %v4337, 16
        %v4485 = vrot.slane %v4483, 3
        %v4486 = vshll.u32 %v4337, 16
        %v4488 = vrot.slane %v4486, 4
        %v4489 = vor.u32 %v4485, %v4488
        %v4490 = vsel %vm1919, %v4480, %v4489
        %v4492 = vshrl.u32 %v4338, 16
        %v4494 = vrot.slane %v4492, 3
        %v4495 = vshll.u32 %v4338, 16
        %v4497 = vrot.slane %v4495, 4
        %v4498 = vor.u32 %v4494, %v4497
        %v4499 = vsel %vm1919, %v4489, %v4498
        %v4501 = vshrl.u32 %v4339, 16
        %v4503 = vrot.slane %v4501, 3
        %v4504 = vshll.u32 %v4339, 16
        %v4506 = vrot.slane %v4504, 4
        %v4507 = vor.u32 %v4503, %v4506
        %v4508 = vsel %vm1919, %v4498, %v4507
        %v4541 = vunpack.c.l.b16 %v4341
        %v4542 = vunpack.c.l.b16 %v4342
        %v4543 = vunpack.c.l.b16 %v4343
        %v4544 = vunpack.c.l.b16 %v4344
        %v4545 = vunpack.c.l.b16 %v4345
        %v4546 = vunpack.c.l.b16 %v4346
        %v4547 = vunpack.c.l.b16 %v4347
        %v4548 = vunpack.c.l.b16 %v4348
        %v4549 = vunpack.c.l.b16 %v4349
        %v4550 = vunpack.c.l.b16 %v4350
        %v4551 = vunpack.c.l.b16 %v4351
        %v4552 = vunpack.c.l.b16 %v4352
        %v4553 = vunpack.c.l.b16 %v4353
        %v4554 = vunpack.c.l.b16 %v4354
        %v4555 = vunpack.c.l.b16 %v4355
        %v4556 = vunpack.c.l.b16 %v4356
        %v4557 = vpack.c.b16 %v4542, %v4541
        %v4558 = vpack.c.b16 %v4544, %v4543
        %v4559 = vpack.c.b16 %v4546, %v4545
        %v4560 = vpack.c.b16 %v4548, %v4547
        %v4561 = vpack.c.b16 %v4550, %v4549
        %v4562 = vpack.c.b16 %v4552, %v4551
        %v4563 = vpack.c.b16 %v4554, %v4553
        %v4564 = vpack.c.b16 %v4556, %v4555
        %4573 = vmatprep.subr.bf16.mxu0 0
        %4574 = vmatpush1.bf16.msra.mxu0 %v4557
        %4575 = vmatprep.subr.bf16.mxu0 0
        %4576 = vmatpush1.bf16.msra.mxu0 %v4558
        %4577 = vmatprep.subr.bf16.mxu0 0
        %4578 = vmatpush1.bf16.msra.mxu0 %v4559
        %4579 = vmatprep.subr.bf16.mxu0 0
        %4580 = vmatpush1.bf16.msra.mxu0 %v4560
        %4581 = vmatprep.subr.bf16.mxu0 0
        %4582 = vmatpush1.bf16.msra.mxu0 %v4561
        %4583 = vmatprep.subr.bf16.mxu0 0
        %4584 = vmatpush1.bf16.msra.mxu0 %v4562
        %4585 = vmatprep.subr.bf16.mxu0 0
        %4586 = vmatpush1.bf16.msra.mxu0 %v4563
        %4587 = vmatprep.subr.bf16.mxu0 0
        %4588 = vmatpush1.bf16.msra.mxu0 %v4564
        %4589 = vmatprep.subr.bf16.mxu0 0
        %4590 = vmatpush1.bf16.msra.mxu0 0
        %4591 = vmatprep.subr.bf16.mxu0 0
        %4592 = vmatpush1.bf16.msra.mxu0 0
        %4593 = vmatprep.subr.bf16.mxu0 0
        %4594 = vmatpush1.bf16.msra.mxu0 0
        %4595 = vmatprep.subr.bf16.mxu0 0
        %4596 = vmatpush1.bf16.msra.mxu0 0
        %4597 = vmatprep.subr.bf16.mxu0 0
        %4598 = vmatpush1.bf16.msra.mxu0 0
        %4599 = vmatprep.subr.bf16.mxu0 0
        %4600 = vmatpush1.bf16.msra.mxu0 0
        %4601 = vmatprep.subr.bf16.mxu0 0
        %4602 = vmatpush1.bf16.msra.mxu0 0
        %4603 = vmatprep.subr.bf16.mxu0 0
        %4604 = vmatpush1.bf16.msra.mxu0 0
        %4605 = vmatprep.mubr.bf16.mxu0 0
        %4606 = vmatmul.mubr.bf16.gmra.mrb[0].mxu0 %v4373
        %v4607 = vpop.f32.mrb[0].mxu0
        %v4608 = vadd.f32 0.0, %v4607
        %v4609 = vpop.f32.mrb[0].mxu0
        %v4610 = vpop.f32.mrb[0].mxu0
        %v4611 = vadd.f32 0.0, %v4610
        %v4612 = vpop.f32.mrb[0].mxu0
        %4613 = vmatprep.mubr.bf16.mxu0 0
        %4614 = vmatmul.mubr.bf16.gmra.mrb[0].mxu0 %v4382
        %v4615 = vpop.f32.mrb[0].mxu0
        %v4616 = vadd.f32 0.0, %v4615
        %v4617 = vpop.f32.mrb[0].mxu0
        %v4618 = vpop.f32.mrb[0].mxu0
        %v4619 = vadd.f32 0.0, %v4618
        %v4620 = vpop.f32.mrb[0].mxu0
        %4621 = vmatprep.mubr.bf16.mxu0 0
        %4622 = vmatmul.mubr.bf16.gmra.mrb[0].mxu0 %v4391
        %v4623 = vpop.f32.mrb[0].mxu0
        %v4624 = vadd.f32 0.0, %v4623
        %v4625 = vpop.f32.mrb[0].mxu0
        %v4626 = vpop.f32.mrb[0].mxu0
        %v4627 = vadd.f32 0.0, %v4626
        %v4628 = vpop.f32.mrb[0].mxu0
        %4629 = vmatprep.mubr.bf16.mxu0 0
        %4630 = vmatmul.mubr.bf16.gmra.mrb[0].mxu0 %v4400
        %v4631 = vpop.f32.mrb[0].mxu0
        %v4632 = vadd.f32 0.0, %v4631
        %v4633 = vpop.f32.mrb[0].mxu0
        %v4634 = vpop.f32.mrb[0].mxu0
        %v4635 = vadd.f32 0.0, %v4634
        %v4636 = vpop.f32.mrb[0].mxu0
        %4637 = vmatprep.mubr.bf16.mxu0 0
        %4638 = vmatmul.mubr.bf16.gmra.mrb[0].mxu0 %v4409
        %v4639 = vpop.f32.mrb[0].mxu0
        %v4640 = vadd.f32 0.0, %v4639
        %v4641 = vpop.f32.mrb[0].mxu0
        %v4642 = vpop.f32.mrb[0].mxu0
        %v4643 = vadd.f32 0.0, %v4642
        %v4644 = vpop.f32.mrb[0].mxu0
        %4645 = vmatprep.mubr.bf16.mxu0 0
        %4646 = vmatmul.mubr.bf16.gmra.mrb[0].mxu0 %v4418
        %v4647 = vpop.f32.mrb[0].mxu0
        %v4648 = vadd.f32 0.0, %v4647
        %v4649 = vpop.f32.mrb[0].mxu0
        %v4650 = vpop.f32.mrb[0].mxu0
        %v4651 = vadd.f32 0.0, %v4650
        %v4652 = vpop.f32.mrb[0].mxu0
        %4653 = vmatprep.mubr.bf16.mxu0 0
        %4654 = vmatmul.mubr.bf16.gmra.mrb[0].mxu0 %v4427
        %v4655 = vpop.f32.mrb[0].mxu0
        %v4656 = vadd.f32 0.0, %v4655
        %v4657 = vpop.f32.mrb[0].mxu0
        %v4658 = vpop.f32.mrb[0].mxu0
        %v4659 = vadd.f32 0.0, %v4658
        %v4660 = vpop.f32.mrb[0].mxu0
        %4661 = vmatprep.mubr.bf16.mxu0 0
        %4662 = vmatmul.mubr.bf16.gmra.mrb[0].mxu0 %v4436
        %v4663 = vpop.f32.mrb[0].mxu0
        %v4664 = vadd.f32 0.0, %v4663
        %v4665 = vpop.f32.mrb[0].mxu0
        %v4666 = vpop.f32.mrb[0].mxu0
        %v4667 = vadd.f32 0.0, %v4666
        %v4668 = vpop.f32.mrb[0].mxu0
        %4669 = vmatprep.mubr.bf16.mxu0 0
        %4670 = vmatmul.mubr.bf16.gmra.mrb[0].mxu0 %v4445
        %v4671 = vpop.f32.mrb[0].mxu0
        %v4672 = vadd.f32 0.0, %v4671
        %v4673 = vpop.f32.mrb[0].mxu0
        %v4674 = vpop.f32.mrb[0].mxu0
        %v4675 = vadd.f32 0.0, %v4674
        %v4676 = vpop.f32.mrb[0].mxu0
        %4677 = vmatprep.mubr.bf16.mxu0 0
        %4678 = vmatmul.mubr.bf16.gmra.mrb[0].mxu0 %v4454
        %v4679 = vpop.f32.mrb[0].mxu0
        %v4680 = vadd.f32 0.0, %v4679
        %v4681 = vpop.f32.mrb[0].mxu0
        %v4682 = vpop.f32.mrb[0].mxu0
        %v4683 = vadd.f32 0.0, %v4682
        %v4684 = vpop.f32.mrb[0].mxu0
        %4685 = vmatprep.mubr.bf16.mxu0 0
        %4686 = vmatmul.mubr.bf16.gmra.mrb[0].mxu0 %v4463
        %v4687 = vpop.f32.mrb[0].mxu0
        %v4688 = vadd.f32 0.0, %v4687
        %v4689 = vpop.f32.mrb[0].mxu0
        %v4690 = vpop.f32.mrb[0].mxu0
        %v4691 = vadd.f32 0.0, %v4690
        %v4692 = vpop.f32.mrb[0].mxu0
        %4693 = vmatprep.mubr.bf16.mxu0 0
        %4694 = vmatmul.mubr.bf16.gmra.mrb[0].mxu0 %v4472
        %v4695 = vpop.f32.mrb[0].mxu0
        %v4696 = vadd.f32 0.0, %v4695
        %v4697 = vpop.f32.mrb[0].mxu0
        %v4698 = vpop.f32.mrb[0].mxu0
        %v4699 = vadd.f32 0.0, %v4698
        %v4700 = vpop.f32.mrb[0].mxu0
        %4701 = vmatprep.mubr.bf16.mxu0 0
        %4702 = vmatmul.mubr.bf16.gmra.mrb[0].mxu0 %v4481
        %v4703 = vpop.f32.mrb[0].mxu0
        %v4704 = vadd.f32 0.0, %v4703
        %v4705 = vpop.f32.mrb[0].mxu0
        %v4706 = vpop.f32.mrb[0].mxu0
        %v4707 = vadd.f32 0.0, %v4706
        %v4708 = vpop.f32.mrb[0].mxu0
        %4709 = vmatprep.mubr.bf16.mxu0 0
        %4710 = vmatmul.mubr.bf16.gmra.mrb[0].mxu0 %v4490
        %v4711 = vpop.f32.mrb[0].mxu0
        %v4712 = vadd.f32 0.0, %v4711
        %v4713 = vpop.f32.mrb[0].mxu0
        %v4714 = vpop.f32.mrb[0].mxu0
        %v4715 = vadd.f32 0.0, %v4714
        %v4716 = vpop.f32.mrb[0].mxu0
        %4717 = vmatprep.mubr.bf16.mxu0 0
        %4718 = vmatmul.mubr.bf16.gmra.mrb[0].mxu0 %v4499
        %v4719 = vpop.f32.mrb[0].mxu0
        %v4720 = vadd.f32 0.0, %v4719
        %v4721 = vpop.f32.mrb[0].mxu0
        %v4722 = vpop.f32.mrb[0].mxu0
        %v4723 = vadd.f32 0.0, %v4722
        %v4724 = vpop.f32.mrb[0].mxu0
        %4725 = vmatprep.mubr.bf16.mxu0 0
        %4726 = vmatmul.mubr.bf16.gmra.mrb[0].mxu0 %v4508
        %v4727 = vpop.f32.mrb[0].mxu0
        %v4728 = vadd.f32 0.0, %v4727
        %v4729 = vpop.f32.mrb[0].mxu0
        %v4730 = vpop.f32.mrb[0].mxu0
        %v4731 = vadd.f32 0.0, %v4730
        %v4732 = vpop.f32.mrb[0].mxu0
        %4733 = vdwg.mxu0
        %v4734 = vadd.f32 %v4274, %v4608
        %v4735 = vadd.f32 %v4275, %v4611
        %v4736 = vadd.f32 %v4276, %v4616
        %v4737 = vadd.f32 %v4277, %v4619
        %v4738 = vadd.f32 %v4278, %v4624
        %v4739 = vadd.f32 %v4279, %v4627
        %v4740 = vadd.f32 %v4280, %v4632
        %v4741 = vadd.f32 %v4281, %v4635
        %v4742 = vadd.f32 %v4282, %v4640
        %v4743 = vadd.f32 %v4283, %v4643
        %v4744 = vadd.f32 %v4284, %v4648
        %v4745 = vadd.f32 %v4285, %v4651
        %v4746 = vadd.f32 %v4286, %v4656
        %v4747 = vadd.f32 %v4287, %v4659
        %v4748 = vadd.f32 %v4288, %v4664
        %v4749 = vadd.f32 %v4289, %v4667
        %v4750 = vadd.f32 %v4290, %v4672
        %v4751 = vadd.f32 %v4291, %v4675
        %v4752 = vadd.f32 %v4292, %v4680
        %v4753 = vadd.f32 %v4293, %v4683
        %v4754 = vadd.f32 %v4294, %v4688
        %v4755 = vadd.f32 %v4295, %v4691
        %v4756 = vadd.f32 %v4296, %v4696
        %v4757 = vadd.f32 %v4297, %v4699
        %v4758 = vadd.f32 %v4298, %v4704
        %v4759 = vadd.f32 %v4299, %v4707
        %v4760 = vadd.f32 %v4300, %v4712
        %v4761 = vadd.f32 %v4301, %v4715
        %v4762 = vadd.f32 %v4302, %v4720
        %v4763 = vadd.f32 %v4303, %v4723
        %v4764 = vadd.f32 %v4304, %v4728
        %v4765 = vadd.f32 %v4305, %v4731
        %v4766 = vld [vmem:[#allocation2 + $0x10] sm:$0xf0]
        %s4767 = scalar_lea.vmem [#allocation8], 448
        %v4768 = vld [vmem:[%s4767] sm:$0xf]
        %v4769 = vld [vmem:[%s4767 + $0x4] sm:$0xf]
        %v4770 = vld [vmem:[%s4767 + $0x8] sm:$0xf]
        %v4771 = vld [vmem:[%s4767 + $0xc] sm:$0xf]
        %v4772 = vld [vmem:[%s4767 + $0x10] sm:$0xf]
        %v4773 = vld [vmem:[%s4767 + $0x14] sm:$0xf]
        %v4774 = vld [vmem:[%s4767 + $0x18] sm:$0xf]
        %v4775 = vld [vmem:[%s4767 + $0x1c] sm:$0xf]
        %v4776 = vld [vmem:[%s4767 + $0x20] sm:$0xf]
        %v4777 = vld [vmem:[%s4767 + $0x24] sm:$0xf]
        %v4778 = vld [vmem:[%s4767 + $0x28] sm:$0xf]
        %v4779 = vld [vmem:[%s4767 + $0x2c] sm:$0xf]
        %v4780 = vld [vmem:[%s4767 + $0x30] sm:$0xf]
        %v4781 = vld [vmem:[%s4767 + $0x34] sm:$0xf]
        %v4782 = vld [vmem:[%s4767 + $0x38] sm:$0xf]
        %v4783 = vld [vmem:[%s4767 + $0x3c] sm:$0xf]
        %v4801 = vrot.slane %v4766, 4
        %v4802 = vrot.slane %v4307, 4
        %v4803 = vsel %vm692, %v4801, %v4802
        %v4804 = vrot.slane %v4308, 4
        %v4805 = vsel %vm692, %v4802, %v4804
        %v4806 = vrot.slane %v4309, 4
        %v4807 = vsel %vm692, %v4804, %v4806
        %v4808 = vrot.slane %v4310, 4
        %v4809 = vsel %vm692, %v4806, %v4808
        %v4810 = vrot.slane %v4311, 4
        %v4811 = vsel %vm692, %v4808, %v4810
        %v4812 = vrot.slane %v4312, 4
        %v4813 = vsel %vm692, %v4810, %v4812
        %v4814 = vrot.slane %v4313, 4
        %v4815 = vsel %vm692, %v4812, %v4814
        %v4816 = vrot.slane %v4314, 4
        %v4817 = vsel %vm692, %v4814, %v4816
        %v4818 = vrot.slane %v4315, 4
        %v4819 = vsel %vm692, %v4816, %v4818
        %v4820 = vrot.slane %v4316, 4
        %v4821 = vsel %vm692, %v4818, %v4820
        %v4822 = vrot.slane %v4317, 4
        %v4823 = vsel %vm692, %v4820, %v4822
        %v4824 = vrot.slane %v4318, 4
        %v4825 = vsel %vm692, %v4822, %v4824
        %v4826 = vrot.slane %v4319, 4
        %v4827 = vsel %vm692, %v4824, %v4826
        %v4828 = vrot.slane %v4320, 4
        %v4829 = vsel %vm692, %v4826, %v4828
        %v4830 = vrot.slane %v4321, 4
        %v4831 = vsel %vm692, %v4828, %v4830
        %v4832 = vrot.slane %v4322, 4
        %v4833 = vsel %vm692, %v4830, %v4832
        %v4866 = vunpack.c.l.b16 %v4768
        %v4867 = vunpack.c.l.b16 %v4769
        %v4868 = vunpack.c.l.b16 %v4770
        %v4869 = vunpack.c.l.b16 %v4771
        %v4870 = vunpack.c.l.b16 %v4772
        %v4871 = vunpack.c.l.b16 %v4773
        %v4872 = vunpack.c.l.b16 %v4774
        %v4873 = vunpack.c.l.b16 %v4775
        %v4874 = vunpack.c.l.b16 %v4776
        %v4875 = vunpack.c.l.b16 %v4777
        %v4876 = vunpack.c.l.b16 %v4778
        %v4877 = vunpack.c.l.b16 %v4779
        %v4878 = vunpack.c.l.b16 %v4780
        %v4879 = vunpack.c.l.b16 %v4781
        %v4880 = vunpack.c.l.b16 %v4782
        %v4881 = vunpack.c.l.b16 %v4783
        %v4882 = vpack.c.b16 %v4867, %v4866
        %v4883 = vpack.c.b16 %v4869, %v4868
        %v4884 = vpack.c.b16 %v4871, %v4870
        %v4885 = vpack.c.b16 %v4873, %v4872
        %v4886 = vpack.c.b16 %v4875, %v4874
        %v4887 = vpack.c.b16 %v4877, %v4876
        %v4888 = vpack.c.b16 %v4879, %v4878
        %v4889 = vpack.c.b16 %v4881, %v4880
        %4898 = vmatprep.subr.bf16.mxu0 0
        %4899 = vmatpush1.bf16.msra.mxu0 %v4882
        %4900 = vmatprep.subr.bf16.mxu0 0
        %4901 = vmatpush1.bf16.msra.mxu0 %v4883
        %4902 = vmatprep.subr.bf16.mxu0 0
        %4903 = vmatpush1.bf16.msra.mxu0 %v4884
        %4904 = vmatprep.subr.bf16.mxu0 0
        %4905 = vmatpush1.bf16.msra.mxu0 %v4885
        %4906 = vmatprep.subr.bf16.mxu0 0
        %4907 = vmatpush1.bf16.msra.mxu0 %v4886
        %4908 = vmatprep.subr.bf16.mxu0 0
        %4909 = vmatpush1.bf16.msra.mxu0 %v4887
        %4910 = vmatprep.subr.bf16.mxu0 0
        %4911 = vmatpush1.bf16.msra.mxu0 %v4888
        %4912 = vmatprep.subr.bf16.mxu0 0
        %4913 = vmatpush1.bf16.msra.mxu0 %v4889
        %4914 = vmatprep.subr.bf16.mxu0 0
        %4915 = vmatpush1.bf16.msra.mxu0 0
        %4916 = vmatprep.subr.bf16.mxu0 0
        %4917 = vmatpush1.bf16.msra.mxu0 0
        %4918 = vmatprep.subr.bf16.mxu0 0
        %4919 = vmatpush1.bf16.msra.mxu0 0
        %4920 = vmatprep.subr.bf16.mxu0 0
        %4921 = vmatpush1.bf16.msra.mxu0 0
        %4922 = vmatprep.subr.bf16.mxu0 0
        %4923 = vmatpush1.bf16.msra.mxu0 0
        %4924 = vmatprep.subr.bf16.mxu0 0
        %4925 = vmatpush1.bf16.msra.mxu0 0
        %4926 = vmatprep.subr.bf16.mxu0 0
        %4927 = vmatpush1.bf16.msra.mxu0 0
        %4928 = vmatprep.subr.bf16.mxu0 0
        %4929 = vmatpush1.bf16.msra.mxu0 0
        %4930 = vmatprep.mubr.bf16.mxu0 0
        %4931 = vmatmul.mubr.bf16.gmra.mrb[0].mxu0 %v4803
        %v4932 = vpop.f32.mrb[0].mxu0
        %v4933 = vadd.f32 0.0, %v4932
        %v4934 = vpop.f32.mrb[0].mxu0
        %v4935 = vpop.f32.mrb[0].mxu0
        %v4936 = vadd.f32 0.0, %v4935
        %v4937 = vpop.f32.mrb[0].mxu0
        %4938 = vmatprep.mubr.bf16.mxu0 0
        %4939 = vmatmul.mubr.bf16.gmra.mrb[0].mxu0 %v4805
        %v4940 = vpop.f32.mrb[0].mxu0
        %v4941 = vadd.f32 0.0, %v4940
        %v4942 = vpop.f32.mrb[0].mxu0
        %v4943 = vpop.f32.mrb[0].mxu0
        %v4944 = vadd.f32 0.0, %v4943
        %v4945 = vpop.f32.mrb[0].mxu0
        %4946 = vmatprep.mubr.bf16.mxu0 0
        %4947 = vmatmul.mubr.bf16.gmra.mrb[0].mxu0 %v4807
        %v4948 = vpop.f32.mrb[0].mxu0
        %v4949 = vadd.f32 0.0, %v4948
        %v4950 = vpop.f32.mrb[0].mxu0
        %v4951 = vpop.f32.mrb[0].mxu0
        %v4952 = vadd.f32 0.0, %v4951
        %v4953 = vpop.f32.mrb[0].mxu0
        %4954 = vmatprep.mubr.bf16.mxu0 0
        %4955 = vmatmul.mubr.bf16.gmra.mrb[0].mxu0 %v4809
        %v4956 = vpop.f32.mrb[0].mxu0
        %v4957 = vadd.f32 0.0, %v4956
        %v4958 = vpop.f32.mrb[0].mxu0
        %v4959 = vpop.f32.mrb[0].mxu0
        %v4960 = vadd.f32 0.0, %v4959
        %v4961 = vpop.f32.mrb[0].mxu0
        %4962 = vmatprep.mubr.bf16.mxu0 0
        %4963 = vmatmul.mubr.bf16.gmra.mrb[0].mxu0 %v4811
        %v4964 = vpop.f32.mrb[0].mxu0
        %v4965 = vadd.f32 0.0, %v4964
        %v4966 = vpop.f32.mrb[0].mxu0
        %v4967 = vpop.f32.mrb[0].mxu0
        %v4968 = vadd.f32 0.0, %v4967
        %v4969 = vpop.f32.mrb[0].mxu0
        %4970 = vmatprep.mubr.bf16.mxu0 0
        %4971 = vmatmul.mubr.bf16.gmra.mrb[0].mxu0 %v4813
        %v4972 = vpop.f32.mrb[0].mxu0
        %v4973 = vadd.f32 0.0, %v4972
        %v4974 = vpop.f32.mrb[0].mxu0
        %v4975 = vpop.f32.mrb[0].mxu0
        %v4976 = vadd.f32 0.0, %v4975
        %v4977 = vpop.f32.mrb[0].mxu0
        %4978 = vmatprep.mubr.bf16.mxu0 0
        %4979 = vmatmul.mubr.bf16.gmra.mrb[0].mxu0 %v4815
        %v4980 = vpop.f32.mrb[0].mxu0
        %v4981 = vadd.f32 0.0, %v4980
        %v4982 = vpop.f32.mrb[0].mxu0
        %v4983 = vpop.f32.mrb[0].mxu0
        %v4984 = vadd.f32 0.0, %v4983
        %v4985 = vpop.f32.mrb[0].mxu0
        %4986 = vmatprep.mubr.bf16.mxu0 0
        %4987 = vmatmul.mubr.bf16.gmra.mrb[0].mxu0 %v4817
        %v4988 = vpop.f32.mrb[0].mxu0
        %v4989 = vadd.f32 0.0, %v4988
        %v4990 = vpop.f32.mrb[0].mxu0
        %v4991 = vpop.f32.mrb[0].mxu0
        %v4992 = vadd.f32 0.0, %v4991
        %v4993 = vpop.f32.mrb[0].mxu0
        %4994 = vmatprep.mubr.bf16.mxu0 0
        %4995 = vmatmul.mubr.bf16.gmra.mrb[0].mxu0 %v4819
        %v4996 = vpop.f32.mrb[0].mxu0
        %v4997 = vadd.f32 0.0, %v4996
        %v4998 = vpop.f32.mrb[0].mxu0
        %v4999 = vpop.f32.mrb[0].mxu0
        %v5000 = vadd.f32 0.0, %v4999
        %v5001 = vpop.f32.mrb[0].mxu0
        %5002 = vmatprep.mubr.bf16.mxu0 0
        %5003 = vmatmul.mubr.bf16.gmra.mrb[0].mxu0 %v4821
        %v5004 = vpop.f32.mrb[0].mxu0
        %v5005 = vadd.f32 0.0, %v5004
        %v5006 = vpop.f32.mrb[0].mxu0
        %v5007 = vpop.f32.mrb[0].mxu0
        %v5008 = vadd.f32 0.0, %v5007
        %v5009 = vpop.f32.mrb[0].mxu0
        %5010 = vmatprep.mubr.bf16.mxu0 0
        %5011 = vmatmul.mubr.bf16.gmra.mrb[0].mxu0 %v4823
        %v5012 = vpop.f32.mrb[0].mxu0
        %v5013 = vadd.f32 0.0, %v5012
        %v5014 = vpop.f32.mrb[0].mxu0
        %v5015 = vpop.f32.mrb[0].mxu0
        %v5016 = vadd.f32 0.0, %v5015
        %v5017 = vpop.f32.mrb[0].mxu0
        %5018 = vmatprep.mubr.bf16.mxu0 0
        %5019 = vmatmul.mubr.bf16.gmra.mrb[0].mxu0 %v4825
        %v5020 = vpop.f32.mrb[0].mxu0
        %v5021 = vadd.f32 0.0, %v5020
        %v5022 = vpop.f32.mrb[0].mxu0
        %v5023 = vpop.f32.mrb[0].mxu0
        %v5024 = vadd.f32 0.0, %v5023
        %v5025 = vpop.f32.mrb[0].mxu0
        %5026 = vmatprep.mubr.bf16.mxu0 0
        %5027 = vmatmul.mubr.bf16.gmra.mrb[0].mxu0 %v4827
        %v5028 = vpop.f32.mrb[0].mxu0
        %v5029 = vadd.f32 0.0, %v5028
        %v5030 = vpop.f32.mrb[0].mxu0
        %v5031 = vpop.f32.mrb[0].mxu0
        %v5032 = vadd.f32 0.0, %v5031
        %v5033 = vpop.f32.mrb[0].mxu0
        %5034 = vmatprep.mubr.bf16.mxu0 0
        %5035 = vmatmul.mubr.bf16.gmra.mrb[0].mxu0 %v4829
        %v5036 = vpop.f32.mrb[0].mxu0
        %v5037 = vadd.f32 0.0, %v5036
        %v5038 = vpop.f32.mrb[0].mxu0
        %v5039 = vpop.f32.mrb[0].mxu0
        %v5040 = vadd.f32 0.0, %v5039
        %v5041 = vpop.f32.mrb[0].mxu0
        %5042 = vmatprep.mubr.bf16.mxu0 0
        %5043 = vmatmul.mubr.bf16.gmra.mrb[0].mxu0 %v4831
        %v5044 = vpop.f32.mrb[0].mxu0
        %v5045 = vadd.f32 0.0, %v5044
        %v5046 = vpop.f32.mrb[0].mxu0
        %v5047 = vpop.f32.mrb[0].mxu0
        %v5048 = vadd.f32 0.0, %v5047
        %v5049 = vpop.f32.mrb[0].mxu0
        %5050 = vmatprep.mubr.bf16.mxu0 0
        %5051 = vmatmul.mubr.bf16.gmra.mrb[0].mxu0 %v4833
        %v5052 = vpop.f32.mrb[0].mxu0
        %v5053 = vadd.f32 0.0, %v5052
        %v5054 = vpop.f32.mrb[0].mxu0
        %v5055 = vpop.f32.mrb[0].mxu0
        %v5056 = vadd.f32 0.0, %v5055
        %v5057 = vpop.f32.mrb[0].mxu0
        %5058 = vdwg.mxu0
        %v5059 = vadd.f32 %v4734, %v4933
        %v5060 = vadd.f32 %v4735, %v4936
        %v5061 = vadd.f32 %v4736, %v4941
        %v5062 = vadd.f32 %v4737, %v4944
        %v5063 = vadd.f32 %v4738, %v4949
        %v5064 = vadd.f32 %v4739, %v4952
        %v5065 = vadd.f32 %v4740, %v4957
        %v5066 = vadd.f32 %v4741, %v4960
        %v5067 = vadd.f32 %v4742, %v4965
        %v5068 = vadd.f32 %v4743, %v4968
        %v5069 = vadd.f32 %v4744, %v4973
        %v5070 = vadd.f32 %v4745, %v4976
        %v5071 = vadd.f32 %v4746, %v4981
        %v5072 = vadd.f32 %v4747, %v4984
        %v5073 = vadd.f32 %v4748, %v4989
        %v5074 = vadd.f32 %v4749, %v4992
        %v5075 = vadd.f32 %v4750, %v4997
        %v5076 = vadd.f32 %v4751, %v5000
        %v5077 = vadd.f32 %v4752, %v5005
        %v5078 = vadd.f32 %v4753, %v5008
        %v5079 = vadd.f32 %v4754, %v5013
        %v5080 = vadd.f32 %v4755, %v5016
        %v5081 = vadd.f32 %v4756, %v5021
        %v5082 = vadd.f32 %v4757, %v5024
        %v5083 = vadd.f32 %v4758, %v5029
        %v5084 = vadd.f32 %v4759, %v5032
        %v5085 = vadd.f32 %v4760, %v5037
        %v5086 = vadd.f32 %v4761, %v5040
        %v5087 = vadd.f32 %v4762, %v5045
        %v5088 = vadd.f32 %v4763, %v5048
        %v5089 = vadd.f32 %v4764, %v5053
        %v5090 = vadd.f32 %v4765, %v5056
        %v5091 = vld [vmem:[#allocation2 + $0x90] sm:$0x1f]
        %v5092 = vsel %vm2617, %v4766, 0
        %v5093 = vsel %vm2618, %v4307, 0
        %v5094 = vsel %vm2619, %v4308, 0
        %v5095 = vsel %vm2620, %v4309, 0
        %v5096 = vsel %vm2621, %v4310, 0
        %v5097 = vsel %vm2622, %v4311, 0
        %v5098 = vsel %vm2623, %v4312, 0
        %v5099 = vsel %vm2624, %v4313, 0
        %v5100 = vsel %vm2625, %v4314, 0
        %v5101 = vsel %vm2626, %v4315, 0
        %v5102 = vsel %vm2627, %v4316, 0
        %v5103 = vsel %vm2628, %v4317, 0
        %v5104 = vsel %vm2629, %v4318, 0
        %v5105 = vsel %vm2630, %v4319, 0
        %v5106 = vsel %vm2631, %v4320, 0
        %v5107 = vsel %vm2632, %v4321, 0
        %v5108 = vsel %vm2633, %v5091, 0
        %s5109 = scalar_lea.vmem [#allocation8], 512
        %v5110 = vld [vmem:[%s5109] sm:$0xf]
        %v5111 = vld [vmem:[%s5109 + $0x4] sm:$0xf]
        %v5112 = vld [vmem:[%s5109 + $0x8] sm:$0xf]
        %v5113 = vld [vmem:[%s5109 + $0xc] sm:$0xf]
        %v5114 = vld [vmem:[%s5109 + $0x10] sm:$0xf]
        %v5115 = vld [vmem:[%s5109 + $0x14] sm:$0xf]
        %v5116 = vld [vmem:[%s5109 + $0x18] sm:$0xf]
        %v5117 = vld [vmem:[%s5109 + $0x1c] sm:$0xf]
        %v5118 = vld [vmem:[%s5109 + $0x20] sm:$0xf]
        %v5119 = vld [vmem:[%s5109 + $0x24] sm:$0xf]
        %v5120 = vld [vmem:[%s5109 + $0x28] sm:$0xf]
        %v5121 = vld [vmem:[%s5109 + $0x2c] sm:$0xf]
        %v5122 = vld [vmem:[%s5109 + $0x30] sm:$0xf]
        %v5123 = vld [vmem:[%s5109 + $0x34] sm:$0xf]
        %v5124 = vld [vmem:[%s5109 + $0x38] sm:$0xf]
        %v5125 = vld [vmem:[%s5109 + $0x3c] sm:$0xf]
        %v5127 = vshrl.u32 %v5092, 16
        %v5129 = vrot.slane %v5127, 4
        %v5130 = vshll.u32 %v5092, 16
        %v5132 = vrot.slane %v5130, 5
        %v5133 = vor.u32 %v5129, %v5132
        %v5135 = vshrl.u32 %v5093, 16
        %v5137 = vrot.slane %v5135, 4
        %v5138 = vshll.u32 %v5093, 16
        %v5140 = vrot.slane %v5138, 5
        %v5141 = vor.u32 %v5137, %v5140
        %v5142 = vsel %vm1432, %v5133, %v5141
        %v5144 = vshrl.u32 %v5094, 16
        %v5146 = vrot.slane %v5144, 4
        %v5147 = vshll.u32 %v5094, 16
        %v5149 = vrot.slane %v5147, 5
        %v5150 = vor.u32 %v5146, %v5149
        %v5151 = vsel %vm1432, %v5141, %v5150
        %v5153 = vshrl.u32 %v5095, 16
        %v5155 = vrot.slane %v5153, 4
        %v5156 = vshll.u32 %v5095, 16
        %v5158 = vrot.slane %v5156, 5
        %v5159 = vor.u32 %v5155, %v5158
        %v5160 = vsel %vm1432, %v5150, %v5159
        %v5162 = vshrl.u32 %v5096, 16
        %v5164 = vrot.slane %v5162, 4
        %v5165 = vshll.u32 %v5096, 16
        %v5167 = vrot.slane %v5165, 5
        %v5168 = vor.u32 %v5164, %v5167
        %v5169 = vsel %vm1432, %v5159, %v5168
        %v5171 = vshrl.u32 %v5097, 16
        %v5173 = vrot.slane %v5171, 4
        %v5174 = vshll.u32 %v5097, 16
        %v5176 = vrot.slane %v5174, 5
        %v5177 = vor.u32 %v5173, %v5176
        %v5178 = vsel %vm1432, %v5168, %v5177
        %v5180 = vshrl.u32 %v5098, 16
        %v5182 = vrot.slane %v5180, 4
        %v5183 = vshll.u32 %v5098, 16
        %v5185 = vrot.slane %v5183, 5
        %v5186 = vor.u32 %v5182, %v5185
        %v5187 = vsel %vm1432, %v5177, %v5186
        %v5189 = vshrl.u32 %v5099, 16
        %v5191 = vrot.slane %v5189, 4
        %v5192 = vshll.u32 %v5099, 16
        %v5194 = vrot.slane %v5192, 5
        %v5195 = vor.u32 %v5191, %v5194
        %v5196 = vsel %vm1432, %v5186, %v5195
        %v5198 = vshrl.u32 %v5100, 16
        %v5200 = vrot.slane %v5198, 4
        %v5201 = vshll.u32 %v5100, 16
        %v5203 = vrot.slane %v5201, 5
        %v5204 = vor.u32 %v5200, %v5203
        %v5205 = vsel %vm1432, %v5195, %v5204
        %v5207 = vshrl.u32 %v5101, 16
        %v5209 = vrot.slane %v5207, 4
        %v5210 = vshll.u32 %v5101, 16
        %v5212 = vrot.slane %v5210, 5
        %v5213 = vor.u32 %v5209, %v5212
        %v5214 = vsel %vm1432, %v5204, %v5213
        %v5216 = vshrl.u32 %v5102, 16
        %v5218 = vrot.slane %v5216, 4
        %v5219 = vshll.u32 %v5102, 16
        %v5221 = vrot.slane %v5219, 5
        %v5222 = vor.u32 %v5218, %v5221
        %v5223 = vsel %vm1432, %v5213, %v5222
        %v5225 = vshrl.u32 %v5103, 16
        %v5227 = vrot.slane %v5225, 4
        %v5228 = vshll.u32 %v5103, 16
        %v5230 = vrot.slane %v5228, 5
        %v5231 = vor.u32 %v5227, %v5230
        %v5232 = vsel %vm1432, %v5222, %v5231
        %v5234 = vshrl.u32 %v5104, 16
        %v5236 = vrot.slane %v5234, 4
        %v5237 = vshll.u32 %v5104, 16
        %v5239 = vrot.slane %v5237, 5
        %v5240 = vor.u32 %v5236, %v5239
        %v5241 = vsel %vm1432, %v5231, %v5240
        %v5243 = vshrl.u32 %v5105, 16
        %v5245 = vrot.slane %v5243, 4
        %v5246 = vshll.u32 %v5105, 16
        %v5248 = vrot.slane %v5246, 5
        %v5249 = vor.u32 %v5245, %v5248
        %v5250 = vsel %vm1432, %v5240, %v5249
        %v5252 = vshrl.u32 %v5106, 16
        %v5254 = vrot.slane %v5252, 4
        %v5255 = vshll.u32 %v5106, 16
        %v5257 = vrot.slane %v5255, 5
        %v5258 = vor.u32 %v5254, %v5257
        %v5259 = vsel %vm1432, %v5249, %v5258
        %v5261 = vshrl.u32 %v5107, 16
        %v5263 = vrot.slane %v5261, 4
        %v5264 = vshll.u32 %v5107, 16
        %v5266 = vrot.slane %v5264, 5
        %v5267 = vor.u32 %v5263, %v5266
        %v5268 = vsel %vm1432, %v5258, %v5267
        %v5270 = vshrl.u32 %v5108, 16
        %v5272 = vrot.slane %v5270, 4
        %v5273 = vshll.u32 %v5108, 16
        %v5275 = vrot.slane %v5273, 5
        %v5276 = vor.u32 %v5272, %v5275
        %v5277 = vsel %vm1432, %v5267, %v5276
        %v5310 = vunpack.c.l.b16 %v5110
        %v5311 = vunpack.c.l.b16 %v5111
        %v5312 = vunpack.c.l.b16 %v5112
        %v5313 = vunpack.c.l.b16 %v5113
        %v5314 = vunpack.c.l.b16 %v5114
        %v5315 = vunpack.c.l.b16 %v5115
        %v5316 = vunpack.c.l.b16 %v5116
        %v5317 = vunpack.c.l.b16 %v5117
        %v5318 = vunpack.c.l.b16 %v5118
        %v5319 = vunpack.c.l.b16 %v5119
        %v5320 = vunpack.c.l.b16 %v5120
        %v5321 = vunpack.c.l.b16 %v5121
        %v5322 = vunpack.c.l.b16 %v5122
        %v5323 = vunpack.c.l.b16 %v5123
        %v5324 = vunpack.c.l.b16 %v5124
        %v5325 = vunpack.c.l.b16 %v5125
        %v5326 = vpack.c.b16 %v5311, %v5310
        %v5327 = vpack.c.b16 %v5313, %v5312
        %v5328 = vpack.c.b16 %v5315, %v5314
        %v5329 = vpack.c.b16 %v5317, %v5316
        %v5330 = vpack.c.b16 %v5319, %v5318
        %v5331 = vpack.c.b16 %v5321, %v5320
        %v5332 = vpack.c.b16 %v5323, %v5322
        %v5333 = vpack.c.b16 %v5325, %v5324
        %5342 = vmatprep.subr.bf16.mxu0 0
        %5343 = vmatpush1.bf16.msra.mxu0 %v5326
        %5344 = vmatprep.subr.bf16.mxu0 0
        %5345 = vmatpush1.bf16.msra.mxu0 %v5327
        %5346 = vmatprep.subr.bf16.mxu0 0
        %5347 = vmatpush1.bf16.msra.mxu0 %v5328
        %5348 = vmatprep.subr.bf16.mxu0 0
        %5349 = vmatpush1.bf16.msra.mxu0 %v5329
        %5350 = vmatprep.subr.bf16.mxu0 0
        %5351 = vmatpush1.bf16.msra.mxu0 %v5330
        %5352 = vmatprep.subr.bf16.mxu0 0
        %5353 = vmatpush1.bf16.msra.mxu0 %v5331
        %5354 = vmatprep.subr.bf16.mxu0 0
        %5355 = vmatpush1.bf16.msra.mxu0 %v5332
        %5356 = vmatprep.subr.bf16.mxu0 0
        %5357 = vmatpush1.bf16.msra.mxu0 %v5333
        %5358 = vmatprep.subr.bf16.mxu0 0
        %5359 = vmatpush1.bf16.msra.mxu0 0
        %5360 = vmatprep.subr.bf16.mxu0 0
        %5361 = vmatpush1.bf16.msra.mxu0 0
        %5362 = vmatprep.subr.bf16.mxu0 0
        %5363 = vmatpush1.bf16.msra.mxu0 0
        %5364 = vmatprep.subr.bf16.mxu0 0
        %5365 = vmatpush1.bf16.msra.mxu0 0
        %5366 = vmatprep.subr.bf16.mxu0 0
        %5367 = vmatpush1.bf16.msra.mxu0 0
        %5368 = vmatprep.subr.bf16.mxu0 0
        %5369 = vmatpush1.bf16.msra.mxu0 0
        %5370 = vmatprep.subr.bf16.mxu0 0
        %5371 = vmatpush1.bf16.msra.mxu0 0
        %5372 = vmatprep.subr.bf16.mxu0 0
        %5373 = vmatpush1.bf16.msra.mxu0 0
        %5374 = vmatprep.mubr.bf16.mxu0 0
        %5375 = vmatmul.mubr.bf16.gmra.mrb[0].mxu0 %v5142
        %v5376 = vpop.f32.mrb[0].mxu0
        %v5377 = vadd.f32 0.0, %v5376
        %v5378 = vpop.f32.mrb[0].mxu0
        %v5379 = vpop.f32.mrb[0].mxu0
        %v5380 = vadd.f32 0.0, %v5379
        %v5381 = vpop.f32.mrb[0].mxu0
        %5382 = vmatprep.mubr.bf16.mxu0 0
        %5383 = vmatmul.mubr.bf16.gmra.mrb[0].mxu0 %v5151
        %v5384 = vpop.f32.mrb[0].mxu0
        %v5385 = vadd.f32 0.0, %v5384
        %v5386 = vpop.f32.mrb[0].mxu0
        %v5387 = vpop.f32.mrb[0].mxu0
        %v5388 = vadd.f32 0.0, %v5387
        %v5389 = vpop.f32.mrb[0].mxu0
        %5390 = vmatprep.mubr.bf16.mxu0 0
        %5391 = vmatmul.mubr.bf16.gmra.mrb[0].mxu0 %v5160
        %v5392 = vpop.f32.mrb[0].mxu0
        %v5393 = vadd.f32 0.0, %v5392
        %v5394 = vpop.f32.mrb[0].mxu0
        %v5395 = vpop.f32.mrb[0].mxu0
        %v5396 = vadd.f32 0.0, %v5395
        %v5397 = vpop.f32.mrb[0].mxu0
        %5398 = vmatprep.mubr.bf16.mxu0 0
        %5399 = vmatmul.mubr.bf16.gmra.mrb[0].mxu0 %v5169
        %v5400 = vpop.f32.mrb[0].mxu0
        %v5401 = vadd.f32 0.0, %v5400
        %v5402 = vpop.f32.mrb[0].mxu0
        %v5403 = vpop.f32.mrb[0].mxu0
        %v5404 = vadd.f32 0.0, %v5403
        %v5405 = vpop.f32.mrb[0].mxu0
        %5406 = vmatprep.mubr.bf16.mxu0 0
        %5407 = vmatmul.mubr.bf16.gmra.mrb[0].mxu0 %v5178
        %v5408 = vpop.f32.mrb[0].mxu0
        %v5409 = vadd.f32 0.0, %v5408
        %v5410 = vpop.f32.mrb[0].mxu0
        %v5411 = vpop.f32.mrb[0].mxu0
        %v5412 = vadd.f32 0.0, %v5411
        %v5413 = vpop.f32.mrb[0].mxu0
        %5414 = vmatprep.mubr.bf16.mxu0 0
        %5415 = vmatmul.mubr.bf16.gmra.mrb[0].mxu0 %v5187
        %v5416 = vpop.f32.mrb[0].mxu0
        %v5417 = vadd.f32 0.0, %v5416
        %v5418 = vpop.f32.mrb[0].mxu0
        %v5419 = vpop.f32.mrb[0].mxu0
        %v5420 = vadd.f32 0.0, %v5419
        %v5421 = vpop.f32.mrb[0].mxu0
        %5422 = vmatprep.mubr.bf16.mxu0 0
        %5423 = vmatmul.mubr.bf16.gmra.mrb[0].mxu0 %v5196
        %v5424 = vpop.f32.mrb[0].mxu0
        %v5425 = vadd.f32 0.0, %v5424
        %v5426 = vpop.f32.mrb[0].mxu0
        %v5427 = vpop.f32.mrb[0].mxu0
        %v5428 = vadd.f32 0.0, %v5427
        %v5429 = vpop.f32.mrb[0].mxu0
        %5430 = vmatprep.mubr.bf16.mxu0 0
        %5431 = vmatmul.mubr.bf16.gmra.mrb[0].mxu0 %v5205
        %v5432 = vpop.f32.mrb[0].mxu0
        %v5433 = vadd.f32 0.0, %v5432
        %v5434 = vpop.f32.mrb[0].mxu0
        %v5435 = vpop.f32.mrb[0].mxu0
        %v5436 = vadd.f32 0.0, %v5435
        %v5437 = vpop.f32.mrb[0].mxu0
        %5438 = vmatprep.mubr.bf16.mxu0 0
        %5439 = vmatmul.mubr.bf16.gmra.mrb[0].mxu0 %v5214
        %v5440 = vpop.f32.mrb[0].mxu0
        %v5441 = vadd.f32 0.0, %v5440
        %v5442 = vpop.f32.mrb[0].mxu0
        %v5443 = vpop.f32.mrb[0].mxu0
        %v5444 = vadd.f32 0.0, %v5443
        %v5445 = vpop.f32.mrb[0].mxu0
        %5446 = vmatprep.mubr.bf16.mxu0 0
        %5447 = vmatmul.mubr.bf16.gmra.mrb[0].mxu0 %v5223
        %v5448 = vpop.f32.mrb[0].mxu0
        %v5449 = vadd.f32 0.0, %v5448
        %v5450 = vpop.f32.mrb[0].mxu0
        %v5451 = vpop.f32.mrb[0].mxu0
        %v5452 = vadd.f32 0.0, %v5451
        %v5453 = vpop.f32.mrb[0].mxu0
        %5454 = vmatprep.mubr.bf16.mxu0 0
        %5455 = vmatmul.mubr.bf16.gmra.mrb[0].mxu0 %v5232
        %v5456 = vpop.f32.mrb[0].mxu0
        %v5457 = vadd.f32 0.0, %v5456
        %v5458 = vpop.f32.mrb[0].mxu0
        %v5459 = vpop.f32.mrb[0].mxu0
        %v5460 = vadd.f32 0.0, %v5459
        %v5461 = vpop.f32.mrb[0].mxu0
        %5462 = vmatprep.mubr.bf16.mxu0 0
        %5463 = vmatmul.mubr.bf16.gmra.mrb[0].mxu0 %v5241
        %v5464 = vpop.f32.mrb[0].mxu0
        %v5465 = vadd.f32 0.0, %v5464
        %v5466 = vpop.f32.mrb[0].mxu0
        %v5467 = vpop.f32.mrb[0].mxu0
        %v5468 = vadd.f32 0.0, %v5467
        %v5469 = vpop.f32.mrb[0].mxu0
        %5470 = vmatprep.mubr.bf16.mxu0 0
        %5471 = vmatmul.mubr.bf16.gmra.mrb[0].mxu0 %v5250
        %v5472 = vpop.f32.mrb[0].mxu0
        %v5473 = vadd.f32 0.0, %v5472
        %v5474 = vpop.f32.mrb[0].mxu0
        %v5475 = vpop.f32.mrb[0].mxu0
        %v5476 = vadd.f32 0.0, %v5475
        %v5477 = vpop.f32.mrb[0].mxu0
        %5478 = vmatprep.mubr.bf16.mxu0 0
        %5479 = vmatmul.mubr.bf16.gmra.mrb[0].mxu0 %v5259
        %v5480 = vpop.f32.mrb[0].mxu0
        %v5481 = vadd.f32 0.0, %v5480
        %v5482 = vpop.f32.mrb[0].mxu0
        %v5483 = vpop.f32.mrb[0].mxu0
        %v5484 = vadd.f32 0.0, %v5483
        %v5485 = vpop.f32.mrb[0].mxu0
        %5486 = vmatprep.mubr.bf16.mxu0 0
        %5487 = vmatmul.mubr.bf16.gmra.mrb[0].mxu0 %v5268
        %v5488 = vpop.f32.mrb[0].mxu0
        %v5489 = vadd.f32 0.0, %v5488
        %v5490 = vpop.f32.mrb[0].mxu0
        %v5491 = vpop.f32.mrb[0].mxu0
        %v5492 = vadd.f32 0.0, %v5491
        %v5493 = vpop.f32.mrb[0].mxu0
        %5494 = vmatprep.mubr.bf16.mxu0 0
        %5495 = vmatmul.mubr.bf16.gmra.mrb[0].mxu0 %v5277
        %v5496 = vpop.f32.mrb[0].mxu0
        %v5497 = vadd.f32 0.0, %v5496
        %v5498 = vpop.f32.mrb[0].mxu0
        %v5499 = vpop.f32.mrb[0].mxu0
        %v5500 = vadd.f32 0.0, %v5499
        %v5501 = vpop.f32.mrb[0].mxu0
        %5502 = vdwg.mxu0
        %v5503 = vadd.f32 %v5059, %v5377
        %v5504 = vadd.f32 %v5060, %v5380
        %v5505 = vadd.f32 %v5061, %v5385
        %v5506 = vadd.f32 %v5062, %v5388
        %v5507 = vadd.f32 %v5063, %v5393
        %v5508 = vadd.f32 %v5064, %v5396
        %v5509 = vadd.f32 %v5065, %v5401
        %v5510 = vadd.f32 %v5066, %v5404
        %v5511 = vadd.f32 %v5067, %v5409
        %v5512 = vadd.f32 %v5068, %v5412
        %v5513 = vadd.f32 %v5069, %v5417
        %v5514 = vadd.f32 %v5070, %v5420
        %v5515 = vadd.f32 %v5071, %v5425
        %v5516 = vadd.f32 %v5072, %v5428
        %v5517 = vadd.f32 %v5073, %v5433
        %v5518 = vadd.f32 %v5074, %v5436
        %v5519 = vadd.f32 %v5075, %v5441
        %v5520 = vadd.f32 %v5076, %v5444
        %v5521 = vadd.f32 %v5077, %v5449
        %v5522 = vadd.f32 %v5078, %v5452
        %v5523 = vadd.f32 %v5079, %v5457
        %v5524 = vadd.f32 %v5080, %v5460
        %v5525 = vadd.f32 %v5081, %v5465
        %v5526 = vadd.f32 %v5082, %v5468
        %v5527 = vadd.f32 %v5083, %v5473
        %v5528 = vadd.f32 %v5084, %v5476
        %v5529 = vadd.f32 %v5085, %v5481
        %v5530 = vadd.f32 %v5086, %v5484
        %v5531 = vadd.f32 %v5087, %v5489
        %v5532 = vadd.f32 %v5088, %v5492
        %v5533 = vadd.f32 %v5089, %v5497
        %v5534 = vadd.f32 %v5090, %v5500
        %v5535 = vld [vmem:[%s5] sm:$0x1]
        %v5537 = vlaneseq
        %v5538 = vshrl.u32 %v5537, 7
        %v5539 = vsub.s32 0, %v5538
        %v5540 = vrot.slane %v5535, %v5539
        %v5542 = vadd.f32 %v5503, %v5540
        %v5543 = vadd.f32 %v5504, %v5540
        %v5544 = vadd.f32 %v5505, %v5540
        %v5545 = vadd.f32 %v5506, %v5540
        %v5546 = vadd.f32 %v5507, %v5540
        %v5547 = vadd.f32 %v5508, %v5540
        %v5548 = vadd.f32 %v5509, %v5540
        %v5549 = vadd.f32 %v5510, %v5540
        %v5550 = vadd.f32 %v5511, %v5540
        %v5551 = vadd.f32 %v5512, %v5540
        %v5552 = vadd.f32 %v5513, %v5540
        %v5553 = vadd.f32 %v5514, %v5540
        %v5554 = vadd.f32 %v5515, %v5540
        %v5555 = vadd.f32 %v5516, %v5540
        %v5556 = vadd.f32 %v5517, %v5540
        %v5557 = vadd.f32 %v5518, %v5540
        %v5558 = vadd.f32 %v5519, %v5540
        %v5559 = vadd.f32 %v5520, %v5540
        %v5560 = vadd.f32 %v5521, %v5540
        %v5561 = vadd.f32 %v5522, %v5540
        %v5562 = vadd.f32 %v5523, %v5540
        %v5563 = vadd.f32 %v5524, %v5540
        %v5564 = vadd.f32 %v5525, %v5540
        %v5565 = vadd.f32 %v5526, %v5540
        %v5566 = vadd.f32 %v5527, %v5540
        %v5567 = vadd.f32 %v5528, %v5540
        %v5568 = vadd.f32 %v5529, %v5540
        %v5569 = vadd.f32 %v5530, %v5540
        %v5570 = vadd.f32 %v5531, %v5540
        %v5571 = vadd.f32 %v5532, %v5540
        %v5572 = vadd.f32 %v5533, %v5540
        %v5573 = vadd.f32 %v5534, %v5540
        %v5574 = vmax.f32 %v5542, 0.0
        %v5575 = vmax.f32 %v5543, 0.0
        %v5576 = vmax.f32 %v5544, 0.0
        %v5577 = vmax.f32 %v5545, 0.0
        %v5578 = vmax.f32 %v5546, 0.0
        %v5579 = vmax.f32 %v5547, 0.0
        %v5580 = vmax.f32 %v5548, 0.0
        %v5581 = vmax.f32 %v5549, 0.0
        %v5582 = vmax.f32 %v5550, 0.0
        %v5583 = vmax.f32 %v5551, 0.0
        %v5584 = vmax.f32 %v5552, 0.0
        %v5585 = vmax.f32 %v5553, 0.0
        %v5586 = vmax.f32 %v5554, 0.0
        %v5587 = vmax.f32 %v5555, 0.0
        %v5588 = vmax.f32 %v5556, 0.0
        %v5589 = vmax.f32 %v5557, 0.0
        %v5590 = vmax.f32 %v5558, 0.0
        %v5591 = vmax.f32 %v5559, 0.0
        %v5592 = vmax.f32 %v5560, 0.0
        %v5593 = vmax.f32 %v5561, 0.0
        %v5594 = vmax.f32 %v5562, 0.0
        %v5595 = vmax.f32 %v5563, 0.0
        %v5596 = vmax.f32 %v5564, 0.0
        %v5597 = vmax.f32 %v5565, 0.0
        %v5598 = vmax.f32 %v5566, 0.0
        %v5599 = vmax.f32 %v5567, 0.0
        %v5600 = vmax.f32 %v5568, 0.0
        %v5601 = vmax.f32 %v5569, 0.0
        %v5602 = vmax.f32 %v5570, 0.0
        %v5603 = vmax.f32 %v5571, 0.0
        %v5604 = vmax.f32 %v5572, 0.0
        %v5605 = vmax.f32 %v5573, 0.0
        %v5606 = vpack.c.bf16 %v5575, %v5574
        %v5607 = vpack.c.bf16 %v5577, %v5576
        %v5608 = vpack.c.bf16 %v5579, %v5578
        %v5609 = vpack.c.bf16 %v5581, %v5580
        %v5610 = vpack.c.bf16 %v5583, %v5582
        %v5611 = vpack.c.bf16 %v5585, %v5584
        %v5612 = vpack.c.bf16 %v5587, %v5586
        %v5613 = vpack.c.bf16 %v5589, %v5588
        %v5614 = vpack.c.bf16 %v5591, %v5590
        %v5615 = vpack.c.bf16 %v5593, %v5592
        %v5616 = vpack.c.bf16 %v5595, %v5594
        %v5617 = vpack.c.bf16 %v5597, %v5596
        %v5618 = vpack.c.bf16 %v5599, %v5598
        %v5619 = vpack.c.bf16 %v5601, %v5600
        %v5620 = vpack.c.bf16 %v5603, %v5602
        %v5621 = vpack.c.bf16 %v5605, %v5604
        %v5622 = vld [vmem:[#allocation9] sm:$0xf]
        %v5623 = vld [vmem:[#allocation9 + $0x4] sm:$0xf]
        %v5624 = vld [vmem:[#allocation9 + $0x8] sm:$0xf]
        %v5625 = vld [vmem:[#allocation9 + $0xc] sm:$0xf]
        %v5626 = vld [vmem:[#allocation9 + $0x10] sm:$0xf]
        %v5627 = vld [vmem:[#allocation9 + $0x14] sm:$0xf]
        %v5628 = vld [vmem:[#allocation9 + $0x18] sm:$0xf]
        %v5629 = vld [vmem:[#allocation9 + $0x1c] sm:$0xf]
        %v5630 = vld [vmem:[#allocation9 + $0x20] sm:$0xf]
        %v5631 = vld [vmem:[#allocation9 + $0x24] sm:$0xf]
        %v5632 = vld [vmem:[#allocation9 + $0x28] sm:$0xf]
        %v5633 = vld [vmem:[#allocation9 + $0x2c] sm:$0xf]
        %v5634 = vld [vmem:[#allocation9 + $0x30] sm:$0xf]
        %v5635 = vld [vmem:[#allocation9 + $0x34] sm:$0xf]
        %v5636 = vld [vmem:[#allocation9 + $0x38] sm:$0xf]
        %v5637 = vld [vmem:[#allocation9 + $0x3c] sm:$0xf]
        %v5638 = vld [vmem:[%s6] sm:$0x1]
        %v5640 = vlaneseq
        %v5641 = vshrl.u32 %v5640, 7
        %v5642 = vsub.s32 0, %v5641
        %v5643 = vrot.slane %v5638, %v5642
        %v5661 = vunpack.c.l.b16 %v5622
        %v5662 = vunpack.c.l.b16 %v5623
        %v5663 = vunpack.c.l.b16 %v5624
        %v5664 = vunpack.c.l.b16 %v5625
        %v5665 = vunpack.c.l.b16 %v5626
        %v5666 = vunpack.c.l.b16 %v5627
        %v5667 = vunpack.c.l.b16 %v5628
        %v5668 = vunpack.c.l.b16 %v5629
        %v5669 = vunpack.c.l.b16 %v5630
        %v5670 = vunpack.c.l.b16 %v5631
        %v5671 = vunpack.c.l.b16 %v5632
        %v5672 = vunpack.c.l.b16 %v5633
        %v5673 = vunpack.c.l.b16 %v5634
        %v5674 = vunpack.c.l.b16 %v5635
        %v5675 = vunpack.c.l.b16 %v5636
        %v5676 = vunpack.c.l.b16 %v5637
        %v5677 = vpack.c.b16 %v5662, %v5661
        %v5678 = vpack.c.b16 %v5664, %v5663
        %v5679 = vpack.c.b16 %v5666, %v5665
        %v5680 = vpack.c.b16 %v5668, %v5667
        %v5681 = vpack.c.b16 %v5670, %v5669
        %v5682 = vpack.c.b16 %v5672, %v5671
        %v5683 = vpack.c.b16 %v5674, %v5673
        %v5684 = vpack.c.b16 %v5676, %v5675
        %5693 = vmatprep.subr.bf16.mxu0 0
        %5694 = vmatpush1.bf16.msra.mxu0 %v5677
        %5695 = vmatprep.subr.bf16.mxu0 0
        %5696 = vmatpush1.bf16.msra.mxu0 %v5678
        %5697 = vmatprep.subr.bf16.mxu0 0
        %5698 = vmatpush1.bf16.msra.mxu0 %v5679
        %5699 = vmatprep.subr.bf16.mxu0 0
        %5700 = vmatpush1.bf16.msra.mxu0 %v5680
        %5701 = vmatprep.subr.bf16.mxu0 0
        %5702 = vmatpush1.bf16.msra.mxu0 %v5681
        %5703 = vmatprep.subr.bf16.mxu0 0
        %5704 = vmatpush1.bf16.msra.mxu0 %v5682
        %5705 = vmatprep.subr.bf16.mxu0 0
        %5706 = vmatpush1.bf16.msra.mxu0 %v5683
        %5707 = vmatprep.subr.bf16.mxu0 0
        %5708 = vmatpush1.bf16.msra.mxu0 %v5684
        %5709 = vmatprep.subr.bf16.mxu0 0
        %5710 = vmatpush1.bf16.msra.mxu0 0
        %5711 = vmatprep.subr.bf16.mxu0 0
        %5712 = vmatpush1.bf16.msra.mxu0 0
        %5713 = vmatprep.subr.bf16.mxu0 0
        %5714 = vmatpush1.bf16.msra.mxu0 0
        %5715 = vmatprep.subr.bf16.mxu0 0
        %5716 = vmatpush1.bf16.msra.mxu0 0
        %5717 = vmatprep.subr.bf16.mxu0 0
        %5718 = vmatpush1.bf16.msra.mxu0 0
        %5719 = vmatprep.subr.bf16.mxu0 0
        %5720 = vmatpush1.bf16.msra.mxu0 0
        %5721 = vmatprep.subr.bf16.mxu0 0
        %5722 = vmatpush1.bf16.msra.mxu0 0
        %5723 = vmatprep.subr.bf16.mxu0 0
        %5724 = vmatpush1.bf16.msra.mxu0 0
        %5725 = vmatprep.mubr.bf16.mxu0 0
        %5726 = vmatmul.mubr.bf16.gmra.mrb[0].mxu0 %v5606
        %v5727 = vpop.f32.mrb[0].mxu0
        %v5728 = vadd.f32 %v5643, %v5727
        %v5729 = vpop.f32.mrb[0].mxu0
        %v5730 = vpop.f32.mrb[0].mxu0
        %v5731 = vadd.f32 %v5643, %v5730
        %v5732 = vpop.f32.mrb[0].mxu0
        %5733 = vmatprep.mubr.bf16.mxu0 0
        %5734 = vmatmul.mubr.bf16.gmra.mrb[0].mxu0 %v5607
        %v5735 = vpop.f32.mrb[0].mxu0
        %v5736 = vadd.f32 %v5643, %v5735
        %v5737 = vpop.f32.mrb[0].mxu0
        %v5738 = vpop.f32.mrb[0].mxu0
        %v5739 = vadd.f32 %v5643, %v5738
        %v5740 = vpop.f32.mrb[0].mxu0
        %5741 = vmatprep.mubr.bf16.mxu0 0
        %5742 = vmatmul.mubr.bf16.gmra.mrb[0].mxu0 %v5608
        %v5743 = vpop.f32.mrb[0].mxu0
        %v5744 = vadd.f32 %v5643, %v5743
        %v5745 = vpop.f32.mrb[0].mxu0
        %v5746 = vpop.f32.mrb[0].mxu0
        %v5747 = vadd.f32 %v5643, %v5746
        %v5748 = vpop.f32.mrb[0].mxu0
        %5749 = vmatprep.mubr.bf16.mxu0 0
        %5750 = vmatmul.mubr.bf16.gmra.mrb[0].mxu0 %v5609
        %v5751 = vpop.f32.mrb[0].mxu0
        %v5752 = vadd.f32 %v5643, %v5751
        %v5753 = vpop.f32.mrb[0].mxu0
        %v5754 = vpop.f32.mrb[0].mxu0
        %v5755 = vadd.f32 %v5643, %v5754
        %v5756 = vpop.f32.mrb[0].mxu0
        %5757 = vmatprep.mubr.bf16.mxu0 0
        %5758 = vmatmul.mubr.bf16.gmra.mrb[0].mxu0 %v5610
        %v5759 = vpop.f32.mrb[0].mxu0
        %v5760 = vadd.f32 %v5643, %v5759
        %v5761 = vpop.f32.mrb[0].mxu0
        %v5762 = vpop.f32.mrb[0].mxu0
        %v5763 = vadd.f32 %v5643, %v5762
        %v5764 = vpop.f32.mrb[0].mxu0
        %5765 = vmatprep.mubr.bf16.mxu0 0
        %5766 = vmatmul.mubr.bf16.gmra.mrb[0].mxu0 %v5611
        %v5767 = vpop.f32.mrb[0].mxu0
        %v5768 = vadd.f32 %v5643, %v5767
        %v5769 = vpop.f32.mrb[0].mxu0
        %v5770 = vpop.f32.mrb[0].mxu0
        %v5771 = vadd.f32 %v5643, %v5770
        %v5772 = vpop.f32.mrb[0].mxu0
        %5773 = vmatprep.mubr.bf16.mxu0 0
        %5774 = vmatmul.mubr.bf16.gmra.mrb[0].mxu0 %v5612
        %v5775 = vpop.f32.mrb[0].mxu0
        %v5776 = vadd.f32 %v5643, %v5775
        %v5777 = vpop.f32.mrb[0].mxu0
        %v5778 = vpop.f32.mrb[0].mxu0
        %v5779 = vadd.f32 %v5643, %v5778
        %v5780 = vpop.f32.mrb[0].mxu0
        %5781 = vmatprep.mubr.bf16.mxu0 0
        %5782 = vmatmul.mubr.bf16.gmra.mrb[0].mxu0 %v5613
        %v5783 = vpop.f32.mrb[0].mxu0
        %v5784 = vadd.f32 %v5643, %v5783
        %v5785 = vpop.f32.mrb[0].mxu0
        %v5786 = vpop.f32.mrb[0].mxu0
        %v5787 = vadd.f32 %v5643, %v5786
        %v5788 = vpop.f32.mrb[0].mxu0
        %5789 = vmatprep.mubr.bf16.mxu0 0
        %5790 = vmatmul.mubr.bf16.gmra.mrb[0].mxu0 %v5614
        %v5791 = vpop.f32.mrb[0].mxu0
        %v5792 = vadd.f32 %v5643, %v5791
        %v5793 = vpop.f32.mrb[0].mxu0
        %v5794 = vpop.f32.mrb[0].mxu0
        %v5795 = vadd.f32 %v5643, %v5794
        %v5796 = vpop.f32.mrb[0].mxu0
        %5797 = vmatprep.mubr.bf16.mxu0 0
        %5798 = vmatmul.mubr.bf16.gmra.mrb[0].mxu0 %v5615
        %v5799 = vpop.f32.mrb[0].mxu0
        %v5800 = vadd.f32 %v5643, %v5799
        %v5801 = vpop.f32.mrb[0].mxu0
        %v5802 = vpop.f32.mrb[0].mxu0
        %v5803 = vadd.f32 %v5643, %v5802
        %v5804 = vpop.f32.mrb[0].mxu0
        %5805 = vmatprep.mubr.bf16.mxu0 0
        %5806 = vmatmul.mubr.bf16.gmra.mrb[0].mxu0 %v5616
        %v5807 = vpop.f32.mrb[0].mxu0
        %v5808 = vadd.f32 %v5643, %v5807
        %v5809 = vpop.f32.mrb[0].mxu0
        %v5810 = vpop.f32.mrb[0].mxu0
        %v5811 = vadd.f32 %v5643, %v5810
        %v5812 = vpop.f32.mrb[0].mxu0
        %5813 = vmatprep.mubr.bf16.mxu0 0
        %5814 = vmatmul.mubr.bf16.gmra.mrb[0].mxu0 %v5617
        %v5815 = vpop.f32.mrb[0].mxu0
        %v5816 = vadd.f32 %v5643, %v5815
        %v5817 = vpop.f32.mrb[0].mxu0
        %v5818 = vpop.f32.mrb[0].mxu0
        %v5819 = vadd.f32 %v5643, %v5818
        %v5820 = vpop.f32.mrb[0].mxu0
        %5821 = vmatprep.mubr.bf16.mxu0 0
        %5822 = vmatmul.mubr.bf16.gmra.mrb[0].mxu0 %v5618
        %v5823 = vpop.f32.mrb[0].mxu0
        %v5824 = vadd.f32 %v5643, %v5823
        %v5825 = vpop.f32.mrb[0].mxu0
        %v5826 = vpop.f32.mrb[0].mxu0
        %v5827 = vadd.f32 %v5643, %v5826
        %v5828 = vpop.f32.mrb[0].mxu0
        %5829 = vmatprep.mubr.bf16.mxu0 0
        %5830 = vmatmul.mubr.bf16.gmra.mrb[0].mxu0 %v5619
        %v5831 = vpop.f32.mrb[0].mxu0
        %v5832 = vadd.f32 %v5643, %v5831
        %v5833 = vpop.f32.mrb[0].mxu0
        %v5834 = vpop.f32.mrb[0].mxu0
        %v5835 = vadd.f32 %v5643, %v5834
        %v5836 = vpop.f32.mrb[0].mxu0
        %5837 = vmatprep.mubr.bf16.mxu0 0
        %5838 = vmatmul.mubr.bf16.gmra.mrb[0].mxu0 %v5620
        %v5839 = vpop.f32.mrb[0].mxu0
        %v5840 = vadd.f32 %v5643, %v5839
        %v5841 = vpop.f32.mrb[0].mxu0
        %v5842 = vpop.f32.mrb[0].mxu0
        %v5843 = vadd.f32 %v5643, %v5842
        %v5844 = vpop.f32.mrb[0].mxu0
        %5845 = vmatprep.mubr.bf16.mxu0 0
        %5846 = vmatmul.mubr.bf16.gmra.mrb[0].mxu0 %v5621
        %v5847 = vpop.f32.mrb[0].mxu0
        %v5848 = vadd.f32 %v5643, %v5847
        %v5849 = vpop.f32.mrb[0].mxu0
        %v5850 = vpop.f32.mrb[0].mxu0
        %v5851 = vadd.f32 %v5643, %v5850
        %v5852 = vpop.f32.mrb[0].mxu0
        %5853 = vdwg.mxu0
        %v5854 = vld [vmem:[%s298] sm:$0xff]
        %v5855 = vld [vmem:[%s298 + $0x8] sm:$0xff]
        %v5856 = vld [vmem:[%s298 + $0x10] sm:$0xff]
        %v5857 = vld [vmem:[%s298 + $0x18] sm:$0xff]
        %v5858 = vld [vmem:[%s298 + $0x20] sm:$0xff]
        %v5859 = vld [vmem:[%s298 + $0x28] sm:$0xff]
        %v5860 = vld [vmem:[%s298 + $0x30] sm:$0xff]
        %v5861 = vld [vmem:[%s298 + $0x38] sm:$0xff]
        %v5862 = vld [vmem:[%s298 + $0x40] sm:$0xff]
        %v5863 = vld [vmem:[%s298 + $0x48] sm:$0xff]
        %v5864 = vld [vmem:[%s298 + $0x50] sm:$0xff]
        %v5865 = vld [vmem:[%s298 + $0x58] sm:$0xff]
        %v5866 = vld [vmem:[%s298 + $0x60] sm:$0xff]
        %v5867 = vld [vmem:[%s298 + $0x68] sm:$0xff]
        %v5868 = vld [vmem:[%s298 + $0x70] sm:$0xff]
        %v5869 = vld [vmem:[%s298 + $0x78] sm:$0xff]
        %v5870 = vld [vmem:[%s298 + $0x80] sm:$0xff]
        %v5871 = vld [vmem:[%s298 + $0x88] sm:$0xff]
        %v5872 = vld [vmem:[%s298 + $0x90] sm:$0xff]
        %v5873 = vld [vmem:[%s298 + $0x98] sm:$0xff]
        %v5874 = vld [vmem:[%s298 + $0xa0] sm:$0xff]
        %v5875 = vld [vmem:[%s298 + $0xa8] sm:$0xff]
        %v5876 = vld [vmem:[%s298 + $0xb0] sm:$0xff]
        %v5877 = vld [vmem:[%s298 + $0xb8] sm:$0xff]
        %v5878 = vld [vmem:[%s298 + $0xc0] sm:$0xff]
        %v5879 = vld [vmem:[%s298 + $0xc8] sm:$0xff]
        %v5880 = vld [vmem:[%s298 + $0xd0] sm:$0xff]
        %v5881 = vld [vmem:[%s298 + $0xd8] sm:$0xff]
        %v5882 = vld [vmem:[%s298 + $0xe0] sm:$0xff]
        %v5883 = vld [vmem:[%s298 + $0xe8] sm:$0xff]
        %v5884 = vld [vmem:[%s298 + $0xf0] sm:$0xff]
        %v5885 = vld [vmem:[%s298 + $0xf8] sm:$0xff]
        %v5886 = vadd.f32 %v5728, %v5854
        %v5887 = vadd.f32 %v5731, %v5855
        %v5888 = vadd.f32 %v5736, %v5856
        %v5889 = vadd.f32 %v5739, %v5857
        %v5890 = vadd.f32 %v5744, %v5858
        %v5891 = vadd.f32 %v5747, %v5859
        %v5892 = vadd.f32 %v5752, %v5860
        %v5893 = vadd.f32 %v5755, %v5861
        %v5894 = vadd.f32 %v5760, %v5862
        %v5895 = vadd.f32 %v5763, %v5863
        %v5896 = vadd.f32 %v5768, %v5864
        %v5897 = vadd.f32 %v5771, %v5865
        %v5898 = vadd.f32 %v5776, %v5866
        %v5899 = vadd.f32 %v5779, %v5867
        %v5900 = vadd.f32 %v5784, %v5868
        %v5901 = vadd.f32 %v5787, %v5869
        %v5902 = vadd.f32 %v5792, %v5870
        %v5903 = vadd.f32 %v5795, %v5871
        %v5904 = vadd.f32 %v5800, %v5872
        %v5905 = vadd.f32 %v5803, %v5873
        %v5906 = vadd.f32 %v5808, %v5874
        %v5907 = vadd.f32 %v5811, %v5875
        %v5908 = vadd.f32 %v5816, %v5876
        %v5909 = vadd.f32 %v5819, %v5877
        %v5910 = vadd.f32 %v5824, %v5878
        %v5911 = vadd.f32 %v5827, %v5879
        %v5912 = vadd.f32 %v5832, %v5880
        %v5913 = vadd.f32 %v5835, %v5881
        %v5914 = vadd.f32 %v5840, %v5882
        %v5915 = vadd.f32 %v5843, %v5883
        %v5916 = vadd.f32 %v5848, %v5884
        %v5917 = vadd.f32 %v5851, %v5885
        %v5918 = vmax.f32 %v5886, 0.0
        %v5919 = vmax.f32 %v5887, 0.0
        %v5920 = vmax.f32 %v5888, 0.0
        %v5921 = vmax.f32 %v5889, 0.0
        %v5922 = vmax.f32 %v5890, 0.0
        %v5923 = vmax.f32 %v5891, 0.0
        %v5924 = vmax.f32 %v5892, 0.0
        %v5925 = vmax.f32 %v5893, 0.0
        %v5926 = vmax.f32 %v5894, 0.0
        %v5927 = vmax.f32 %v5895, 0.0
        %v5928 = vmax.f32 %v5896, 0.0
        %v5929 = vmax.f32 %v5897, 0.0
        %v5930 = vmax.f32 %v5898, 0.0
        %v5931 = vmax.f32 %v5899, 0.0
        %v5932 = vmax.f32 %v5900, 0.0
        %v5933 = vmax.f32 %v5901, 0.0
        %v5934 = vmax.f32 %v5902, 0.0
        %v5935 = vmax.f32 %v5903, 0.0
        %v5936 = vmax.f32 %v5904, 0.0
        %v5937 = vmax.f32 %v5905, 0.0
        %v5938 = vmax.f32 %v5906, 0.0
        %v5939 = vmax.f32 %v5907, 0.0
        %v5940 = vmax.f32 %v5908, 0.0
        %v5941 = vmax.f32 %v5909, 0.0
        %v5942 = vmax.f32 %v5910, 0.0
        %v5943 = vmax.f32 %v5911, 0.0
        %v5944 = vmax.f32 %v5912, 0.0
        %v5945 = vmax.f32 %v5913, 0.0
        %v5946 = vmax.f32 %v5914, 0.0
        %v5947 = vmax.f32 %v5915, 0.0
        %v5948 = vmax.f32 %v5916, 0.0
        %v5949 = vmax.f32 %v5917, 0.0
        %5950 = vst [vmem:[%s340] sm:$0xff] %v5918
        %5951 = vst [vmem:[%s340 + $0x8] sm:$0xff] %v5919
        %5952 = vst [vmem:[%s340 + $0x10] sm:$0xff] %v5920
        %5953 = vst [vmem:[%s340 + $0x18] sm:$0xff] %v5921
        %5954 = vst [vmem:[%s340 + $0x20] sm:$0xff] %v5922
        %5955 = vst [vmem:[%s340 + $0x28] sm:$0xff] %v5923
        %5956 = vst [vmem:[%s340 + $0x30] sm:$0xff] %v5924
        %5957 = vst [vmem:[%s340 + $0x38] sm:$0xff] %v5925
        %5958 = vst [vmem:[%s340 + $0x40] sm:$0xff] %v5926
        %5959 = vst [vmem:[%s340 + $0x48] sm:$0xff] %v5927
        %5960 = vst [vmem:[%s340 + $0x50] sm:$0xff] %v5928
        %5961 = vst [vmem:[%s340 + $0x58] sm:$0xff] %v5929
        %5962 = vst [vmem:[%s340 + $0x60] sm:$0xff] %v5930
        %5963 = vst [vmem:[%s340 + $0x68] sm:$0xff] %v5931
        %5964 = vst [vmem:[%s340 + $0x70] sm:$0xff] %v5932
        %5965 = vst [vmem:[%s340 + $0x78] sm:$0xff] %v5933
        %5966 = vst [vmem:[%s340 + $0x80] sm:$0xff] %v5934
        %5967 = vst [vmem:[%s340 + $0x88] sm:$0xff] %v5935
        %5968 = vst [vmem:[%s340 + $0x90] sm:$0xff] %v5936
        %5969 = vst [vmem:[%s340 + $0x98] sm:$0xff] %v5937
        %5970 = vst [vmem:[%s340 + $0xa0] sm:$0xff] %v5938
        %5971 = vst [vmem:[%s340 + $0xa8] sm:$0xff] %v5939
        %5972 = vst [vmem:[%s340 + $0xb0] sm:$0xff] %v5940
        %5973 = vst [vmem:[%s340 + $0xb8] sm:$0xff] %v5941
        %5974 = vst [vmem:[%s340 + $0xc0] sm:$0xff] %v5942
        %5975 = vst [vmem:[%s340 + $0xc8] sm:$0xff] %v5943
        %5976 = vst [vmem:[%s340 + $0xd0] sm:$0xff] %v5944
        %5977 = vst [vmem:[%s340 + $0xd8] sm:$0xff] %v5945
        %5978 = vst [vmem:[%s340 + $0xe0] sm:$0xff] %v5946
        %5979 = vst [vmem:[%s340 + $0xe8] sm:$0xff] %v5947
        %5980 = vst [vmem:[%s340 + $0xf0] sm:$0xff] %v5948
        %5981 = vst [vmem:[%s340 + $0xf8] sm:$0xff] %v5949
        %s5982 = sand.u32 %s186, 1
        %s5983 = scalar_lea.sflag [#allocation5], %s5982
        %s5984 = sand.u32 %s186, 1
        %s5985 = smul.addr %s5984, 256
        %s5986 = scalar_lea.vmem [#allocation11], %s5985
        // Predicated region
        $region65: #{tpu_custom_call.1} parent=47 // pred_check
          %p5987 = pneg %p196
        $region66: #{tpu_custom_call.1} parent=47 // pred_check_branch
          %5989 = sbr.rel (%p5987) target = $region68
        $region67: #{tpu_custom_call.1} parent=47 // pred_region
          %s5991 = ssub.s32 4096, 4096
          %5992 = vsyncadd %s5983, %s5991
          %s5993 = smul.addr %s26, 32
          %s5994 = smul.addr %s5993, 128
          %s5995 = scalar_lea.hbm %s7, %s5994
          %s5996 = sshll.u32 %s5986, 4
          %s5997 = int_to_ptr.vmem [resolvable:$true] %s5996
          %6002 = dma.vmem_to_hbm [thread:$0]  %s5997, 4096, %s5995, %s5983, 128, 128, 8
        $region68: #{tpu_custom_call.1} parent=47 // pred_fallthru
          _
      $region48: #{tpu_custom_call.1} parent=5 // pred_fallthru
        _
      %p6003 = scmp.le.s32.totalorder 2, %s21
      // Predicated region
      $region69: #{tpu_custom_call.1} parent=5 // pred_check
        %p6004 = pneg %p6003
      $region70: #{tpu_custom_call.1} parent=5 // pred_check_branch
        %6006 = sbr.rel (%p6004) target = $region72
      $region71: #{tpu_custom_call.1} parent=5 // pred_region
        %s6007 = ssub.s32 %s21, 2
        // Predicated region
        $region73: #{tpu_custom_call.1} parent=71 // pred_check
          %p6008 = pneg %p202
        $region74: #{tpu_custom_call.1} parent=71 // pred_check_branch
          %6010 = sbr.rel (%p6008) target = $region76
        $region75: #{tpu_custom_call.1} parent=71 // pred_region
          %s6011 = sand.u32 %s187, 1
          %s6012 = scalar_lea.sflag [#allocation5], %s6011
          %s6013 = sand.u32 %s187, 1
          %s6014 = smul.addr %s6013, 256
          %s6015 = scalar_lea.vmem [#allocation11], %s6014
          %6016 = dma.done %s6012, 4096
        $region76: #{tpu_custom_call.1} parent=71 // pred_fallthru
          _
      $region72: #{tpu_custom_call.1} parent=5 // pred_fallthru
        _
    $region6: #{tpu_custom_call.1} parent=1 // loop_footer
      %s25 = sadd.s32 1, %s21
    $region7: #{tpu_custom_call.1} parent=1 // loop_footer_branch
      %20 = sbr.rel target = $region3
    $region8: #{tpu_custom_call.1} parent=1 // loop_exit
      _
    %6017 = vsyncpa [#allocation4], 1
    %s6018 = scalar_lea.sflag [#allocation4], 1
    %6019 = vsyncpa %s6018, 1
    %6020 = vsyncpa [#allocation7], 1
    %6021 = vsyncpa [#allocation10], 1
    %6022 = vsyncpa [#allocation5], 1
    %s6023 = scalar_lea.sflag [#allocation5], 1
    %6024 = vsyncpa %s6023, 1

</llo_original>
